<compile_context>
chip_gen: v5e
topology: v5e:2x2
jax: 0.10.0
libtpu: 0.0.40
codegen_flags: <defaults>
</compile_context>

<pallas_src>
import functools

import jax
import jax.numpy as jnp
from jax.experimental import pallas as pl
from jax.experimental.pallas import tpu as pltpu


# --------------------------- Pallas kernel -----------------------------------

def _attention2d_kernel(x_ref, g_ref, wqkv_ref, wout_ref, bout_ref, o_ref, head_acc,
                        *, heads, dim_head):
    """Fused Attention2D forward for one batch element.

    x_ref    : (1, C, N) f32   pixels; channels on sublanes, pixels on the lane axis
    g_ref    : (C, 1)    f32   RMSNorm gain, pre-multiplied by sqrt(C)
    wqkv_ref : (3*hidden, C) bf16  1x1 qkv conv weight (q rows pre-scaled by dim_head^-0.5)
    wout_ref : (C, hidden)   bf16  1x1 output conv weight
    bout_ref : (C, 1)    f32   output conv bias
    o_ref    : (1, C, N) f32   output, lane-dense (maps directly back to NCHW)
    head_acc : (hidden, N) bf16 VMEM scratch for normalized per-head outputs
    """
    hidden = heads * dim_head
    n = x_ref.shape[2]
    x = x_ref[0]                                               # (C, N) f32

    # RMSNorm2D: x * rsqrt(sum_c x^2) * (g * sqrt(C))   (single EUP rsqrt)
    ss = jnp.sum(x * x, axis=0, keepdims=True)                 # (1, N) sublane reduce
    inv = jax.lax.rsqrt(jnp.maximum(ss, 1e-24))
    xn = (x * inv * g_ref[...]).astype(jnp.bfloat16)           # (C, N) bf16

    # 1x1 conv == channel matmul: one bf16 MXU dot produces q, k and v together.
    qkv = jnp.dot(wqkv_ref[...], xn,
                  preferred_element_type=jnp.float32)          # (3*hidden, N) f32

    ones_row = jnp.ones((1, n), jnp.bfloat16)
    for h in range(heads):                                     # small, static unroll
        lo = h * dim_head
        q = qkv[lo:lo + dim_head, :].astype(jnp.bfloat16)                   # (d, N) pre-scaled
        k = qkv[hidden + lo:hidden + lo + dim_head, :].astype(jnp.bfloat16) # (d, N)
        v = qkv[2 * hidden + lo:2 * hidden + lo + dim_head, :].astype(jnp.bfloat16)

        # sim[i, j] = sum_d q[d, i] * k[d, j]   (q consumed in native (d, N) layout)
        sim = jax.lax.dot_general(q, k, (((0,), (0,)), ((), ())),
                                  preferred_element_type=jnp.float32)       # (Nq, Nk)
        p = jnp.exp(sim - jnp.max(sim, axis=-1, keepdims=True))             # f32, keys on lanes
        p = p.astype(jnp.bfloat16)

        # Un-normalized PV matmul; the ones-row under v makes the same MXU pass emit the
        # softmax denominator l, already lane-dense over queries.
        v_aug = jnp.concatenate([v, ones_row], axis=0)                      # (d+1, Nk)
        oh_aug = jax.lax.dot_general(v_aug, p, (((1,), (1,)), ((), ())),
                                     preferred_element_type=jnp.float32)    # (d+1, Nq)
        inv_l = pl.reciprocal(oh_aug[dim_head:dim_head + 1, :], approx=True)  # (1, Nq) EUP
        head_acc[lo:lo + dim_head, :] = (oh_aug[:dim_head, :] * inv_l).astype(jnp.bfloat16)

    # Output projection: single K=hidden bf16 matmul + bias.
    y = jnp.dot(wout_ref[...], head_acc[...],
                preferred_element_type=jnp.float32)                          # (C, N) f32
    o_ref[0] = y + bout_ref[...]


# --------------------------- wrapper ------------------------------------------

def attention2d_forward(params, x, *, heads, dim_head):
    """Attention2D.forward.  x: (B, C, H, W) NCHW. Returns (B, C, H, W)."""
    B, C, H, W = x.shape
    N = H * W
    hidden = heads * dim_head
    sm_scale = dim_head ** -0.5

    x_flat = x.reshape(B, C, N).astype(jnp.float32)            # NCHW -> (B, C, N): reshape only
    g = (params["g"].reshape(C, 1) * (C ** 0.5)).astype(jnp.float32)

    wqkv = params["wqkv"].reshape(3 * hidden, C).astype(jnp.float32)
    # fold the attention scale into the q rows (free: done once on the weight)
    wqkv = jnp.concatenate([wqkv[:hidden] * sm_scale, wqkv[hidden:]], axis=0)
    wqkv = wqkv.astype(jnp.bfloat16)                            # bf16 MXU operand
    wout = params["wout"].reshape(C, hidden).astype(jnp.bfloat16)
    bout = params["bout"].reshape(C, 1).astype(jnp.float32)

    kernel = functools.partial(_attention2d_kernel, heads=heads, dim_head=dim_head)
    out = pl.pallas_call(
        kernel,
        out_shape=jax.ShapeDtypeStruct((B, C, N), jnp.float32),
        grid=(B,),
        in_specs=[
            pl.BlockSpec((1, C, N), lambda b: (b, 0, 0)),       # per-batch pixel block
            pl.BlockSpec((C, 1), lambda b: (0, 0)),             # weights stay resident
            pl.BlockSpec((3 * hidden, C), lambda b: (0, 0)),
            pl.BlockSpec((C, hidden), lambda b: (0, 0)),
            pl.BlockSpec((C, 1), lambda b: (0, 0)),
        ],
        out_specs=pl.BlockSpec((1, C, N), lambda b: (b, 0, 0)),
        scratch_shapes=[pltpu.VMEM((hidden, N), jnp.bfloat16)],
        compiler_params=pltpu.CompilerParams(
            dimension_semantics=("parallel",),
            vmem_limit_bytes=32 * 1024 * 1024,
        ),
    )(x_flat, g, wqkv, wout, bout)
    return out.reshape(B, C, H, W)


# --------------------------- pure-JAX reference --------------------------------

def _ref_forward(params, x, heads, dim_head):
    B, C, H, W = x.shape
    N = H * W
    hidden = heads * dim_head
    hp = jax.lax.Precision.HIGHEST

    xf = x.reshape(B, C, N).astype(jnp.float32)
    nrm = jnp.sqrt(jnp.sum(xf * xf, axis=1, keepdims=True))
    xn = xf / jnp.maximum(nrm, 1e-12) * params["g"].reshape(1, C, 1) * (C ** 0.5)

    wqkv = params["wqkv"].reshape(3 * hidden, C)
    qkv = jnp.einsum("oc,bcn->bon", wqkv, xn, precision=hp)
    q, k, v = jnp.split(qkv, 3, axis=1)                        # each (B, hidden, N)

    def heads_first(t):                                        # 'b (h c) n -> b h n c'
        return t.reshape(B, heads, dim_head, N).transpose(0, 1, 3, 2)

    q, k, v = heads_first(q), heads_first(k), heads_first(v)   # (B, h, N, d)
    sim = jnp.einsum("bhnd,bhmd->bhnm", q, k, precision=hp) * (dim_head ** -0.5)
    attn = jax.nn.softmax(sim, axis=-1)
    out = jnp.einsum("bhnm,bhmd->bhnd", attn, v, precision=hp) # (B, h, N, d)
    out = out.transpose(0, 1, 3, 2).reshape(B, hidden, N)      # 'b h n d -> b (h d) n'

    wout = params["wout"].reshape(C, hidden)
    y = jnp.einsum("oi,bin->bon", wout, out, precision=hp) + params["bout"].reshape(1, C, 1)
    return y.reshape(B, C, H, W)


# --------------------------- main ----------------------------------------------

if __name__ == "__main__":
    B, dim, heads, dim_head, H, W = 2, 32, 4, 32, 16, 16
    hidden = heads * dim_head

    keys = jax.random.split(jax.random.PRNGKey(0), 5)
    params = {
        # torch layouts: g (1, dim, 1, 1); to_qkv.weight (3*hidden, dim, 1, 1);
        # to_out.weight (dim, hidden, 1, 1); to_out.bias (dim,)
        "g": 1.0 + 0.1 * jax.random.normal(keys[0], (dim,), jnp.float32),
        "wqkv": 0.1 * jax.random.normal(keys[1], (3 * hidden, dim, 1, 1), jnp.float32),
        "wout": 0.1 * jax.random.normal(keys[2], (dim, hidden, 1, 1), jnp.float32),
        "bout": 0.1 * jax.random.normal(keys[3], (dim,), jnp.float32),
    }
    x = jax.random.normal(keys[4], (B, dim, H, W), jnp.float32)

    fwd = jax.jit(functools.partial(attention2d_forward, heads=heads, dim_head=dim_head))
    out = jax.block_until_ready(fwd(params, x))

    ref = _ref_forward(params, x, heads, dim_head)
    err = float(jnp.max(jnp.abs(out - ref)))
    assert out.shape == (B, dim, H, W), out.shape
    assert err < 5e-2, f"max abs err {err}"
    print("KERNEL_OK")
</pallas_src>

<mosaic_0001>
module attributes {stable_mosaic.version = 11 : i64} {
  func.func @_attention2d_kernel(%arg0: i32, %arg1: memref<1x32x256xf32, #tpu.memory_space<vmem>>, %arg2: memref<32x1xf32, #tpu.memory_space<vmem>>, %arg3: memref<384x32xbf16, #tpu.memory_space<vmem>>, %arg4: memref<32x128xbf16, #tpu.memory_space<vmem>>, %arg5: memref<32x1xf32, #tpu.memory_space<vmem>>, %arg6: memref<1x32x256xf32, #tpu.memory_space<vmem>>, %arg7: memref<128x256xbf16, #tpu.memory_space<vmem>>) attributes {dimension_semantics = [#tpu.dimension_semantics<parallel>], iteration_bounds = array<i64: 2>, scalar_prefetch = 0 : i64, scratch_operands = 1 : i64, tpu.core_type = #tpu.core_type<tc>, window_params = [{transform_indices = @transform_0, window_bounds = array<i64: 1, 32, 256>}, {pipeline_mode = #tpu.pipeline_mode<synchronous>, transform_indices = @transform_1, window_bounds = array<i64: 32, 1>}, {pipeline_mode = #tpu.pipeline_mode<synchronous>, transform_indices = @transform_2, window_bounds = array<i64: 384, 32>}, {pipeline_mode = #tpu.pipeline_mode<synchronous>, transform_indices = @transform_3, window_bounds = array<i64: 32, 128>}, {pipeline_mode = #tpu.pipeline_mode<synchronous>, transform_indices = @transform_4, window_bounds = array<i64: 32, 1>}, {transform_indices = @transform_5, window_bounds = array<i64: 1, 32, 256>}]} {
    %c0 = arith.constant 0 : index
    %c0_0 = arith.constant 0 : index
    %c0_1 = arith.constant 0 : index
    %0 = vector.load %arg1[%c0, %c0_0, %c0_1] : memref<1x32x256xf32, #tpu.memory_space<vmem>>, vector<1x32x256xf32>
    %1 = vector.shape_cast %0 : vector<1x32x256xf32> to vector<32x256xf32>
    %2 = arith.mulf %1, %1 : vector<32x256xf32>
    %cst = arith.constant dense<0.000000e+00> : vector<256xf32>
    %3 = vector.multi_reduction <add>, %2, %cst [0] : vector<32x256xf32> to vector<256xf32>
    %4 = vector.shape_cast %3 : vector<256xf32> to vector<1x256xf32>
    %cst_2 = arith.constant 1.000000e-24 : f32
    %5 = vector.broadcast %cst_2 : f32 to vector<1x256xf32>
    %6 = arith.maximumf %4, %5 : vector<1x256xf32>
    %7 = math.rsqrt %6 : vector<1x256xf32>
    %8 = vector.broadcast %7 : vector<1x256xf32> to vector<32x256xf32>
    %9 = arith.mulf %1, %8 : vector<32x256xf32>
    %c0_3 = arith.constant 0 : index
    %c0_4 = arith.constant 0 : index
    %10 = vector.load %arg2[%c0_3, %c0_4] : memref<32x1xf32, #tpu.memory_space<vmem>>, vector<32x1xf32>
    %11 = vector.broadcast %10 : vector<32x1xf32> to vector<32x256xf32>
    %12 = arith.mulf %9, %11 : vector<32x256xf32>
    %13 = arith.truncf %12 : vector<32x256xf32> to vector<32x256xbf16>
    %c0_5 = arith.constant 0 : index
    %c0_6 = arith.constant 0 : index
    %14 = vector.load %arg3[%c0_5, %c0_6] : memref<384x32xbf16, #tpu.memory_space<vmem>>, vector<384x32xbf16>
    %cst_7 = arith.constant dense<0.000000e+00> : vector<384x256xf32>
    %15 = tpu.matmul %14, %13, %cst_7 {dimension_numbers = #tpu.dot_dimension_numbers<[1], [0], [0], [1], [0, 0, 1, 1], [], []>} : vector<384x32xbf16>, vector<32x256xbf16>, vector<384x256xf32> -> vector<384x256xf32>
    %cst_8 = arith.constant 1.000000e+00 : bf16
    %16 = vector.broadcast %cst_8 : bf16 to vector<1x256xbf16>
    %17 = vector.extract_strided_slice %15 {offsets = [0, 0], sizes = [32, 256], strides = [1, 1]} : vector<384x256xf32> to vector<32x256xf32>
    %18 = arith.truncf %17 : vector<32x256xf32> to vector<32x256xbf16>
    %19 = vector.extract_strided_slice %15 {offsets = [128, 0], sizes = [32, 256], strides = [1, 1]} : vector<384x256xf32> to vector<32x256xf32>
    %20 = arith.truncf %19 : vector<32x256xf32> to vector<32x256xbf16>
    %21 = vector.extract_strided_slice %15 {offsets = [256, 0], sizes = [32, 256], strides = [1, 1]} : vector<384x256xf32> to vector<32x256xf32>
    %22 = arith.truncf %21 : vector<32x256xf32> to vector<32x256xbf16>
    %cst_9 = arith.constant dense<0.000000e+00> : vector<256x256xf32>
    %23 = tpu.matmul %18, %20, %cst_9 {dimension_numbers = #tpu.dot_dimension_numbers<[0], [0], [1], [1], [0, 1, 1, 1], [], []>} : vector<32x256xbf16>, vector<32x256xbf16>, vector<256x256xf32> -> vector<256x256xf32>
    %cst_10 = arith.constant dense<0xFF800000> : vector<256xf32>
    %24 = vector.multi_reduction <maximumf>, %23, %cst_10 [1] : vector<256x256xf32> to vector<256xf32>
    %25 = vector.shape_cast %24 : vector<256xf32> to vector<256x1xf32>
    %26 = vector.broadcast %25 : vector<256x1xf32> to vector<256x256xf32>
    %27 = arith.subf %23, %26 : vector<256x256xf32>
    %28 = math.exp %27 : vector<256x256xf32>
    %29 = arith.truncf %28 : vector<256x256xf32> to vector<256x256xbf16>
    %30 = tpu.concatenate %22, %16 in 0 : vector<32x256xbf16>, vector<1x256xbf16> -> vector<33x256xbf16>
    %cst_11 = arith.constant dense<0.000000e+00> : vector<33x256xf32>
    %31 = tpu.matmul %30, %29, %cst_11 {dimension_numbers = #tpu.dot_dimension_numbers<[1], [1], [0], [0], [0, 0, 1, 0], [], []>} : vector<33x256xbf16>, vector<256x256xbf16>, vector<33x256xf32> -> vector<33x256xf32>
    %32 = vector.extract_strided_slice %31 {offsets = [32, 0], sizes = [1, 256], strides = [1, 1]} : vector<33x256xf32> to vector<1x256xf32>
    %33 = tpu.reciprocal %32 {approx = true} : vector<1x256xf32> -> vector<1x256xf32>
    %34 = vector.extract_strided_slice %31 {offsets = [0, 0], sizes = [32, 256], strides = [1, 1]} : vector<33x256xf32> to vector<32x256xf32>
    %35 = vector.broadcast %33 : vector<1x256xf32> to vector<32x256xf32>
    %36 = arith.mulf %34, %35 : vector<32x256xf32>
    %37 = arith.truncf %36 : vector<32x256xf32> to vector<32x256xbf16>
    %c0_12 = arith.constant 0 : index
    %c0_13 = arith.constant 0 : index
    %38 = vector.load %arg7[%c0_12, %c0_13] : memref<128x256xbf16, #tpu.memory_space<vmem>>, vector<32x256xbf16>
    tpu.vector_store %arg7[%c0_12, %c0_13], %37 {strides = array<i32>} : memref<128x256xbf16, #tpu.memory_space<vmem>>, vector<32x256xbf16>,
    %39 = vector.extract_strided_slice %15 {offsets = [32, 0], sizes = [32, 256], strides = [1, 1]} : vector<384x256xf32> to vector<32x256xf32>
    %40 = arith.truncf %39 : vector<32x256xf32> to vector<32x256xbf16>
    %41 = vector.extract_strided_slice %15 {offsets = [160, 0], sizes = [32, 256], strides = [1, 1]} : vector<384x256xf32> to vector<32x256xf32>
    %42 = arith.truncf %41 : vector<32x256xf32> to vector<32x256xbf16>
    %43 = vector.extract_strided_slice %15 {offsets = [288, 0], sizes = [32, 256], strides = [1, 1]} : vector<384x256xf32> to vector<32x256xf32>
    %44 = arith.truncf %43 : vector<32x256xf32> to vector<32x256xbf16>
    %cst_14 = arith.constant dense<0.000000e+00> : vector<256x256xf32>
    %45 = tpu.matmul %40, %42, %cst_14 {dimension_numbers = #tpu.dot_dimension_numbers<[0], [0], [1], [1], [0, 1, 1, 1], [], []>} : vector<32x256xbf16>, vector<32x256xbf16>, vector<256x256xf32> -> vector<256x256xf32>
    %cst_15 = arith.constant dense<0xFF800000> : vector<256xf32>
    %46 = vector.multi_reduction <maximumf>, %45, %cst_15 [1] : vector<256x256xf32> to vector<256xf32>
    %47 = vector.shape_cast %46 : vector<256xf32> to vector<256x1xf32>
    %48 = vector.broadcast %47 : vector<256x1xf32> to vector<256x256xf32>
    %49 = arith.subf %45, %48 : vector<256x256xf32>
    %50 = math.exp %49 : vector<256x256xf32>
    %51 = arith.truncf %50 : vector<256x256xf32> to vector<256x256xbf16>
    %52 = tpu.concatenate %44, %16 in 0 : vector<32x256xbf16>, vector<1x256xbf16> -> vector<33x256xbf16>
    %cst_16 = arith.constant dense<0.000000e+00> : vector<33x256xf32>
    %53 = tpu.matmul %52, %51, %cst_16 {dimension_numbers = #tpu.dot_dimension_numbers<[1], [1], [0], [0], [0, 0, 1, 0], [], []>} : vector<33x256xbf16>, vector<256x256xbf16>, vector<33x256xf32> -> vector<33x256xf32>
    %54 = vector.extract_strided_slice %53 {offsets = [32, 0], sizes = [1, 256], strides = [1, 1]} : vector<33x256xf32> to vector<1x256xf32>
    %55 = tpu.reciprocal %54 {approx = true} : vector<1x256xf32> -> vector<1x256xf32>
    %56 = vector.extract_strided_slice %53 {offsets = [0, 0], sizes = [32, 256], strides = [1, 1]} : vector<33x256xf32> to vector<32x256xf32>
    %57 = vector.broadcast %55 : vector<1x256xf32> to vector<32x256xf32>
    %58 = arith.mulf %56, %57 : vector<32x256xf32>
    %59 = arith.truncf %58 : vector<32x256xf32> to vector<32x256xbf16>
    %c32 = arith.constant 32 : index
    %c0_17 = arith.constant 0 : index
    %60 = vector.load %arg7[%c32, %c0_17] : memref<128x256xbf16, #tpu.memory_space<vmem>>, vector<32x256xbf16>
    tpu.vector_store %arg7[%c32, %c0_17], %59 {strides = array<i32>} : memref<128x256xbf16, #tpu.memory_space<vmem>>, vector<32x256xbf16>,
    %61 = vector.extract_strided_slice %15 {offsets = [64, 0], sizes = [32, 256], strides = [1, 1]} : vector<384x256xf32> to vector<32x256xf32>
    %62 = arith.truncf %61 : vector<32x256xf32> to vector<32x256xbf16>
    %63 = vector.extract_strided_slice %15 {offsets = [192, 0], sizes = [32, 256], strides = [1, 1]} : vector<384x256xf32> to vector<32x256xf32>
    %64 = arith.truncf %63 : vector<32x256xf32> to vector<32x256xbf16>
    %65 = vector.extract_strided_slice %15 {offsets = [320, 0], sizes = [32, 256], strides = [1, 1]} : vector<384x256xf32> to vector<32x256xf32>
    %66 = arith.truncf %65 : vector<32x256xf32> to vector<32x256xbf16>
    %cst_18 = arith.constant dense<0.000000e+00> : vector<256x256xf32>
    %67 = tpu.matmul %62, %64, %cst_18 {dimension_numbers = #tpu.dot_dimension_numbers<[0], [0], [1], [1], [0, 1, 1, 1], [], []>} : vector<32x256xbf16>, vector<32x256xbf16>, vector<256x256xf32> -> vector<256x256xf32>
    %cst_19 = arith.constant dense<0xFF800000> : vector<256xf32>
    %68 = vector.multi_reduction <maximumf>, %67, %cst_19 [1] : vector<256x256xf32> to vector<256xf32>
    %69 = vector.shape_cast %68 : vector<256xf32> to vector<256x1xf32>
    %70 = vector.broadcast %69 : vector<256x1xf32> to vector<256x256xf32>
    %71 = arith.subf %67, %70 : vector<256x256xf32>
    %72 = math.exp %71 : vector<256x256xf32>
    %73 = arith.truncf %72 : vector<256x256xf32> to vector<256x256xbf16>
    %74 = tpu.concatenate %66, %16 in 0 : vector<32x256xbf16>, vector<1x256xbf16> -> vector<33x256xbf16>
    %cst_20 = arith.constant dense<0.000000e+00> : vector<33x256xf32>
    %75 = tpu.matmul %74, %73, %cst_20 {dimension_numbers = #tpu.dot_dimension_numbers<[1], [1], [0], [0], [0, 0, 1, 0], [], []>} : vector<33x256xbf16>, vector<256x256xbf16>, vector<33x256xf32> -> vector<33x256xf32>
    %76 = vector.extract_strided_slice %75 {offsets = [32, 0], sizes = [1, 256], strides = [1, 1]} : vector<33x256xf32> to vector<1x256xf32>
    %77 = tpu.reciprocal %76 {approx = true} : vector<1x256xf32> -> vector<1x256xf32>
    %78 = vector.extract_strided_slice %75 {offsets = [0, 0], sizes = [32, 256], strides = [1, 1]} : vector<33x256xf32> to vector<32x256xf32>
    %79 = vector.broadcast %77 : vector<1x256xf32> to vector<32x256xf32>
    %80 = arith.mulf %78, %79 : vector<32x256xf32>
    %81 = arith.truncf %80 : vector<32x256xf32> to vector<32x256xbf16>
    %c64 = arith.constant 64 : index
    %c0_21 = arith.constant 0 : index
    %82 = vector.load %arg7[%c64, %c0_21] : memref<128x256xbf16, #tpu.memory_space<vmem>>, vector<32x256xbf16>
    tpu.vector_store %arg7[%c64, %c0_21], %81 {strides = array<i32>} : memref<128x256xbf16, #tpu.memory_space<vmem>>, vector<32x256xbf16>,
    %83 = vector.extract_strided_slice %15 {offsets = [96, 0], sizes = [32, 256], strides = [1, 1]} : vector<384x256xf32> to vector<32x256xf32>
    %84 = arith.truncf %83 : vector<32x256xf32> to vector<32x256xbf16>
    %85 = vector.extract_strided_slice %15 {offsets = [224, 0], sizes = [32, 256], strides = [1, 1]} : vector<384x256xf32> to vector<32x256xf32>
    %86 = arith.truncf %85 : vector<32x256xf32> to vector<32x256xbf16>
    %87 = vector.extract_strided_slice %15 {offsets = [352, 0], sizes = [32, 256], strides = [1, 1]} : vector<384x256xf32> to vector<32x256xf32>
    %88 = arith.truncf %87 : vector<32x256xf32> to vector<32x256xbf16>
    %cst_22 = arith.constant dense<0.000000e+00> : vector<256x256xf32>
    %89 = tpu.matmul %84, %86, %cst_22 {dimension_numbers = #tpu.dot_dimension_numbers<[0], [0], [1], [1], [0, 1, 1, 1], [], []>} : vector<32x256xbf16>, vector<32x256xbf16>, vector<256x256xf32> -> vector<256x256xf32>
    %cst_23 = arith.constant dense<0xFF800000> : vector<256xf32>
    %90 = vector.multi_reduction <maximumf>, %89, %cst_23 [1] : vector<256x256xf32> to vector<256xf32>
    %91 = vector.shape_cast %90 : vector<256xf32> to vector<256x1xf32>
    %92 = vector.broadcast %91 : vector<256x1xf32> to vector<256x256xf32>
    %93 = arith.subf %89, %92 : vector<256x256xf32>
    %94 = math.exp %93 : vector<256x256xf32>
    %95 = arith.truncf %94 : vector<256x256xf32> to vector<256x256xbf16>
    %96 = tpu.concatenate %88, %16 in 0 : vector<32x256xbf16>, vector<1x256xbf16> -> vector<33x256xbf16>
    %cst_24 = arith.constant dense<0.000000e+00> : vector<33x256xf32>
    %97 = tpu.matmul %96, %95, %cst_24 {dimension_numbers = #tpu.dot_dimension_numbers<[1], [1], [0], [0], [0, 0, 1, 0], [], []>} : vector<33x256xbf16>, vector<256x256xbf16>, vector<33x256xf32> -> vector<33x256xf32>
    %98 = vector.extract_strided_slice %97 {offsets = [32, 0], sizes = [1, 256], strides = [1, 1]} : vector<33x256xf32> to vector<1x256xf32>
    %99 = tpu.reciprocal %98 {approx = true} : vector<1x256xf32> -> vector<1x256xf32>
    %100 = vector.extract_strided_slice %97 {offsets = [0, 0], sizes = [32, 256], strides = [1, 1]} : vector<33x256xf32> to vector<32x256xf32>
    %101 = vector.broadcast %99 : vector<1x256xf32> to vector<32x256xf32>
    %102 = arith.mulf %100, %101 : vector<32x256xf32>
    %103 = arith.truncf %102 : vector<32x256xf32> to vector<32x256xbf16>
    %c96 = arith.constant 96 : index
    %c0_25 = arith.constant 0 : index
    %104 = vector.load %arg7[%c96, %c0_25] : memref<128x256xbf16, #tpu.memory_space<vmem>>, vector<32x256xbf16>
    tpu.vector_store %arg7[%c96, %c0_25], %103 {strides = array<i32>} : memref<128x256xbf16, #tpu.memory_space<vmem>>, vector<32x256xbf16>,
    %c0_26 = arith.constant 0 : index
    %c0_27 = arith.constant 0 : index
    %105 = vector.load %arg4[%c0_26, %c0_27] : memref<32x128xbf16, #tpu.memory_space<vmem>>, vector<32x128xbf16>
    %c0_28 = arith.constant 0 : index
    %c0_29 = arith.constant 0 : index
    %106 = vector.load %arg7[%c0_28, %c0_29] : memref<128x256xbf16, #tpu.memory_space<vmem>>, vector<128x256xbf16>
    %cst_30 = arith.constant dense<0.000000e+00> : vector<32x256xf32>
    %107 = tpu.matmul %105, %106, %cst_30 {dimension_numbers = #tpu.dot_dimension_numbers<[1], [0], [0], [1], [0, 0, 1, 1], [], []>} : vector<32x128xbf16>, vector<128x256xbf16>, vector<32x256xf32> -> vector<32x256xf32>
    %c0_31 = arith.constant 0 : index
    %c0_32 = arith.constant 0 : index
    %108 = vector.load %arg5[%c0_31, %c0_32] : memref<32x1xf32, #tpu.memory_space<vmem>>, vector<32x1xf32>
    %109 = vector.broadcast %108 : vector<32x1xf32> to vector<32x256xf32>
    %110 = arith.addf %107, %109 : vector<32x256xf32>
    %c0_33 = arith.constant 0 : index
    %c0_34 = arith.constant 0 : index
    %c0_35 = arith.constant 0 : index
    %111 = vector.load %arg6[%c0_33, %c0_34, %c0_35] : memref<1x32x256xf32, #tpu.memory_space<vmem>>, vector<1x32x256xf32>
    %112 = vector.shape_cast %111 : vector<1x32x256xf32> to vector<32x256xf32>
    %113 = vector.shape_cast %110 : vector<32x256xf32> to vector<1x32x256xf32>
    tpu.vector_store %arg6[%c0_33, %c0_34, %c0_35], %113 {strides = array<i32>} : memref<1x32x256xf32, #tpu.memory_space<vmem>>, vector<1x32x256xf32>,
    return
  }
  func.func @transform_0(%arg0: i32) -> (i32, i32, i32) {
    %c0_i32 = arith.constant 0 : i32
    %c0_i32_0 = arith.constant 0 : i32
    %c0_i32_1 = arith.constant 0 : i32
    return %arg0, %c0_i32, %c0_i32_0 : i32, i32, i32
  }
  func.func @transform_1(%arg0: i32) -> (i32, i32) {
    %c0_i32 = arith.constant 0 : i32
    %c0_i32_0 = arith.constant 0 : i32
    %c0_i32_1 = arith.constant 0 : i32
    return %c0_i32, %c0_i32_0 : i32, i32
  }
  func.func @transform_2(%arg0: i32) -> (i32, i32) {
    %c0_i32 = arith.constant 0 : i32
    %c0_i32_0 = arith.constant 0 : i32
    %c0_i32_1 = arith.constant 0 : i32
    return %c0_i32, %c0_i32_0 : i32, i32
  }
  func.func @transform_3(%arg0: i32) -> (i32, i32) {
    %c0_i32 = arith.constant 0 : i32
    %c0_i32_0 = arith.constant 0 : i32
    %c0_i32_1 = arith.constant 0 : i32
    return %c0_i32, %c0_i32_0 : i32, i32
  }
  func.func @transform_4(%arg0: i32) -> (i32, i32) {
    %c0_i32 = arith.constant 0 : i32
    %c0_i32_0 = arith.constant 0 : i32
    %c0_i32_1 = arith.constant 0 : i32
    return %c0_i32, %c0_i32_0 : i32, i32
  }
  func.func @transform_5(%arg0: i32) -> (i32, i32, i32) {
    %c0_i32 = arith.constant 0 : i32
    %c0_i32_0 = arith.constant 0 : i32
    %c0_i32_1 = arith.constant 0 : i32
    return %arg0, %c0_i32, %c0_i32_0 : i32, i32, i32
  }
}

</mosaic_0001>

<llo_original>
// kernel: attention2d_forward.1
$region0: #{attention2d_forward.1}
  #allocation0 [shape = 'u32[]', space=smem, size = 0x4, offset = 0x4, fixed_abs, tag = 'smem constant byte address 0x4 - core index']
  #allocation1 [shape = 'u32[72,128]{1,0:T(1,128)}', space=vmem, size = 0x9000, scoped, tag = 'internal scratch']
  #allocation2 [shape = 'bf16[128,256]{1,0:T(8,128)(2,1)}', space=vmem, size = 0x10000, scoped, tag = 'scratch operand']
  %s0 = inlined_call_operand.vmem [shape: f32[2,32,256], index: 0, kind: input, shape index: {}]
  %s1 = inlined_call_operand.vmem [shape: f32[32,1], index: 1, kind: input, shape index: {}]
  %s2 = inlined_call_operand.vmem [shape: bf16[384,32], index: 2, kind: input, shape index: {}]
  %s3 = inlined_call_operand.vmem [shape: bf16[32,128], index: 3, kind: input, shape index: {}]
  %s4 = inlined_call_operand.vmem [shape: f32[32,1], index: 4, kind: input, shape index: {}]
  %s5 = inlined_call_operand.vmem [shape: f32[2,32,256], index: 5, kind: output, shape index: {}]
  %s6 = sld [smem:[#allocation0]]
  $region53: #{attention2d_forward.1} parent=0
    _
  %s8 = ssub.s32 1, %s6
  %s9 = scalar_select 0, %s8, %s6
  loop: start=0, step=1, limit=4
  $region2: #{attention2d_forward.1} parent=0 // loop_pre_header
    _
  $region3: #{attention2d_forward.1} parent=0 // loop_header
    %s11 = sphi 0, %s15
    %p12 = scmp.ge.s32.totalorder %s11, 4
    %s21 = sphi 0, %s23
    %s24 = sphi 0, %s21
    %s25 = sphi 0, %s24
    %s41 = sphi 0, %s25
    %s45 = sphi 0, %s45
    %s47 = sphi 0, %s45
    %s48 = sphi 0, %s47
    %s62 = sphi 0, %s48
    %s66 = sphi 0, %s66
    %s68 = sphi 0, %s66
    %s69 = sphi 0, %s68
    %s83 = sphi 0, %s69
    %s87 = sphi 0, %s87
    %s89 = sphi 0, %s87
    %s90 = sphi 0, %s89
    %s104 = sphi 0, %s90
    %s108 = sphi 0, %s108
    %s110 = sphi 0, %s108
    %s111 = sphi 0, %s110
    %s125 = sphi 0, %s111
    %s131 = sphi 0, %s133
    %s134 = sphi 0, %s131
    %s135 = sphi 0, %s134
    %s151 = sphi 0, %s135
  $region4: #{attention2d_forward.1} parent=0 // loop_header_branch
    %14 = sbr.rel (%p12) target = $region8
  $region5: #{attention2d_forward.1} parent=0 // loop_body
    %s16 = ssub.s32 %s11, 1
    %s17 = ssub.s32 %s11, 2
    %s18 = sadd.s32 %s11, 1
    %s19 = ssub.s32 %s11, %s18
    %p20 = scmp.eq.s32.totalorder %s19, 0
    %s22 = sadd.s32 %s21, 1
    %s23 = scalar_select %p20, %s21, %s22
    %p26 = pneg %p20
    %p27 = scmp.eq.s32.totalorder %s11, 1
    %p28 = por %p26, %p27
    %p29 = scmp.ne.s32.totalorder %s21, %s24
    %p30 = scmp.eq.s32.totalorder %s11, 0
    %p31 = por %p29, %p30
    %p32 = scmp.ne.s32.totalorder %s21, %s24
    %p33 = scmp.eq.s32.totalorder %s16, 1
    %p34 = por %p32, %p33
    %p35 = scmp.ne.s32.totalorder %s24, %s25
    %p36 = scmp.eq.s32.totalorder %s16, 0
    %p37 = por %p35, %p36
    %p38 = scmp.ne.s32.totalorder %s24, %s25
    %p39 = scmp.eq.s32.totalorder %s17, 1
    %p40 = por %p38, %p39
    %p42 = scmp.ne.s32.totalorder %s25, %s41
    %p43 = scmp.eq.s32.totalorder %s17, 0
    %p44 = por %p42, %p43
    %s46 = sadd.s32 %s45, 1
    %p49 = scmp.eq.s32.totalorder %s11, 1
    %p50 = scmp.ne.s32.totalorder %s45, %s47
    %p51 = scmp.eq.s32.totalorder %s11, 0
    %p52 = por %p50, %p51
    %p53 = scmp.ne.s32.totalorder %s45, %s47
    %p54 = scmp.eq.s32.totalorder %s16, 1
    %p55 = por %p53, %p54
    %p56 = scmp.ne.s32.totalorder %s47, %s48
    %p57 = scmp.eq.s32.totalorder %s16, 0
    %p58 = por %p56, %p57
    %p59 = scmp.ne.s32.totalorder %s47, %s48
    %p60 = scmp.eq.s32.totalorder %s17, 1
    %p61 = por %p59, %p60
    %p63 = scmp.ne.s32.totalorder %s48, %s62
    %p64 = scmp.eq.s32.totalorder %s17, 0
    %p65 = por %p63, %p64
    %s67 = sadd.s32 %s66, 1
    %p70 = scmp.eq.s32.totalorder %s11, 1
    %p71 = scmp.ne.s32.totalorder %s66, %s68
    %p72 = scmp.eq.s32.totalorder %s11, 0
    %p73 = por %p71, %p72
    %p74 = scmp.ne.s32.totalorder %s66, %s68
    %p75 = scmp.eq.s32.totalorder %s16, 1
    %p76 = por %p74, %p75
    %p77 = scmp.ne.s32.totalorder %s68, %s69
    %p78 = scmp.eq.s32.totalorder %s16, 0
    %p79 = por %p77, %p78
    %p80 = scmp.ne.s32.totalorder %s68, %s69
    %p81 = scmp.eq.s32.totalorder %s17, 1
    %p82 = por %p80, %p81
    %p84 = scmp.ne.s32.totalorder %s69, %s83
    %p85 = scmp.eq.s32.totalorder %s17, 0
    %p86 = por %p84, %p85
    %s88 = sadd.s32 %s87, 1
    %p91 = scmp.eq.s32.totalorder %s11, 1
    %p92 = scmp.ne.s32.totalorder %s87, %s89
    %p93 = scmp.eq.s32.totalorder %s11, 0
    %p94 = por %p92, %p93
    %p95 = scmp.ne.s32.totalorder %s87, %s89
    %p96 = scmp.eq.s32.totalorder %s16, 1
    %p97 = por %p95, %p96
    %p98 = scmp.ne.s32.totalorder %s89, %s90
    %p99 = scmp.eq.s32.totalorder %s16, 0
    %p100 = por %p98, %p99
    %p101 = scmp.ne.s32.totalorder %s89, %s90
    %p102 = scmp.eq.s32.totalorder %s17, 1
    %p103 = por %p101, %p102
    %p105 = scmp.ne.s32.totalorder %s90, %s104
    %p106 = scmp.eq.s32.totalorder %s17, 0
    %p107 = por %p105, %p106
    %s109 = sadd.s32 %s108, 1
    %p112 = scmp.eq.s32.totalorder %s11, 1
    %p113 = scmp.ne.s32.totalorder %s108, %s110
    %p114 = scmp.eq.s32.totalorder %s11, 0
    %p115 = por %p113, %p114
    %p116 = scmp.ne.s32.totalorder %s108, %s110
    %p117 = scmp.eq.s32.totalorder %s16, 1
    %p118 = por %p116, %p117
    %p119 = scmp.ne.s32.totalorder %s110, %s111
    %p120 = scmp.eq.s32.totalorder %s16, 0
    %p121 = por %p119, %p120
    %p122 = scmp.ne.s32.totalorder %s110, %s111
    %p123 = scmp.eq.s32.totalorder %s17, 1
    %p124 = por %p122, %p123
    %p126 = scmp.ne.s32.totalorder %s111, %s125
    %p127 = scmp.eq.s32.totalorder %s17, 0
    %p128 = por %p126, %p127
    %s129 = ssub.s32 %s11, %s18
    %p130 = scmp.eq.s32.totalorder %s129, 0
    %s132 = sadd.s32 %s131, 1
    %s133 = scalar_select %p130, %s131, %s132
    %p136 = pneg %p130
    %p137 = scmp.eq.s32.totalorder %s11, 1
    %p138 = por %p136, %p137
    %p139 = scmp.ne.s32.totalorder %s131, %s134
    %p140 = scmp.eq.s32.totalorder %s11, 0
    %p141 = por %p139, %p140
    %p142 = scmp.ne.s32.totalorder %s131, %s134
    %p143 = scmp.eq.s32.totalorder %s16, 1
    %p144 = por %p142, %p143
    %p145 = scmp.ne.s32.totalorder %s134, %s135
    %p146 = scmp.eq.s32.totalorder %s16, 0
    %p147 = por %p145, %p146
    %p148 = scmp.ne.s32.totalorder %s134, %s135
    %p149 = scmp.eq.s32.totalorder %s17, 1
    %p150 = por %p148, %p149
    %p152 = scmp.ne.s32.totalorder %s135, %s151
    %p153 = scmp.eq.s32.totalorder %s17, 0
    %p154 = por %p152, %p153
    %p155 = scmp.le.s32.totalorder 1, %s11
    %p156 = scmp.lt.s32.totalorder %s11, 3
    %p157 = pnand %p155, %p156
    %p158 = pneg %p157
    // Predicated region
    $region9: #{attention2d_forward.1} parent=5 // pred_check
      _
    $region10: #{attention2d_forward.1} parent=5 // pred_check_branch
      %160 = sbr.rel (%p157) target = $region12
    $region11: #{attention2d_forward.1} parent=5 // pred_region
      %s161 = ssub.s32 %s11, 1
      // Predicated region
      $region13: #{attention2d_forward.1} parent=11 // pred_check
        %p162 = pneg %p58
      $region14: #{attention2d_forward.1} parent=11 // pred_check_branch
        %164 = sbr.rel (%p162) target = $region16
      $region15: #{attention2d_forward.1} parent=11 // pred_region
        _
      $region16: #{attention2d_forward.1} parent=11 // pred_fallthru
        _
      // Predicated region
      $region17: #{attention2d_forward.1} parent=11 // pred_check
        %p165 = pneg %p79
      $region18: #{attention2d_forward.1} parent=11 // pred_check_branch
        %167 = sbr.rel (%p165) target = $region20
      $region19: #{attention2d_forward.1} parent=11 // pred_region
        _
      $region20: #{attention2d_forward.1} parent=11 // pred_fallthru
        _
      // Predicated region
      $region21: #{attention2d_forward.1} parent=11 // pred_check
        %p168 = pneg %p100
      $region22: #{attention2d_forward.1} parent=11 // pred_check_branch
        %170 = sbr.rel (%p168) target = $region24
      $region23: #{attention2d_forward.1} parent=11 // pred_region
        _
      $region24: #{attention2d_forward.1} parent=11 // pred_fallthru
        _
      // Predicated region
      $region25: #{attention2d_forward.1} parent=11 // pred_check
        %p171 = pneg %p121
      $region26: #{attention2d_forward.1} parent=11 // pred_check_branch
        %173 = sbr.rel (%p171) target = $region28
      $region27: #{attention2d_forward.1} parent=11 // pred_region
        _
      $region28: #{attention2d_forward.1} parent=11 // pred_fallthru
        _
    $region12: #{attention2d_forward.1} parent=5 // pred_fallthru
      _
    %p174 = scmp.lt.s32.totalorder %s11, 2
    // Predicated region
    $region29: #{attention2d_forward.1} parent=5 // pred_check
      %p175 = pneg %p174
    $region30: #{attention2d_forward.1} parent=5 // pred_check_branch
      %177 = sbr.rel (%p175) target = $region32
    $region31: #{attention2d_forward.1} parent=5 // pred_region
      // Predicated region
      $region33: #{attention2d_forward.1} parent=31 // pred_check
        %p178 = pneg %p31
      $region34: #{attention2d_forward.1} parent=31 // pred_check_branch
        %180 = sbr.rel (%p178) target = $region36
      $region35: #{attention2d_forward.1} parent=31 // pred_region
        %p181 = scmp.lt.s32.totalorder %s11, 1
        %s182 = scalar_select %p181, %s11, 1
        %s183 = smul.addr %s182, 8
        %s184 = smul.addr %s183, 8
        %s185 = scalar_lea.vmem %s0, %s184
      $region36: #{attention2d_forward.1} parent=31 // pred_fallthru
        _
    $region32: #{attention2d_forward.1} parent=5 // pred_fallthru
      _
    %p186 = scmp.le.s32.totalorder 1, %s11
    %p187 = scmp.lt.s32.totalorder %s11, 3
    %p188 = pnand %p186, %p187
    %p189 = pneg %p188
    // Predicated region
    $region37: #{attention2d_forward.1} parent=5 // pred_check
      _
    $region38: #{attention2d_forward.1} parent=5 // pred_check_branch
      %191 = sbr.rel (%p188) target = $region40
    $region39: #{attention2d_forward.1} parent=5 // pred_region
      %s192 = ssub.s32 %s11, 1
      %p193 = scmp.lt.s32.totalorder %s16, 1
      %s194 = scalar_select %p193, %s16, 1
      %s195 = smul.addr %s194, 8
      %s196 = smul.addr %s195, 8
      %s197 = scalar_lea.vmem %s0, %s196
      %p198 = pneg %p37
      %p199 = pneg %p34
      %p200 = pneg %p58
      %p201 = pneg %p55
      %p202 = pneg %p79
      %p203 = pneg %p76
      %p204 = pneg %p100
      %p205 = pneg %p97
      %p206 = pneg %p121
      %p207 = pneg %p118
      %p208 = pneg %p147
      %p209 = pneg %p144
      %p210 = scmp.lt.s32.totalorder %s16, 1
      %s211 = scalar_select %p210, %s16, 1
      %s212 = smul.addr %s211, 8
      %s213 = smul.addr %s212, 8
      %s214 = scalar_lea.vmem %s5, %s213
      %p215 = scmp.lt.s32.totalorder %s16, 1
      %s216 = scalar_select %p215, %s16, 1
      %s217 = smul.addr %s216, 8
      %s218 = smul.addr %s217, 8
      %s219 = scalar_lea.vmem %s0, %s218
      %p220 = scmp.lt.s32.totalorder %s16, 1
      %s221 = scalar_select %p220, %s16, 1
      %s222 = smul.addr %s221, 8
      %s223 = smul.addr %s222, 8
      %s224 = scalar_lea.vmem %s5, %s223
      %v227 = vld [vmem:[%s219] sm:$0xff]
      %v228 = vld [vmem:[%s219 + $0x8] sm:$0xff]
      %v229 = vld [vmem:[%s219 + $0x10] sm:$0xff]
      %v230 = vld [vmem:[%s219 + $0x18] sm:$0xff]
      %v231 = vld [vmem:[%s219 + $0x20] sm:$0xff]
      %v232 = vld [vmem:[%s219 + $0x28] sm:$0xff]
      %v233 = vld [vmem:[%s219 + $0x30] sm:$0xff]
      %v234 = vld [vmem:[%s219 + $0x38] sm:$0xff]
      %v235 = vmul.f32 %v227, %v227
      %v236 = vmul.f32 %v228, %v228
      %v237 = vmul.f32 %v229, %v229
      %v238 = vmul.f32 %v230, %v230
      %v239 = vmul.f32 %v231, %v231
      %v240 = vmul.f32 %v232, %v232
      %v241 = vmul.f32 %v233, %v233
      %v242 = vmul.f32 %v234, %v234
      %v243 = vadd.f32 %v235, %v237
      %v244 = vadd.f32 %v243, %v239
      %v245 = vadd.f32 %v244, %v241
      %v246 = vrot.slane %v245, 4
      %v247 = vadd.f32 %v245, %v246
      %v248 = vrot.slane %v247, 2
      %v249 = vadd.f32 %v247, %v248
      %v250 = vrot.slane %v249, 1
      %v251 = vadd.f32 %v249, %v250
      %v252 = vadd.f32 %v236, %v238
      %v253 = vadd.f32 %v252, %v240
      %v254 = vadd.f32 %v253, %v242
      %v255 = vrot.slane %v254, 4
      %v256 = vadd.f32 %v254, %v255
      %v257 = vrot.slane %v256, 2
      %v258 = vadd.f32 %v256, %v257
      %v259 = vrot.slane %v258, 1
      %v260 = vadd.f32 %v258, %v259
      %v261 = vmax.f32 %v251, 1e-24
      %v262 = vmax.f32 %v260, 1e-24
      %v263 = vrsqrt.pop %v261
      %v264 = vmul.f32 %v263, %v261
      %v265 = vmul.f32 %v264, %v263
      %v266 = vmul.f32 0.5, %v265
      %v267 = vsub.f32 1.5, %v266
      %v268 = vmul.f32 %v263, %v267
      %vm269 = vweird.f32 %v261
      %vm270 = vweird.f32 %v263
      %vm271 = vmor %vm269, %vm270
      %v272 = vsel %vm271, %v263, %v268
      %v273 = vrsqrt.pop %v262
      %v274 = vmul.f32 %v273, %v262
      %v275 = vmul.f32 %v274, %v273
      %v276 = vmul.f32 0.5, %v275
      %v277 = vsub.f32 1.5, %v276
      %v278 = vmul.f32 %v273, %v277
      %vm279 = vweird.f32 %v262
      %vm280 = vweird.f32 %v273
      %vm281 = vmor %vm279, %vm280
      %v282 = vsel %vm281, %v273, %v278
      %v283 = vmul.f32 %v227, %v272
      %v284 = vmul.f32 %v228, %v282
      %v285 = vmul.f32 %v229, %v272
      %v286 = vmul.f32 %v230, %v282
      %v287 = vmul.f32 %v231, %v272
      %v288 = vmul.f32 %v232, %v282
      %v289 = vmul.f32 %v233, %v272
      %v290 = vmul.f32 %v234, %v282
      %v291 = vld [vmem:[%s1] sm:$0xff]
      %v292 = vld [vmem:[%s1 + $0x8] sm:$0xff]
      %v293 = vld [vmem:[%s1 + $0x10] sm:$0xff]
      %v294 = vld [vmem:[%s1 + $0x18] sm:$0xff]
      %296 = vset.pattern.permute.xlu0 0
      %297 = vperm.xlu0 %296, %v291
      %v298 = vpop.permute.xlu0 %297
      %301 = vset.pattern.permute.xlu0 0
      %302 = vperm.xlu0 %301, %v292
      %v303 = vpop.permute.xlu0 %302
      %306 = vset.pattern.permute.xlu0 0
      %307 = vperm.xlu0 %306, %v293
      %v308 = vpop.permute.xlu0 %307
      %311 = vset.pattern.permute.xlu0 0
      %312 = vperm.xlu0 %311, %v294
      %v313 = vpop.permute.xlu0 %312
      %v315 = vmul.f32 %v283, %v298
      %v316 = vmul.f32 %v284, %v298
      %v317 = vmul.f32 %v285, %v303
      %v318 = vmul.f32 %v286, %v303
      %v319 = vmul.f32 %v287, %v308
      %v320 = vmul.f32 %v288, %v308
      %v321 = vmul.f32 %v289, %v313
      %v322 = vmul.f32 %v290, %v313
      %v323 = vpack.c.bf16 %v317, %v315
      %v324 = vpack.c.bf16 %v318, %v316
      %v325 = vpack.c.bf16 %v321, %v319
      %v326 = vpack.c.bf16 %v322, %v320
      %v327 = vld [vmem:[%s2] sm:$0xf]
      %v328 = vld [vmem:[%s2 + $0x4] sm:$0xf]
      %v329 = vld [vmem:[%s2 + $0x8] sm:$0xf]
      %v330 = vld [vmem:[%s2 + $0xc] sm:$0xf]
      %v331 = vld [vmem:[%s2 + $0x10] sm:$0xf]
      %v332 = vld [vmem:[%s2 + $0x14] sm:$0xf]
      %v333 = vld [vmem:[%s2 + $0x18] sm:$0xf]
      %v334 = vld [vmem:[%s2 + $0x1c] sm:$0xf]
      %v335 = vld [vmem:[%s2 + $0x20] sm:$0xf]
      %v336 = vld [vmem:[%s2 + $0x24] sm:$0xf]
      %v337 = vld [vmem:[%s2 + $0x28] sm:$0xf]
      %v338 = vld [vmem:[%s2 + $0x2c] sm:$0xf]
      %v339 = vld [vmem:[%s2 + $0x30] sm:$0xf]
      %v340 = vld [vmem:[%s2 + $0x34] sm:$0xf]
      %v341 = vld [vmem:[%s2 + $0x38] sm:$0xf]
      %v342 = vld [vmem:[%s2 + $0x3c] sm:$0xf]
      %v343 = vld [vmem:[%s2 + $0x40] sm:$0xf]
      %v344 = vld [vmem:[%s2 + $0x44] sm:$0xf]
      %v345 = vld [vmem:[%s2 + $0x48] sm:$0xf]
      %v346 = vld [vmem:[%s2 + $0x4c] sm:$0xf]
      %v347 = vld [vmem:[%s2 + $0x50] sm:$0xf]
      %v348 = vld [vmem:[%s2 + $0x54] sm:$0xf]
      %v349 = vld [vmem:[%s2 + $0x58] sm:$0xf]
      %v350 = vld [vmem:[%s2 + $0x5c] sm:$0xf]
      %v351 = vld [vmem:[%s2 + $0x60] sm:$0xf]
      %v352 = vld [vmem:[%s2 + $0x64] sm:$0xf]
      %v353 = vld [vmem:[%s2 + $0x68] sm:$0xf]
      %v354 = vld [vmem:[%s2 + $0x6c] sm:$0xf]
      %v355 = vld [vmem:[%s2 + $0x70] sm:$0xf]
      %v356 = vld [vmem:[%s2 + $0x74] sm:$0xf]
      %v357 = vld [vmem:[%s2 + $0x78] sm:$0xf]
      %v358 = vld [vmem:[%s2 + $0x7c] sm:$0xf]
      %v359 = vld [vmem:[%s2 + $0x80] sm:$0xf]
      %v360 = vld [vmem:[%s2 + $0x84] sm:$0xf]
      %v361 = vld [vmem:[%s2 + $0x88] sm:$0xf]
      %v362 = vld [vmem:[%s2 + $0x8c] sm:$0xf]
      %v363 = vld [vmem:[%s2 + $0x90] sm:$0xf]
      %v364 = vld [vmem:[%s2 + $0x94] sm:$0xf]
      %v365 = vld [vmem:[%s2 + $0x98] sm:$0xf]
      %v366 = vld [vmem:[%s2 + $0x9c] sm:$0xf]
      %v367 = vld [vmem:[%s2 + $0xa0] sm:$0xf]
      %v368 = vld [vmem:[%s2 + $0xa4] sm:$0xf]
      %v369 = vld [vmem:[%s2 + $0xa8] sm:$0xf]
      %v370 = vld [vmem:[%s2 + $0xac] sm:$0xf]
      %v371 = vld [vmem:[%s2 + $0xb0] sm:$0xf]
      %v372 = vld [vmem:[%s2 + $0xb4] sm:$0xf]
      %v373 = vld [vmem:[%s2 + $0xb8] sm:$0xf]
      %v374 = vld [vmem:[%s2 + $0xbc] sm:$0xf]
      %v423 = vunpack.c.l.b16 %v327
      %v424 = vunpack.c.l.b16 %v328
      %v425 = vunpack.c.l.b16 %v329
      %v426 = vunpack.c.l.b16 %v330
      %v427 = vunpack.c.l.b16 %v331
      %v428 = vunpack.c.l.b16 %v332
      %v429 = vunpack.c.l.b16 %v333
      %v430 = vunpack.c.l.b16 %v334
      %v431 = vunpack.c.l.b16 %v335
      %v432 = vunpack.c.l.b16 %v336
      %v433 = vunpack.c.l.b16 %v337
      %v434 = vunpack.c.l.b16 %v338
      %v435 = vunpack.c.l.b16 %v339
      %v436 = vunpack.c.l.b16 %v340
      %v437 = vunpack.c.l.b16 %v341
      %v438 = vunpack.c.l.b16 %v342
      %v439 = vunpack.c.l.b16 %v343
      %v440 = vunpack.c.l.b16 %v344
      %v441 = vunpack.c.l.b16 %v345
      %v442 = vunpack.c.l.b16 %v346
      %v443 = vunpack.c.l.b16 %v347
      %v444 = vunpack.c.l.b16 %v348
      %v445 = vunpack.c.l.b16 %v349
      %v446 = vunpack.c.l.b16 %v350
      %v447 = vunpack.c.l.b16 %v351
      %v448 = vunpack.c.l.b16 %v352
      %v449 = vunpack.c.l.b16 %v353
      %v450 = vunpack.c.l.b16 %v354
      %v451 = vunpack.c.l.b16 %v355
      %v452 = vunpack.c.l.b16 %v356
      %v453 = vunpack.c.l.b16 %v357
      %v454 = vunpack.c.l.b16 %v358
      %v455 = vunpack.c.l.b16 %v359
      %v456 = vunpack.c.l.b16 %v360
      %v457 = vunpack.c.l.b16 %v361
      %v458 = vunpack.c.l.b16 %v362
      %v459 = vunpack.c.l.b16 %v363
      %v460 = vunpack.c.l.b16 %v364
      %v461 = vunpack.c.l.b16 %v365
      %v462 = vunpack.c.l.b16 %v366
      %v463 = vunpack.c.l.b16 %v367
      %v464 = vunpack.c.l.b16 %v368
      %v465 = vunpack.c.l.b16 %v369
      %v466 = vunpack.c.l.b16 %v370
      %v467 = vunpack.c.l.b16 %v371
      %v468 = vunpack.c.l.b16 %v372
      %v469 = vunpack.c.l.b16 %v373
      %v470 = vunpack.c.l.b16 %v374
      %v471 = vpack.c.b16 %v424, %v423
      %v472 = vpack.c.b16 %v426, %v425
      %v473 = vpack.c.b16 %v428, %v427
      %v474 = vpack.c.b16 %v430, %v429
      %v475 = vpack.c.b16 %v432, %v431
      %v476 = vpack.c.b16 %v434, %v433
      %v477 = vpack.c.b16 %v436, %v435
      %v478 = vpack.c.b16 %v438, %v437
      %v479 = vpack.c.b16 %v440, %v439
      %v480 = vpack.c.b16 %v442, %v441
      %v481 = vpack.c.b16 %v444, %v443
      %v482 = vpack.c.b16 %v446, %v445
      %v483 = vpack.c.b16 %v448, %v447
      %v484 = vpack.c.b16 %v450, %v449
      %v485 = vpack.c.b16 %v452, %v451
      %v486 = vpack.c.b16 %v454, %v453
      %v487 = vpack.c.b16 %v456, %v455
      %v488 = vpack.c.b16 %v458, %v457
      %v489 = vpack.c.b16 %v460, %v459
      %v490 = vpack.c.b16 %v462, %v461
      %v491 = vpack.c.b16 %v464, %v463
      %v492 = vpack.c.b16 %v466, %v465
      %v493 = vpack.c.b16 %v468, %v467
      %v494 = vpack.c.b16 %v470, %v469
      %vm495 = vcmask 261120
      %v497 = vsel %vm495, %v471, 0
      %v500 = vsel %vm495, %v472, 0
      %v503 = vsel %vm495, %v473, 0
      %v506 = vsel %vm495, %v474, 0
      %v509 = vsel %vm495, %v475, 0
      %v512 = vsel %vm495, %v476, 0
      %v515 = vsel %vm495, %v477, 0
      %v518 = vsel %vm495, %v478, 0
      %v521 = vsel %vm495, %v479, 0
      %v524 = vsel %vm495, %v480, 0
      %v527 = vsel %vm495, %v481, 0
      %v530 = vsel %vm495, %v482, 0
      %v533 = vsel %vm495, %v483, 0
      %v536 = vsel %vm495, %v484, 0
      %v539 = vsel %vm495, %v485, 0
      %v542 = vsel %vm495, %v486, 0
      %v545 = vsel %vm495, %v487, 0
      %v548 = vsel %vm495, %v488, 0
      %v551 = vsel %vm495, %v489, 0
      %v554 = vsel %vm495, %v490, 0
      %v557 = vsel %vm495, %v491, 0
      %v560 = vsel %vm495, %v492, 0
      %v563 = vsel %vm495, %v493, 0
      %v566 = vsel %vm495, %v494, 0
      %568 = vmatpush.bf16.msra.mxu0 0
      %569 = vmatpush.bf16.msra.mxu0 0
      %570 = vmatpush.bf16.msra.mxu0 0
      %571 = vmatpush.bf16.msra.mxu0 0
      %572 = vmatpush.bf16.msra.mxu0 0
      %573 = vmatpush.bf16.msra.mxu0 0
      %574 = vmatpush.bf16.msra.mxu0 %v325
      %575 = vmatpush.bf16.msra.mxu0 %v323
      %576 = vmatmul.bf16.gmra.mxu0 %v497
      %v577 = vpop.f32.mrf.mxu0
      %v578 = vadd.f32 0.0, %v577
      %v579 = vpop.f32.mrf.mxu0
      %v580 = vadd.f32 0.0, %v579
      %581 = vmatmul.bf16.gmra.mxu0 %v500
      %v582 = vpop.f32.mrf.mxu0
      %v583 = vadd.f32 0.0, %v582
      %v584 = vpop.f32.mrf.mxu0
      %v585 = vadd.f32 0.0, %v584
      %586 = vmatmul.bf16.gmra.mxu0 %v503
      %v587 = vpop.f32.mrf.mxu0
      %v588 = vadd.f32 0.0, %v587
      %v589 = vpop.f32.mrf.mxu0
      %v590 = vadd.f32 0.0, %v589
      %591 = vmatmul.bf16.gmra.mxu0 %v506
      %v592 = vpop.f32.mrf.mxu0
      %v593 = vadd.f32 0.0, %v592
      %v594 = vpop.f32.mrf.mxu0
      %v595 = vadd.f32 0.0, %v594
      %596 = vmatmul.bf16.gmra.mxu0 %v509
      %v597 = vpop.f32.mrf.mxu0
      %v598 = vadd.f32 0.0, %v597
      %v599 = vpop.f32.mrf.mxu0
      %v600 = vadd.f32 0.0, %v599
      %601 = vmatmul.bf16.gmra.mxu0 %v512
      %v602 = vpop.f32.mrf.mxu0
      %v603 = vadd.f32 0.0, %v602
      %v604 = vpop.f32.mrf.mxu0
      %v605 = vadd.f32 0.0, %v604
      %606 = vmatmul.bf16.gmra.mxu0 %v515
      %v607 = vpop.f32.mrf.mxu0
      %v608 = vadd.f32 0.0, %v607
      %v609 = vpop.f32.mrf.mxu0
      %v610 = vadd.f32 0.0, %v609
      %611 = vmatmul.bf16.gmra.mxu0 %v518
      %v612 = vpop.f32.mrf.mxu0
      %v613 = vadd.f32 0.0, %v612
      %v614 = vpop.f32.mrf.mxu0
      %v615 = vadd.f32 0.0, %v614
      %616 = vmatmul.bf16.gmra.mxu0 %v521
      %v617 = vpop.f32.mrf.mxu0
      %v618 = vadd.f32 0.0, %v617
      %v619 = vpop.f32.mrf.mxu0
      %v620 = vadd.f32 0.0, %v619
      %621 = vmatmul.bf16.gmra.mxu0 %v524
      %v622 = vpop.f32.mrf.mxu0
      %v623 = vadd.f32 0.0, %v622
      %v624 = vpop.f32.mrf.mxu0
      %v625 = vadd.f32 0.0, %v624
      %626 = vmatmul.bf16.gmra.mxu0 %v527
      %v627 = vpop.f32.mrf.mxu0
      %v628 = vadd.f32 0.0, %v627
      %v629 = vpop.f32.mrf.mxu0
      %v630 = vadd.f32 0.0, %v629
      %631 = vmatmul.bf16.gmra.mxu0 %v530
      %v632 = vpop.f32.mrf.mxu0
      %v633 = vadd.f32 0.0, %v632
      %v634 = vpop.f32.mrf.mxu0
      %v635 = vadd.f32 0.0, %v634
      %636 = vmatmul.bf16.gmra.mxu0 %v533
      %v637 = vpop.f32.mrf.mxu0
      %v638 = vadd.f32 0.0, %v637
      %v639 = vpop.f32.mrf.mxu0
      %v640 = vadd.f32 0.0, %v639
      %641 = vmatmul.bf16.gmra.mxu0 %v536
      %v642 = vpop.f32.mrf.mxu0
      %v643 = vadd.f32 0.0, %v642
      %v644 = vpop.f32.mrf.mxu0
      %v645 = vadd.f32 0.0, %v644
      %646 = vmatmul.bf16.gmra.mxu0 %v539
      %v647 = vpop.f32.mrf.mxu0
      %v648 = vadd.f32 0.0, %v647
      %v649 = vpop.f32.mrf.mxu0
      %v650 = vadd.f32 0.0, %v649
      %651 = vmatmul.bf16.gmra.mxu0 %v542
      %v652 = vpop.f32.mrf.mxu0
      %v653 = vadd.f32 0.0, %v652
      %v654 = vpop.f32.mrf.mxu0
      %v655 = vadd.f32 0.0, %v654
      %656 = vmatmul.bf16.gmra.mxu0 %v545
      %v657 = vpop.f32.mrf.mxu0
      %v658 = vadd.f32 0.0, %v657
      %v659 = vpop.f32.mrf.mxu0
      %v660 = vadd.f32 0.0, %v659
      %661 = vmatmul.bf16.gmra.mxu0 %v548
      %v662 = vpop.f32.mrf.mxu0
      %v663 = vadd.f32 0.0, %v662
      %v664 = vpop.f32.mrf.mxu0
      %v665 = vadd.f32 0.0, %v664
      %666 = vmatmul.bf16.gmra.mxu0 %v551
      %v667 = vpop.f32.mrf.mxu0
      %v668 = vadd.f32 0.0, %v667
      %v669 = vpop.f32.mrf.mxu0
      %v670 = vadd.f32 0.0, %v669
      %671 = vmatmul.bf16.gmra.mxu0 %v554
      %v672 = vpop.f32.mrf.mxu0
      %v673 = vadd.f32 0.0, %v672
      %v674 = vpop.f32.mrf.mxu0
      %v675 = vadd.f32 0.0, %v674
      %676 = vmatmul.bf16.gmra.mxu0 %v557
      %v677 = vpop.f32.mrf.mxu0
      %v678 = vadd.f32 0.0, %v677
      %v679 = vpop.f32.mrf.mxu0
      %v680 = vadd.f32 0.0, %v679
      %681 = vmatmul.bf16.gmra.mxu0 %v560
      %v682 = vpop.f32.mrf.mxu0
      %v683 = vadd.f32 0.0, %v682
      %v684 = vpop.f32.mrf.mxu0
      %v685 = vadd.f32 0.0, %v684
      %686 = vmatmul.bf16.gmra.mxu0 %v563
      %v687 = vpop.f32.mrf.mxu0
      %v688 = vadd.f32 0.0, %v687
      %v689 = vpop.f32.mrf.mxu0
      %v690 = vadd.f32 0.0, %v689
      %691 = vmatmul.bf16.gmra.mxu0 %v566
      %v692 = vpop.f32.mrf.mxu0
      %v693 = vadd.f32 0.0, %v692
      %v694 = vpop.f32.mrf.mxu0
      %v695 = vadd.f32 0.0, %v694
      %696 = vdwg.mxu0
      %697 = vmatpush.bf16.msra.mxu0 0
      %698 = vmatpush.bf16.msra.mxu0 0
      %699 = vmatpush.bf16.msra.mxu0 0
      %700 = vmatpush.bf16.msra.mxu0 0
      %701 = vmatpush.bf16.msra.mxu0 0
      %702 = vmatpush.bf16.msra.mxu0 0
      %703 = vmatpush.bf16.msra.mxu0 %v326
      %704 = vmatpush.bf16.msra.mxu0 %v324
      %705 = vmatmul.bf16.gmra.mxu0 %v497
      %v706 = vpop.f32.mrf.mxu0
      %v707 = vadd.f32 0.0, %v706
      %v708 = vpop.f32.mrf.mxu0
      %v709 = vadd.f32 0.0, %v708
      %710 = vmatmul.bf16.gmra.mxu0 %v500
      %v711 = vpop.f32.mrf.mxu0
      %v712 = vadd.f32 0.0, %v711
      %v713 = vpop.f32.mrf.mxu0
      %v714 = vadd.f32 0.0, %v713
      %715 = vmatmul.bf16.gmra.mxu0 %v503
      %v716 = vpop.f32.mrf.mxu0
      %v717 = vadd.f32 0.0, %v716
      %v718 = vpop.f32.mrf.mxu0
      %v719 = vadd.f32 0.0, %v718
      %720 = vmatmul.bf16.gmra.mxu0 %v506
      %v721 = vpop.f32.mrf.mxu0
      %v722 = vadd.f32 0.0, %v721
      %v723 = vpop.f32.mrf.mxu0
      %v724 = vadd.f32 0.0, %v723
      %725 = vmatmul.bf16.gmra.mxu0 %v509
      %v726 = vpop.f32.mrf.mxu0
      %v727 = vadd.f32 0.0, %v726
      %v728 = vpop.f32.mrf.mxu0
      %v729 = vadd.f32 0.0, %v728
      %730 = vmatmul.bf16.gmra.mxu0 %v512
      %v731 = vpop.f32.mrf.mxu0
      %v732 = vadd.f32 0.0, %v731
      %v733 = vpop.f32.mrf.mxu0
      %v734 = vadd.f32 0.0, %v733
      %735 = vmatmul.bf16.gmra.mxu0 %v515
      %v736 = vpop.f32.mrf.mxu0
      %v737 = vadd.f32 0.0, %v736
      %v738 = vpop.f32.mrf.mxu0
      %v739 = vadd.f32 0.0, %v738
      %740 = vmatmul.bf16.gmra.mxu0 %v518
      %v741 = vpop.f32.mrf.mxu0
      %v742 = vadd.f32 0.0, %v741
      %v743 = vpop.f32.mrf.mxu0
      %v744 = vadd.f32 0.0, %v743
      %745 = vmatmul.bf16.gmra.mxu0 %v521
      %v746 = vpop.f32.mrf.mxu0
      %v747 = vadd.f32 0.0, %v746
      %v748 = vpop.f32.mrf.mxu0
      %v749 = vadd.f32 0.0, %v748
      %750 = vmatmul.bf16.gmra.mxu0 %v524
      %v751 = vpop.f32.mrf.mxu0
      %v752 = vadd.f32 0.0, %v751
      %v753 = vpop.f32.mrf.mxu0
      %v754 = vadd.f32 0.0, %v753
      %755 = vmatmul.bf16.gmra.mxu0 %v527
      %v756 = vpop.f32.mrf.mxu0
      %v757 = vadd.f32 0.0, %v756
      %v758 = vpop.f32.mrf.mxu0
      %v759 = vadd.f32 0.0, %v758
      %760 = vmatmul.bf16.gmra.mxu0 %v530
      %v761 = vpop.f32.mrf.mxu0
      %v762 = vadd.f32 0.0, %v761
      %v763 = vpop.f32.mrf.mxu0
      %v764 = vadd.f32 0.0, %v763
      %765 = vmatmul.bf16.gmra.mxu0 %v533
      %v766 = vpop.f32.mrf.mxu0
      %v767 = vadd.f32 0.0, %v766
      %v768 = vpop.f32.mrf.mxu0
      %v769 = vadd.f32 0.0, %v768
      %770 = vmatmul.bf16.gmra.mxu0 %v536
      %v771 = vpop.f32.mrf.mxu0
      %v772 = vadd.f32 0.0, %v771
      %v773 = vpop.f32.mrf.mxu0
      %v774 = vadd.f32 0.0, %v773
      %775 = vmatmul.bf16.gmra.mxu0 %v539
      %v776 = vpop.f32.mrf.mxu0
      %v777 = vadd.f32 0.0, %v776
      %v778 = vpop.f32.mrf.mxu0
      %v779 = vadd.f32 0.0, %v778
      %780 = vmatmul.bf16.gmra.mxu0 %v542
      %v781 = vpop.f32.mrf.mxu0
      %v782 = vadd.f32 0.0, %v781
      %v783 = vpop.f32.mrf.mxu0
      %v784 = vadd.f32 0.0, %v783
      %785 = vmatmul.bf16.gmra.mxu0 %v545
      %v786 = vpop.f32.mrf.mxu0
      %v787 = vadd.f32 0.0, %v786
      %v788 = vpop.f32.mrf.mxu0
      %v789 = vadd.f32 0.0, %v788
      %790 = vmatmul.bf16.gmra.mxu0 %v548
      %v791 = vpop.f32.mrf.mxu0
      %v792 = vadd.f32 0.0, %v791
      %v793 = vpop.f32.mrf.mxu0
      %v794 = vadd.f32 0.0, %v793
      %795 = vmatmul.bf16.gmra.mxu0 %v551
      %v796 = vpop.f32.mrf.mxu0
      %v797 = vadd.f32 0.0, %v796
      %v798 = vpop.f32.mrf.mxu0
      %v799 = vadd.f32 0.0, %v798
      %800 = vmatmul.bf16.gmra.mxu0 %v554
      %v801 = vpop.f32.mrf.mxu0
      %v802 = vadd.f32 0.0, %v801
      %v803 = vpop.f32.mrf.mxu0
      %v804 = vadd.f32 0.0, %v803
      %805 = vmatmul.bf16.gmra.mxu0 %v557
      %v806 = vpop.f32.mrf.mxu0
      %v807 = vadd.f32 0.0, %v806
      %v808 = vpop.f32.mrf.mxu0
      %v809 = vadd.f32 0.0, %v808
      %810 = vmatmul.bf16.gmra.mxu0 %v560
      %v811 = vpop.f32.mrf.mxu0
      %v812 = vadd.f32 0.0, %v811
      %v813 = vpop.f32.mrf.mxu0
      %v814 = vadd.f32 0.0, %v813
      %815 = vmatmul.bf16.gmra.mxu0 %v563
      %v816 = vpop.f32.mrf.mxu0
      %v817 = vadd.f32 0.0, %v816
      %v818 = vpop.f32.mrf.mxu0
      %v819 = vadd.f32 0.0, %v818
      %820 = vmatmul.bf16.gmra.mxu0 %v566
      %v821 = vpop.f32.mrf.mxu0
      %v822 = vadd.f32 0.0, %v821
      %v823 = vpop.f32.mrf.mxu0
      %v824 = vadd.f32 0.0, %v823
      %825 = vdwg.mxu0
      %v826 = vpack.c.bf16 %v580, %v578
      %v827 = vpack.c.bf16 %v709, %v707
      %v828 = vpack.c.bf16 %v585, %v583
      %v829 = vpack.c.bf16 %v714, %v712
      %v830 = vpack.c.bf16 %v620, %v618
      %v831 = vpack.c.bf16 %v749, %v747
      %v832 = vpack.c.bf16 %v625, %v623
      %v833 = vpack.c.bf16 %v754, %v752
      %v834 = vpack.c.bf16 %v787, %v658
      %v835 = vpack.c.bf16 %v789, %v660
      %v836 = vpack.c.bf16 %v792, %v663
      %v837 = vpack.c.bf16 %v794, %v665
      %838 = vxpose.binary.xlu0.c.b16.start [1/16] %v827, %v826, 128
      %839 = vxpose.binary.xlu0.c.b16.cont [2/16] %v829, %v828, 128
      %840 = vxpose.binary.xlu0.c.b16.cont [3/16] 0, 0, 128
      %841 = vxpose.binary.xlu0.c.b16.cont [4/16] 0, 0, 128
      %842 = vxpose.binary.xlu0.c.b16.cont [5/16] 0, 0, 128
      %843 = vxpose.binary.xlu0.c.b16.cont [6/16] 0, 0, 128
      %844 = vxpose.binary.xlu0.c.b16.cont [7/16] 0, 0, 128
      %845 = vxpose.binary.xlu0.c.b16.end [8/16] 0, 0, 128
      %v846 = vpop.trf.xlu0
      %v847 = vpop.trf.xlu0
      %v848 = vpop.trf.xlu0
      %v849 = vpop.trf.xlu0
      %v850 = vpop.trf.xlu0
      %v851 = vpop.trf.xlu0
      %v852 = vpop.trf.xlu0
      %v853 = vpop.trf.xlu0
      %v854 = vpop.trf.xlu0
      %v855 = vpop.trf.xlu0
      %v856 = vpop.trf.xlu0
      %v857 = vpop.trf.xlu0
      %v858 = vpop.trf.xlu0
      %v859 = vpop.trf.xlu0
      %v860 = vpop.trf.xlu0
      %v861 = vpop.trf.xlu0
      %v863 = vsel %vm495, %v846, 0
      %v866 = vsel %vm495, %v848, 0
      %v869 = vsel %vm495, %v850, 0
      %v872 = vsel %vm495, %v852, 0
      %v875 = vsel %vm495, %v854, 0
      %v878 = vsel %vm495, %v856, 0
      %v881 = vsel %vm495, %v858, 0
      %v884 = vsel %vm495, %v860, 0
      %v887 = vsel %vm495, %v847, 0
      %v890 = vsel %vm495, %v849, 0
      %v893 = vsel %vm495, %v851, 0
      %v896 = vsel %vm495, %v853, 0
      %v899 = vsel %vm495, %v855, 0
      %v902 = vsel %vm495, %v857, 0
      %v905 = vsel %vm495, %v859, 0
      %v908 = vsel %vm495, %v861, 0
      %910 = vmatpush.bf16.msra.mxu0 0
      %911 = vmatpush.bf16.msra.mxu0 0
      %912 = vmatpush.bf16.msra.mxu0 0
      %913 = vmatpush.bf16.msra.mxu0 0
      %914 = vmatpush.bf16.msra.mxu0 0
      %915 = vmatpush.bf16.msra.mxu0 0
      %916 = vmatpush.bf16.msra.mxu0 %v832
      %917 = vmatpush.bf16.msra.mxu0 %v830
      %918 = vmatmul.bf16.gmra.mxu0 %v863
      %v919 = vpop.f32.mrf.mxu0
      %v920 = vadd.f32 0.0, %v919
      %v921 = vpop.f32.mrf.mxu0
      %v922 = vadd.f32 0.0, %v921
      %923 = vmatmul.bf16.gmra.mxu0 %v866
      %v924 = vpop.f32.mrf.mxu0
      %v925 = vadd.f32 0.0, %v924
      %v926 = vpop.f32.mrf.mxu0
      %v927 = vadd.f32 0.0, %v926
      %928 = vmatmul.bf16.gmra.mxu0 %v869
      %v929 = vpop.f32.mrf.mxu0
      %v930 = vadd.f32 0.0, %v929
      %v931 = vpop.f32.mrf.mxu0
      %v932 = vadd.f32 0.0, %v931
      %933 = vmatmul.bf16.gmra.mxu0 %v872
      %v934 = vpop.f32.mrf.mxu0
      %v935 = vadd.f32 0.0, %v934
      %v936 = vpop.f32.mrf.mxu0
      %v937 = vadd.f32 0.0, %v936
      %938 = vmatmul.bf16.gmra.mxu0 %v875
      %v939 = vpop.f32.mrf.mxu0
      %v940 = vadd.f32 0.0, %v939
      %v941 = vpop.f32.mrf.mxu0
      %v942 = vadd.f32 0.0, %v941
      %943 = vmatmul.bf16.gmra.mxu0 %v878
      %v944 = vpop.f32.mrf.mxu0
      %v945 = vadd.f32 0.0, %v944
      %v946 = vpop.f32.mrf.mxu0
      %v947 = vadd.f32 0.0, %v946
      %948 = vmatmul.bf16.gmra.mxu0 %v881
      %v949 = vpop.f32.mrf.mxu0
      %v950 = vadd.f32 0.0, %v949
      %v951 = vpop.f32.mrf.mxu0
      %v952 = vadd.f32 0.0, %v951
      %953 = vmatmul.bf16.gmra.mxu0 %v884
      %v954 = vpop.f32.mrf.mxu0
      %v955 = vadd.f32 0.0, %v954
      %v956 = vpop.f32.mrf.mxu0
      %v957 = vadd.f32 0.0, %v956
      %958 = vmatmul.bf16.gmra.mxu0 %v887
      %v959 = vpop.f32.mrf.mxu0
      %v960 = vadd.f32 0.0, %v959
      %v961 = vpop.f32.mrf.mxu0
      %v962 = vadd.f32 0.0, %v961
      %963 = vmatmul.bf16.gmra.mxu0 %v890
      %v964 = vpop.f32.mrf.mxu0
      %v965 = vadd.f32 0.0, %v964
      %v966 = vpop.f32.mrf.mxu0
      %v967 = vadd.f32 0.0, %v966
      %968 = vmatmul.bf16.gmra.mxu0 %v893
      %v969 = vpop.f32.mrf.mxu0
      %v970 = vadd.f32 0.0, %v969
      %v971 = vpop.f32.mrf.mxu0
      %v972 = vadd.f32 0.0, %v971
      %973 = vmatmul.bf16.gmra.mxu0 %v896
      %v974 = vpop.f32.mrf.mxu0
      %v975 = vadd.f32 0.0, %v974
      %v976 = vpop.f32.mrf.mxu0
      %v977 = vadd.f32 0.0, %v976
      %978 = vmatmul.bf16.gmra.mxu0 %v899
      %v979 = vpop.f32.mrf.mxu0
      %v980 = vadd.f32 0.0, %v979
      %v981 = vpop.f32.mrf.mxu0
      %v982 = vadd.f32 0.0, %v981
      %983 = vmatmul.bf16.gmra.mxu0 %v902
      %v984 = vpop.f32.mrf.mxu0
      %v985 = vadd.f32 0.0, %v984
      %v986 = vpop.f32.mrf.mxu0
      %v987 = vadd.f32 0.0, %v986
      %988 = vmatmul.bf16.gmra.mxu0 %v905
      %v989 = vpop.f32.mrf.mxu0
      %v990 = vadd.f32 0.0, %v989
      %v991 = vpop.f32.mrf.mxu0
      %v992 = vadd.f32 0.0, %v991
      %993 = vmatmul.bf16.gmra.mxu0 %v908
      %v994 = vpop.f32.mrf.mxu0
      %v995 = vadd.f32 0.0, %v994
      %v996 = vpop.f32.mrf.mxu0
      %v997 = vadd.f32 0.0, %v996
      %998 = vdwg.mxu0
      %999 = vmatpush.bf16.msra.mxu0 0
      %1000 = vmatpush.bf16.msra.mxu0 0
      %1001 = vmatpush.bf16.msra.mxu0 0
      %1002 = vmatpush.bf16.msra.mxu0 0
      %1003 = vmatpush.bf16.msra.mxu0 0
      %1004 = vmatpush.bf16.msra.mxu0 0
      %1005 = vmatpush.bf16.msra.mxu0 %v833
      %1006 = vmatpush.bf16.msra.mxu0 %v831
      %1007 = vmatmul.bf16.gmra.mxu0 %v863
      %v1008 = vpop.f32.mrf.mxu0
      %v1009 = vadd.f32 0.0, %v1008
      %v1010 = vpop.f32.mrf.mxu0
      %v1011 = vadd.f32 0.0, %v1010
      %1012 = vmatmul.bf16.gmra.mxu0 %v866
      %v1013 = vpop.f32.mrf.mxu0
      %v1014 = vadd.f32 0.0, %v1013
      %v1015 = vpop.f32.mrf.mxu0
      %v1016 = vadd.f32 0.0, %v1015
      %1017 = vmatmul.bf16.gmra.mxu0 %v869
      %v1018 = vpop.f32.mrf.mxu0
      %v1019 = vadd.f32 0.0, %v1018
      %v1020 = vpop.f32.mrf.mxu0
      %v1021 = vadd.f32 0.0, %v1020
      %1022 = vmatmul.bf16.gmra.mxu0 %v872
      %v1023 = vpop.f32.mrf.mxu0
      %v1024 = vadd.f32 0.0, %v1023
      %v1025 = vpop.f32.mrf.mxu0
      %v1026 = vadd.f32 0.0, %v1025
      %1027 = vmatmul.bf16.gmra.mxu0 %v875
      %v1028 = vpop.f32.mrf.mxu0
      %v1029 = vadd.f32 0.0, %v1028
      %v1030 = vpop.f32.mrf.mxu0
      %v1031 = vadd.f32 0.0, %v1030
      %1032 = vmatmul.bf16.gmra.mxu0 %v878
      %v1033 = vpop.f32.mrf.mxu0
      %v1034 = vadd.f32 0.0, %v1033
      %v1035 = vpop.f32.mrf.mxu0
      %v1036 = vadd.f32 0.0, %v1035
      %1037 = vmatmul.bf16.gmra.mxu0 %v881
      %v1038 = vpop.f32.mrf.mxu0
      %v1039 = vadd.f32 0.0, %v1038
      %v1040 = vpop.f32.mrf.mxu0
      %v1041 = vadd.f32 0.0, %v1040
      %1042 = vmatmul.bf16.gmra.mxu0 %v884
      %v1043 = vpop.f32.mrf.mxu0
      %v1044 = vadd.f32 0.0, %v1043
      %v1045 = vpop.f32.mrf.mxu0
      %v1046 = vadd.f32 0.0, %v1045
      %1047 = vmatmul.bf16.gmra.mxu0 %v887
      %v1048 = vpop.f32.mrf.mxu0
      %v1049 = vadd.f32 0.0, %v1048
      %v1050 = vpop.f32.mrf.mxu0
      %v1051 = vadd.f32 0.0, %v1050
      %1052 = vmatmul.bf16.gmra.mxu0 %v890
      %v1053 = vpop.f32.mrf.mxu0
      %v1054 = vadd.f32 0.0, %v1053
      %v1055 = vpop.f32.mrf.mxu0
      %v1056 = vadd.f32 0.0, %v1055
      %1057 = vmatmul.bf16.gmra.mxu0 %v893
      %v1058 = vpop.f32.mrf.mxu0
      %v1059 = vadd.f32 0.0, %v1058
      %v1060 = vpop.f32.mrf.mxu0
      %v1061 = vadd.f32 0.0, %v1060
      %1062 = vmatmul.bf16.gmra.mxu0 %v896
      %v1063 = vpop.f32.mrf.mxu0
      %v1064 = vadd.f32 0.0, %v1063
      %v1065 = vpop.f32.mrf.mxu0
      %v1066 = vadd.f32 0.0, %v1065
      %1067 = vmatmul.bf16.gmra.mxu0 %v899
      %v1068 = vpop.f32.mrf.mxu0
      %v1069 = vadd.f32 0.0, %v1068
      %v1070 = vpop.f32.mrf.mxu0
      %v1071 = vadd.f32 0.0, %v1070
      %1072 = vmatmul.bf16.gmra.mxu0 %v902
      %v1073 = vpop.f32.mrf.mxu0
      %v1074 = vadd.f32 0.0, %v1073
      %v1075 = vpop.f32.mrf.mxu0
      %v1076 = vadd.f32 0.0, %v1075
      %1077 = vmatmul.bf16.gmra.mxu0 %v905
      %v1078 = vpop.f32.mrf.mxu0
      %v1079 = vadd.f32 0.0, %v1078
      %v1080 = vpop.f32.mrf.mxu0
      %v1081 = vadd.f32 0.0, %v1080
      %1082 = vmatmul.bf16.gmra.mxu0 %v908
      %v1083 = vpop.f32.mrf.mxu0
      %v1084 = vadd.f32 0.0, %v1083
      %v1085 = vpop.f32.mrf.mxu0
      %v1086 = vadd.f32 0.0, %v1085
      %1087 = vdwg.mxu0
      %v1088 = vmax.f32 %v920, %v1009
      %1089 = vmax.xlane.f32.xlu0 %v1088
      %v1090 = vpop.xlane.xlu0 %1089
      %v1091 = vmax.f32 %v922, %v1011
      %1092 = vmax.xlane.f32.xlu0 %v1091
      %v1093 = vpop.xlane.xlu0 %1092
      %v1094 = vmax.f32 %v925, %v1014
      %1095 = vmax.xlane.f32.xlu0 %v1094
      %v1096 = vpop.xlane.xlu0 %1095
      %v1097 = vmax.f32 %v927, %v1016
      %1098 = vmax.xlane.f32.xlu0 %v1097
      %v1099 = vpop.xlane.xlu0 %1098
      %v1100 = vmax.f32 %v930, %v1019
      %1101 = vmax.xlane.f32.xlu0 %v1100
      %v1102 = vpop.xlane.xlu0 %1101
      %v1103 = vmax.f32 %v932, %v1021
      %1104 = vmax.xlane.f32.xlu0 %v1103
      %v1105 = vpop.xlane.xlu0 %1104
      %v1106 = vmax.f32 %v935, %v1024
      %1107 = vmax.xlane.f32.xlu0 %v1106
      %v1108 = vpop.xlane.xlu0 %1107
      %v1109 = vmax.f32 %v937, %v1026
      %1110 = vmax.xlane.f32.xlu0 %v1109
      %v1111 = vpop.xlane.xlu0 %1110
      %v1112 = vmax.f32 %v940, %v1029
      %1113 = vmax.xlane.f32.xlu0 %v1112
      %v1114 = vpop.xlane.xlu0 %1113
      %v1115 = vmax.f32 %v942, %v1031
      %1116 = vmax.xlane.f32.xlu0 %v1115
      %v1117 = vpop.xlane.xlu0 %1116
      %v1118 = vmax.f32 %v945, %v1034
      %1119 = vmax.xlane.f32.xlu0 %v1118
      %v1120 = vpop.xlane.xlu0 %1119
      %v1121 = vmax.f32 %v947, %v1036
      %1122 = vmax.xlane.f32.xlu0 %v1121
      %v1123 = vpop.xlane.xlu0 %1122
      %v1124 = vmax.f32 %v950, %v1039
      %1125 = vmax.xlane.f32.xlu0 %v1124
      %v1126 = vpop.xlane.xlu0 %1125
      %v1127 = vmax.f32 %v952, %v1041
      %1128 = vmax.xlane.f32.xlu0 %v1127
      %v1129 = vpop.xlane.xlu0 %1128
      %v1130 = vmax.f32 %v955, %v1044
      %1131 = vmax.xlane.f32.xlu0 %v1130
      %v1132 = vpop.xlane.xlu0 %1131
      %v1133 = vmax.f32 %v957, %v1046
      %1134 = vmax.xlane.f32.xlu0 %v1133
      %v1135 = vpop.xlane.xlu0 %1134
      %v1136 = vmax.f32 %v960, %v1049
      %1137 = vmax.xlane.f32.xlu0 %v1136
      %v1138 = vpop.xlane.xlu0 %1137
      %v1139 = vmax.f32 %v962, %v1051
      %1140 = vmax.xlane.f32.xlu0 %v1139
      %v1141 = vpop.xlane.xlu0 %1140
      %v1142 = vmax.f32 %v965, %v1054
      %1143 = vmax.xlane.f32.xlu0 %v1142
      %v1144 = vpop.xlane.xlu0 %1143
      %v1145 = vmax.f32 %v967, %v1056
      %1146 = vmax.xlane.f32.xlu0 %v1145
      %v1147 = vpop.xlane.xlu0 %1146
      %v1148 = vmax.f32 %v970, %v1059
      %1149 = vmax.xlane.f32.xlu0 %v1148
      %v1150 = vpop.xlane.xlu0 %1149
      %v1151 = vmax.f32 %v972, %v1061
      %1152 = vmax.xlane.f32.xlu0 %v1151
      %v1153 = vpop.xlane.xlu0 %1152
      %v1154 = vmax.f32 %v975, %v1064
      %1155 = vmax.xlane.f32.xlu0 %v1154
      %v1156 = vpop.xlane.xlu0 %1155
      %v1157 = vmax.f32 %v977, %v1066
      %1158 = vmax.xlane.f32.xlu0 %v1157
      %v1159 = vpop.xlane.xlu0 %1158
      %v1160 = vmax.f32 %v980, %v1069
      %1161 = vmax.xlane.f32.xlu0 %v1160
      %v1162 = vpop.xlane.xlu0 %1161
      %v1163 = vmax.f32 %v982, %v1071
      %1164 = vmax.xlane.f32.xlu0 %v1163
      %v1165 = vpop.xlane.xlu0 %1164
      %v1166 = vmax.f32 %v985, %v1074
      %1167 = vmax.xlane.f32.xlu0 %v1166
      %v1168 = vpop.xlane.xlu0 %1167
      %v1169 = vmax.f32 %v987, %v1076
      %1170 = vmax.xlane.f32.xlu0 %v1169
      %v1171 = vpop.xlane.xlu0 %1170
      %v1172 = vmax.f32 %v990, %v1079
      %1173 = vmax.xlane.f32.xlu0 %v1172
      %v1174 = vpop.xlane.xlu0 %1173
      %v1175 = vmax.f32 %v992, %v1081
      %1176 = vmax.xlane.f32.xlu0 %v1175
      %v1177 = vpop.xlane.xlu0 %1176
      %v1178 = vmax.f32 %v995, %v1084
      %1179 = vmax.xlane.f32.xlu0 %v1178
      %v1180 = vpop.xlane.xlu0 %1179
      %v1181 = vmax.f32 %v997, %v1086
      %1182 = vmax.xlane.f32.xlu0 %v1181
      %v1183 = vpop.xlane.xlu0 %1182
      %v1184 = vsub.f32 %v920, %v1090
      %v1185 = vsub.f32 %v1009, %v1090
      %v1186 = vsub.f32 %v922, %v1093
      %v1187 = vsub.f32 %v1011, %v1093
      %v1188 = vsub.f32 %v925, %v1096
      %v1189 = vsub.f32 %v1014, %v1096
      %v1190 = vsub.f32 %v927, %v1099
      %v1191 = vsub.f32 %v1016, %v1099
      %v1192 = vsub.f32 %v930, %v1102
      %v1193 = vsub.f32 %v1019, %v1102
      %v1194 = vsub.f32 %v932, %v1105
      %v1195 = vsub.f32 %v1021, %v1105
      %v1196 = vsub.f32 %v935, %v1108
      %v1197 = vsub.f32 %v1024, %v1108
      %v1198 = vsub.f32 %v937, %v1111
      %v1199 = vsub.f32 %v1026, %v1111
      %v1200 = vsub.f32 %v940, %v1114
      %v1201 = vsub.f32 %v1029, %v1114
      %v1202 = vsub.f32 %v942, %v1117
      %v1203 = vsub.f32 %v1031, %v1117
      %v1204 = vsub.f32 %v945, %v1120
      %v1205 = vsub.f32 %v1034, %v1120
      %v1206 = vsub.f32 %v947, %v1123
      %v1207 = vsub.f32 %v1036, %v1123
      %v1208 = vsub.f32 %v950, %v1126
      %v1209 = vsub.f32 %v1039, %v1126
      %v1210 = vsub.f32 %v952, %v1129
      %v1211 = vsub.f32 %v1041, %v1129
      %v1212 = vsub.f32 %v955, %v1132
      %v1213 = vsub.f32 %v1044, %v1132
      %v1214 = vsub.f32 %v957, %v1135
      %v1215 = vsub.f32 %v1046, %v1135
      %v1216 = vsub.f32 %v960, %v1138
      %v1217 = vsub.f32 %v1049, %v1138
      %v1218 = vsub.f32 %v962, %v1141
      %v1219 = vsub.f32 %v1051, %v1141
      %v1220 = vsub.f32 %v965, %v1144
      %v1221 = vsub.f32 %v1054, %v1144
      %v1222 = vsub.f32 %v967, %v1147
      %v1223 = vsub.f32 %v1056, %v1147
      %v1224 = vsub.f32 %v970, %v1150
      %v1225 = vsub.f32 %v1059, %v1150
      %v1226 = vsub.f32 %v972, %v1153
      %v1227 = vsub.f32 %v1061, %v1153
      %v1228 = vsub.f32 %v975, %v1156
      %v1229 = vsub.f32 %v1064, %v1156
      %v1230 = vsub.f32 %v977, %v1159
      %v1231 = vsub.f32 %v1066, %v1159
      %v1232 = vsub.f32 %v980, %v1162
      %v1233 = vsub.f32 %v1069, %v1162
      %v1234 = vsub.f32 %v982, %v1165
      %v1235 = vsub.f32 %v1071, %v1165
      %v1236 = vsub.f32 %v985, %v1168
      %v1237 = vsub.f32 %v1074, %v1168
      %v1238 = vsub.f32 %v987, %v1171
      %v1239 = vsub.f32 %v1076, %v1171
      %v1240 = vsub.f32 %v990, %v1174
      %v1241 = vsub.f32 %v1079, %v1174
      %v1242 = vsub.f32 %v992, %v1177
      %v1243 = vsub.f32 %v1081, %v1177
      %v1244 = vsub.f32 %v995, %v1180
      %v1245 = vsub.f32 %v1084, %v1180
      %v1246 = vsub.f32 %v997, %v1183
      %v1247 = vsub.f32 %v1086, %v1183
      %v1248 = vmul.f32 %v1184, 1.442695
      %v1249 = vpow.pop %v1248
      %v1250 = vmul.f32 %v1185, 1.442695
      %v1251 = vpow.pop %v1250
      %v1252 = vmul.f32 %v1186, 1.442695
      %v1253 = vpow.pop %v1252
      %v1254 = vmul.f32 %v1187, 1.442695
      %v1255 = vpow.pop %v1254
      %v1256 = vmul.f32 %v1188, 1.442695
      %v1257 = vpow.pop %v1256
      %v1258 = vmul.f32 %v1189, 1.442695
      %v1259 = vpow.pop %v1258
      %v1260 = vmul.f32 %v1190, 1.442695
      %v1261 = vpow.pop %v1260
      %v1262 = vmul.f32 %v1191, 1.442695
      %v1263 = vpow.pop %v1262
      %v1264 = vmul.f32 %v1192, 1.442695
      %v1265 = vpow.pop %v1264
      %v1266 = vmul.f32 %v1193, 1.442695
      %v1267 = vpow.pop %v1266
      %v1268 = vmul.f32 %v1194, 1.442695
      %v1269 = vpow.pop %v1268
      %v1270 = vmul.f32 %v1195, 1.442695
      %v1271 = vpow.pop %v1270
      %v1272 = vmul.f32 %v1196, 1.442695
      %v1273 = vpow.pop %v1272
      %v1274 = vmul.f32 %v1197, 1.442695
      %v1275 = vpow.pop %v1274
      %v1276 = vmul.f32 %v1198, 1.442695
      %v1277 = vpow.pop %v1276
      %v1278 = vmul.f32 %v1199, 1.442695
      %v1279 = vpow.pop %v1278
      %v1280 = vmul.f32 %v1200, 1.442695
      %v1281 = vpow.pop %v1280
      %v1282 = vmul.f32 %v1201, 1.442695
      %v1283 = vpow.pop %v1282
      %v1284 = vmul.f32 %v1202, 1.442695
      %v1285 = vpow.pop %v1284
      %v1286 = vmul.f32 %v1203, 1.442695
      %v1287 = vpow.pop %v1286
      %v1288 = vmul.f32 %v1204, 1.442695
      %v1289 = vpow.pop %v1288
      %v1290 = vmul.f32 %v1205, 1.442695
      %v1291 = vpow.pop %v1290
      %v1292 = vmul.f32 %v1206, 1.442695
      %v1293 = vpow.pop %v1292
      %v1294 = vmul.f32 %v1207, 1.442695
      %v1295 = vpow.pop %v1294
      %v1296 = vmul.f32 %v1208, 1.442695
      %v1297 = vpow.pop %v1296
      %v1298 = vmul.f32 %v1209, 1.442695
      %v1299 = vpow.pop %v1298
      %v1300 = vmul.f32 %v1210, 1.442695
      %v1301 = vpow.pop %v1300
      %v1302 = vmul.f32 %v1211, 1.442695
      %v1303 = vpow.pop %v1302
      %v1304 = vmul.f32 %v1212, 1.442695
      %v1305 = vpow.pop %v1304
      %v1306 = vmul.f32 %v1213, 1.442695
      %v1307 = vpow.pop %v1306
      %v1308 = vmul.f32 %v1214, 1.442695
      %v1309 = vpow.pop %v1308
      %v1310 = vmul.f32 %v1215, 1.442695
      %v1311 = vpow.pop %v1310
      %v1312 = vmul.f32 %v1216, 1.442695
      %v1313 = vpow.pop %v1312
      %v1314 = vmul.f32 %v1217, 1.442695
      %v1315 = vpow.pop %v1314
      %v1316 = vmul.f32 %v1218, 1.442695
      %v1317 = vpow.pop %v1316
      %v1318 = vmul.f32 %v1219, 1.442695
      %v1319 = vpow.pop %v1318
      %v1320 = vmul.f32 %v1220, 1.442695
      %v1321 = vpow.pop %v1320
      %v1322 = vmul.f32 %v1221, 1.442695
      %v1323 = vpow.pop %v1322
      %v1324 = vmul.f32 %v1222, 1.442695
      %v1325 = vpow.pop %v1324
      %v1326 = vmul.f32 %v1223, 1.442695
      %v1327 = vpow.pop %v1326
      %v1328 = vmul.f32 %v1224, 1.442695
      %v1329 = vpow.pop %v1328
      %v1330 = vmul.f32 %v1225, 1.442695
      %v1331 = vpow.pop %v1330
      %v1332 = vmul.f32 %v1226, 1.442695
      %v1333 = vpow.pop %v1332
      %v1334 = vmul.f32 %v1227, 1.442695
      %v1335 = vpow.pop %v1334
      %v1336 = vmul.f32 %v1228, 1.442695
      %v1337 = vpow.pop %v1336
      %v1338 = vmul.f32 %v1229, 1.442695
      %v1339 = vpow.pop %v1338
      %v1340 = vmul.f32 %v1230, 1.442695
      %v1341 = vpow.pop %v1340
      %v1342 = vmul.f32 %v1231, 1.442695
      %v1343 = vpow.pop %v1342
      %v1344 = vmul.f32 %v1232, 1.442695
      %v1345 = vpow.pop %v1344
      %v1346 = vmul.f32 %v1233, 1.442695
      %v1347 = vpow.pop %v1346
      %v1348 = vmul.f32 %v1234, 1.442695
      %v1349 = vpow.pop %v1348
      %v1350 = vmul.f32 %v1235, 1.442695
      %v1351 = vpow.pop %v1350
      %v1352 = vmul.f32 %v1236, 1.442695
      %v1353 = vpow.pop %v1352
      %v1354 = vmul.f32 %v1237, 1.442695
      %v1355 = vpow.pop %v1354
      %v1356 = vmul.f32 %v1238, 1.442695
      %v1357 = vpow.pop %v1356
      %v1358 = vmul.f32 %v1239, 1.442695
      %v1359 = vpow.pop %v1358
      %v1360 = vmul.f32 %v1240, 1.442695
      %v1361 = vpow.pop %v1360
      %v1362 = vmul.f32 %v1241, 1.442695
      %v1363 = vpow.pop %v1362
      %v1364 = vmul.f32 %v1242, 1.442695
      %v1365 = vpow.pop %v1364
      %v1366 = vmul.f32 %v1243, 1.442695
      %v1367 = vpow.pop %v1366
      %v1368 = vmul.f32 %v1244, 1.442695
      %v1369 = vpow.pop %v1368
      %v1370 = vmul.f32 %v1245, 1.442695
      %v1371 = vpow.pop %v1370
      %v1372 = vmul.f32 %v1246, 1.442695
      %v1373 = vpow.pop %v1372
      %v1374 = vmul.f32 %v1247, 1.442695
      %v1375 = vpow.pop %v1374
      %v1376 = vpack.c.bf16 %v1253, %v1249
      %v1377 = vpack.c.bf16 %v1255, %v1251
      %v1378 = vpack.c.bf16 %v1261, %v1257
      %v1379 = vpack.c.bf16 %v1263, %v1259
      %v1380 = vpack.c.bf16 %v1269, %v1265
      %v1381 = vpack.c.bf16 %v1271, %v1267
      %v1382 = vpack.c.bf16 %v1277, %v1273
      %v1383 = vpack.c.bf16 %v1279, %v1275
      %v1384 = vpack.c.bf16 %v1285, %v1281
      %v1385 = vpack.c.bf16 %v1287, %v1283
      %v1386 = vpack.c.bf16 %v1293, %v1289
      %v1387 = vpack.c.bf16 %v1295, %v1291
      %v1388 = vpack.c.bf16 %v1301, %v1297
      %v1389 = vpack.c.bf16 %v1303, %v1299
      %v1390 = vpack.c.bf16 %v1309, %v1305
      %v1391 = vpack.c.bf16 %v1311, %v1307
      %v1392 = vpack.c.bf16 %v1317, %v1313
      %v1393 = vpack.c.bf16 %v1319, %v1315
      %v1394 = vpack.c.bf16 %v1325, %v1321
      %v1395 = vpack.c.bf16 %v1327, %v1323
      %v1396 = vpack.c.bf16 %v1333, %v1329
      %v1397 = vpack.c.bf16 %v1335, %v1331
      %v1398 = vpack.c.bf16 %v1341, %v1337
      %v1399 = vpack.c.bf16 %v1343, %v1339
      %v1400 = vpack.c.bf16 %v1349, %v1345
      %v1401 = vpack.c.bf16 %v1351, %v1347
      %v1402 = vpack.c.bf16 %v1357, %v1353
      %v1403 = vpack.c.bf16 %v1359, %v1355
      %v1404 = vpack.c.bf16 %v1365, %v1361
      %v1405 = vpack.c.bf16 %v1367, %v1363
      %v1406 = vpack.c.bf16 %v1373, %v1369
      %v1407 = vpack.c.bf16 %v1375, %v1371
      %v1412 = vunpack.c.l.b16 %v834
      %v1413 = vunpack.c.h.b16 %v834
      %v1414 = vunpack.c.l.b16 %v835
      %v1415 = vunpack.c.h.b16 %v835
      %v1416 = vunpack.c.l.b16 %v836
      %v1417 = vunpack.c.h.b16 %v836
      %v1418 = vunpack.c.l.b16 %v837
      %v1419 = vunpack.c.h.b16 %v837
      %v1420 = vpack.c.b16 %v1414, %v1412
      %v1421 = vpack.c.b16 %v1415, %v1413
      %v1422 = vpack.c.b16 %v1418, %v1416
      %v1423 = vpack.c.b16 %v1419, %v1417
      %1428 = vmatpush.bf16.xpose.msra.mxu0 %v1390
      %1429 = vmatpush.bf16.xpose.msra.mxu0 %v1388
      %1430 = vmatpush.bf16.xpose.msra.mxu0 %v1386
      %1431 = vmatpush.bf16.xpose.msra.mxu0 %v1384
      %1432 = vmatpush.bf16.xpose.msra.mxu0 %v1382
      %1433 = vmatpush.bf16.xpose.msra.mxu0 %v1380
      %1434 = vmatpush.bf16.xpose.msra.mxu0 %v1378
      %1435 = vmatpush.bf16.xpose.msra.mxu0 %v1376
      %1436 = vmatmul.bf16.gmra.mxu0 %v1420
      %v1437 = vpop.f32.mrf.mxu0
      %v1438 = vadd.f32 0.0, %v1437
      %v1439 = vpop.f32.mrf.mxu0
      %v1440 = vadd.f32 0.0, %v1439
      %1441 = vmatmul.bf16.gmra.mxu0 %v1422
      %v1442 = vpop.f32.mrf.mxu0
      %v1443 = vadd.f32 0.0, %v1442
      %v1444 = vpop.f32.mrf.mxu0
      %v1445 = vadd.f32 0.0, %v1444
      %1446 = vmatmul.bf16.gmra.mxu0 1065369472
      %v1447 = vpop.f32.mrf.mxu0
      %v1448 = vadd.f32 0.0, %v1447
      %v1449 = vpop.f32.mrf.mxu0
      %1450 = vdwg.mxu0
      %1451 = vmatpush.bf16.xpose.msra.mxu0 %v1391
      %1452 = vmatpush.bf16.xpose.msra.mxu0 %v1389
      %1453 = vmatpush.bf16.xpose.msra.mxu0 %v1387
      %1454 = vmatpush.bf16.xpose.msra.mxu0 %v1385
      %1455 = vmatpush.bf16.xpose.msra.mxu0 %v1383
      %1456 = vmatpush.bf16.xpose.msra.mxu0 %v1381
      %1457 = vmatpush.bf16.xpose.msra.mxu0 %v1379
      %1458 = vmatpush.bf16.xpose.msra.mxu0 %v1377
      %1459 = vmatmul.bf16.gmra.mxu0 %v1421
      %v1460 = vpop.f32.mrf.mxu0
      %v1461 = vadd.f32 %v1438, %v1460
      %v1462 = vpop.f32.mrf.mxu0
      %v1463 = vadd.f32 %v1440, %v1462
      %1464 = vmatmul.bf16.gmra.mxu0 %v1423
      %v1465 = vpop.f32.mrf.mxu0
      %v1466 = vadd.f32 %v1443, %v1465
      %v1467 = vpop.f32.mrf.mxu0
      %v1468 = vadd.f32 %v1445, %v1467
      %1469 = vmatmul.bf16.gmra.mxu0 1065369472
      %v1470 = vpop.f32.mrf.mxu0
      %v1471 = vadd.f32 %v1448, %v1470
      %v1472 = vpop.f32.mrf.mxu0
      %1473 = vdwg.mxu0
      %1474 = vmatpush.bf16.xpose.msra.mxu0 %v1406
      %1475 = vmatpush.bf16.xpose.msra.mxu0 %v1404
      %1476 = vmatpush.bf16.xpose.msra.mxu0 %v1402
      %1477 = vmatpush.bf16.xpose.msra.mxu0 %v1400
      %1478 = vmatpush.bf16.xpose.msra.mxu0 %v1398
      %1479 = vmatpush.bf16.xpose.msra.mxu0 %v1396
      %1480 = vmatpush.bf16.xpose.msra.mxu0 %v1394
      %1481 = vmatpush.bf16.xpose.msra.mxu0 %v1392
      %1482 = vmatmul.bf16.gmra.mxu0 %v1420
      %v1483 = vpop.f32.mrf.mxu0
      %v1484 = vadd.f32 0.0, %v1483
      %v1485 = vpop.f32.mrf.mxu0
      %v1486 = vadd.f32 0.0, %v1485
      %1487 = vmatmul.bf16.gmra.mxu0 %v1422
      %v1488 = vpop.f32.mrf.mxu0
      %v1489 = vadd.f32 0.0, %v1488
      %v1490 = vpop.f32.mrf.mxu0
      %v1491 = vadd.f32 0.0, %v1490
      %1492 = vmatmul.bf16.gmra.mxu0 1065369472
      %v1493 = vpop.f32.mrf.mxu0
      %v1494 = vadd.f32 0.0, %v1493
      %v1495 = vpop.f32.mrf.mxu0
      %1496 = vdwg.mxu0
      %1497 = vmatpush.bf16.xpose.msra.mxu0 %v1407
      %1498 = vmatpush.bf16.xpose.msra.mxu0 %v1405
      %1499 = vmatpush.bf16.xpose.msra.mxu0 %v1403
      %1500 = vmatpush.bf16.xpose.msra.mxu0 %v1401
      %1501 = vmatpush.bf16.xpose.msra.mxu0 %v1399
      %1502 = vmatpush.bf16.xpose.msra.mxu0 %v1397
      %1503 = vmatpush.bf16.xpose.msra.mxu0 %v1395
      %1504 = vmatpush.bf16.xpose.msra.mxu0 %v1393
      %1505 = vmatmul.bf16.gmra.mxu0 %v1421
      %v1506 = vpop.f32.mrf.mxu0
      %v1507 = vadd.f32 %v1484, %v1506
      %v1508 = vpop.f32.mrf.mxu0
      %v1509 = vadd.f32 %v1486, %v1508
      %1510 = vmatmul.bf16.gmra.mxu0 %v1423
      %v1511 = vpop.f32.mrf.mxu0
      %v1512 = vadd.f32 %v1489, %v1511
      %v1513 = vpop.f32.mrf.mxu0
      %v1514 = vadd.f32 %v1491, %v1513
      %1515 = vmatmul.bf16.gmra.mxu0 1065369472
      %v1516 = vpop.f32.mrf.mxu0
      %v1517 = vadd.f32 %v1494, %v1516
      %v1518 = vpop.f32.mrf.mxu0
      %1519 = vdwg.mxu0
      %v1520 = vrcp.pop %v1471
      %v1521 = vrcp.pop %v1517
      %v1522 = vperm.slane %v1520, 0
      %v1523 = vperm.slane %v1521, 0
      %v1524 = vmul.f32 %v1461, %v1522
      %v1525 = vmul.f32 %v1507, %v1523
      %v1526 = vmul.f32 %v1463, %v1522
      %v1527 = vmul.f32 %v1509, %v1523
      %v1528 = vmul.f32 %v1466, %v1522
      %v1529 = vmul.f32 %v1512, %v1523
      %v1530 = vmul.f32 %v1468, %v1522
      %v1531 = vmul.f32 %v1514, %v1523
      %v1532 = vpack.c.bf16 %v1525, %v1524
      %v1533 = vpack.c.bf16 %v1527, %v1526
      %v1534 = vpack.c.bf16 %v1529, %v1528
      %v1535 = vpack.c.bf16 %v1531, %v1530
      %1536 = vst [vmem:[#allocation2] sm:$0xff] %v1532
      %1537 = vst [vmem:[#allocation2 + $0x8] sm:$0xff] %v1533
      %1538 = vst [vmem:[#allocation2 + $0x10] sm:$0xff] %v1534
      %1539 = vst [vmem:[#allocation2 + $0x18] sm:$0xff] %v1535
      %v1540 = vpack.c.bf16 %v590, %v588
      %v1541 = vpack.c.bf16 %v719, %v717
      %v1542 = vpack.c.bf16 %v595, %v593
      %v1543 = vpack.c.bf16 %v724, %v722
      %v1544 = vpack.c.bf16 %v630, %v628
      %v1545 = vpack.c.bf16 %v759, %v757
      %v1546 = vpack.c.bf16 %v635, %v633
      %v1547 = vpack.c.bf16 %v764, %v762
      %v1548 = vpack.c.bf16 %v797, %v668
      %v1549 = vpack.c.bf16 %v799, %v670
      %v1550 = vpack.c.bf16 %v802, %v673
      %v1551 = vpack.c.bf16 %v804, %v675
      %1552 = vxpose.binary.xlu0.c.b16.start [1/16] %v1541, %v1540, 128
      %1553 = vxpose.binary.xlu0.c.b16.cont [2/16] %v1543, %v1542, 128
      %1554 = vxpose.binary.xlu0.c.b16.cont [3/16] 0, 0, 128
      %1555 = vxpose.binary.xlu0.c.b16.cont [4/16] 0, 0, 128
      %1556 = vxpose.binary.xlu0.c.b16.cont [5/16] 0, 0, 128
      %1557 = vxpose.binary.xlu0.c.b16.cont [6/16] 0, 0, 128
      %1558 = vxpose.binary.xlu0.c.b16.cont [7/16] 0, 0, 128
      %1559 = vxpose.binary.xlu0.c.b16.end [8/16] 0, 0, 128
      %v1560 = vpop.trf.xlu0
      %v1561 = vpop.trf.xlu0
      %v1562 = vpop.trf.xlu0
      %v1563 = vpop.trf.xlu0
      %v1564 = vpop.trf.xlu0
      %v1565 = vpop.trf.xlu0
      %v1566 = vpop.trf.xlu0
      %v1567 = vpop.trf.xlu0
      %v1568 = vpop.trf.xlu0
      %v1569 = vpop.trf.xlu0
      %v1570 = vpop.trf.xlu0
      %v1571 = vpop.trf.xlu0
      %v1572 = vpop.trf.xlu0
      %v1573 = vpop.trf.xlu0
      %v1574 = vpop.trf.xlu0
      %v1575 = vpop.trf.xlu0
      %v1577 = vsel %vm495, %v1560, 0
      %v1580 = vsel %vm495, %v1562, 0
      %v1583 = vsel %vm495, %v1564, 0
      %v1586 = vsel %vm495, %v1566, 0
      %v1589 = vsel %vm495, %v1568, 0
      %v1592 = vsel %vm495, %v1570, 0
      %v1595 = vsel %vm495, %v1572, 0
      %v1598 = vsel %vm495, %v1574, 0
      %v1601 = vsel %vm495, %v1561, 0
      %v1604 = vsel %vm495, %v1563, 0
      %v1607 = vsel %vm495, %v1565, 0
      %v1610 = vsel %vm495, %v1567, 0
      %v1613 = vsel %vm495, %v1569, 0
      %v1616 = vsel %vm495, %v1571, 0
      %v1619 = vsel %vm495, %v1573, 0
      %v1622 = vsel %vm495, %v1575, 0
      %1624 = vmatpush.bf16.msra.mxu0 0
      %1625 = vmatpush.bf16.msra.mxu0 0
      %1626 = vmatpush.bf16.msra.mxu0 0
      %1627 = vmatpush.bf16.msra.mxu0 0
      %1628 = vmatpush.bf16.msra.mxu0 0
      %1629 = vmatpush.bf16.msra.mxu0 0
      %1630 = vmatpush.bf16.msra.mxu0 %v1546
      %1631 = vmatpush.bf16.msra.mxu0 %v1544
      %1632 = vmatmul.bf16.gmra.mxu0 %v1577
      %v1633 = vpop.f32.mrf.mxu0
      %v1634 = vadd.f32 0.0, %v1633
      %v1635 = vpop.f32.mrf.mxu0
      %v1636 = vadd.f32 0.0, %v1635
      %1637 = vmatmul.bf16.gmra.mxu0 %v1580
      %v1638 = vpop.f32.mrf.mxu0
      %v1639 = vadd.f32 0.0, %v1638
      %v1640 = vpop.f32.mrf.mxu0
      %v1641 = vadd.f32 0.0, %v1640
      %1642 = vmatmul.bf16.gmra.mxu0 %v1583
      %v1643 = vpop.f32.mrf.mxu0
      %v1644 = vadd.f32 0.0, %v1643
      %v1645 = vpop.f32.mrf.mxu0
      %v1646 = vadd.f32 0.0, %v1645
      %1647 = vmatmul.bf16.gmra.mxu0 %v1586
      %v1648 = vpop.f32.mrf.mxu0
      %v1649 = vadd.f32 0.0, %v1648
      %v1650 = vpop.f32.mrf.mxu0
      %v1651 = vadd.f32 0.0, %v1650
      %1652 = vmatmul.bf16.gmra.mxu0 %v1589
      %v1653 = vpop.f32.mrf.mxu0
      %v1654 = vadd.f32 0.0, %v1653
      %v1655 = vpop.f32.mrf.mxu0
      %v1656 = vadd.f32 0.0, %v1655
      %1657 = vmatmul.bf16.gmra.mxu0 %v1592
      %v1658 = vpop.f32.mrf.mxu0
      %v1659 = vadd.f32 0.0, %v1658
      %v1660 = vpop.f32.mrf.mxu0
      %v1661 = vadd.f32 0.0, %v1660
      %1662 = vmatmul.bf16.gmra.mxu0 %v1595
      %v1663 = vpop.f32.mrf.mxu0
      %v1664 = vadd.f32 0.0, %v1663
      %v1665 = vpop.f32.mrf.mxu0
      %v1666 = vadd.f32 0.0, %v1665
      %1667 = vmatmul.bf16.gmra.mxu0 %v1598
      %v1668 = vpop.f32.mrf.mxu0
      %v1669 = vadd.f32 0.0, %v1668
      %v1670 = vpop.f32.mrf.mxu0
      %v1671 = vadd.f32 0.0, %v1670
      %1672 = vmatmul.bf16.gmra.mxu0 %v1601
      %v1673 = vpop.f32.mrf.mxu0
      %v1674 = vadd.f32 0.0, %v1673
      %v1675 = vpop.f32.mrf.mxu0
      %v1676 = vadd.f32 0.0, %v1675
      %1677 = vmatmul.bf16.gmra.mxu0 %v1604
      %v1678 = vpop.f32.mrf.mxu0
      %v1679 = vadd.f32 0.0, %v1678
      %v1680 = vpop.f32.mrf.mxu0
      %v1681 = vadd.f32 0.0, %v1680
      %1682 = vmatmul.bf16.gmra.mxu0 %v1607
      %v1683 = vpop.f32.mrf.mxu0
      %v1684 = vadd.f32 0.0, %v1683
      %v1685 = vpop.f32.mrf.mxu0
      %v1686 = vadd.f32 0.0, %v1685
      %1687 = vmatmul.bf16.gmra.mxu0 %v1610
      %v1688 = vpop.f32.mrf.mxu0
      %v1689 = vadd.f32 0.0, %v1688
      %v1690 = vpop.f32.mrf.mxu0
      %v1691 = vadd.f32 0.0, %v1690
      %1692 = vmatmul.bf16.gmra.mxu0 %v1613
      %v1693 = vpop.f32.mrf.mxu0
      %v1694 = vadd.f32 0.0, %v1693
      %v1695 = vpop.f32.mrf.mxu0
      %v1696 = vadd.f32 0.0, %v1695
      %1697 = vmatmul.bf16.gmra.mxu0 %v1616
      %v1698 = vpop.f32.mrf.mxu0
      %v1699 = vadd.f32 0.0, %v1698
      %v1700 = vpop.f32.mrf.mxu0
      %v1701 = vadd.f32 0.0, %v1700
      %1702 = vmatmul.bf16.gmra.mxu0 %v1619
      %v1703 = vpop.f32.mrf.mxu0
      %v1704 = vadd.f32 0.0, %v1703
      %v1705 = vpop.f32.mrf.mxu0
      %v1706 = vadd.f32 0.0, %v1705
      %1707 = vmatmul.bf16.gmra.mxu0 %v1622
      %v1708 = vpop.f32.mrf.mxu0
      %v1709 = vadd.f32 0.0, %v1708
      %v1710 = vpop.f32.mrf.mxu0
      %v1711 = vadd.f32 0.0, %v1710
      %1712 = vdwg.mxu0
      %1713 = vmatpush.bf16.msra.mxu0 0
      %1714 = vmatpush.bf16.msra.mxu0 0
      %1715 = vmatpush.bf16.msra.mxu0 0
      %1716 = vmatpush.bf16.msra.mxu0 0
      %1717 = vmatpush.bf16.msra.mxu0 0
      %1718 = vmatpush.bf16.msra.mxu0 0
      %1719 = vmatpush.bf16.msra.mxu0 %v1547
      %1720 = vmatpush.bf16.msra.mxu0 %v1545
      %1721 = vmatmul.bf16.gmra.mxu0 %v1577
      %v1722 = vpop.f32.mrf.mxu0
      %v1723 = vadd.f32 0.0, %v1722
      %v1724 = vpop.f32.mrf.mxu0
      %v1725 = vadd.f32 0.0, %v1724
      %1726 = vmatmul.bf16.gmra.mxu0 %v1580
      %v1727 = vpop.f32.mrf.mxu0
      %v1728 = vadd.f32 0.0, %v1727
      %v1729 = vpop.f32.mrf.mxu0
      %v1730 = vadd.f32 0.0, %v1729
      %1731 = vmatmul.bf16.gmra.mxu0 %v1583
      %v1732 = vpop.f32.mrf.mxu0
      %v1733 = vadd.f32 0.0, %v1732
      %v1734 = vpop.f32.mrf.mxu0
      %v1735 = vadd.f32 0.0, %v1734
      %1736 = vmatmul.bf16.gmra.mxu0 %v1586
      %v1737 = vpop.f32.mrf.mxu0
      %v1738 = vadd.f32 0.0, %v1737
      %v1739 = vpop.f32.mrf.mxu0
      %v1740 = vadd.f32 0.0, %v1739
      %1741 = vmatmul.bf16.gmra.mxu0 %v1589
      %v1742 = vpop.f32.mrf.mxu0
      %v1743 = vadd.f32 0.0, %v1742
      %v1744 = vpop.f32.mrf.mxu0
      %v1745 = vadd.f32 0.0, %v1744
      %1746 = vmatmul.bf16.gmra.mxu0 %v1592
      %v1747 = vpop.f32.mrf.mxu0
      %v1748 = vadd.f32 0.0, %v1747
      %v1749 = vpop.f32.mrf.mxu0
      %v1750 = vadd.f32 0.0, %v1749
      %1751 = vmatmul.bf16.gmra.mxu0 %v1595
      %v1752 = vpop.f32.mrf.mxu0
      %v1753 = vadd.f32 0.0, %v1752
      %v1754 = vpop.f32.mrf.mxu0
      %v1755 = vadd.f32 0.0, %v1754
      %1756 = vmatmul.bf16.gmra.mxu0 %v1598
      %v1757 = vpop.f32.mrf.mxu0
      %v1758 = vadd.f32 0.0, %v1757
      %v1759 = vpop.f32.mrf.mxu0
      %v1760 = vadd.f32 0.0, %v1759
      %1761 = vmatmul.bf16.gmra.mxu0 %v1601
      %v1762 = vpop.f32.mrf.mxu0
      %v1763 = vadd.f32 0.0, %v1762
      %v1764 = vpop.f32.mrf.mxu0
      %v1765 = vadd.f32 0.0, %v1764
      %1766 = vmatmul.bf16.gmra.mxu0 %v1604
      %v1767 = vpop.f32.mrf.mxu0
      %v1768 = vadd.f32 0.0, %v1767
      %v1769 = vpop.f32.mrf.mxu0
      %v1770 = vadd.f32 0.0, %v1769
      %1771 = vmatmul.bf16.gmra.mxu0 %v1607
      %v1772 = vpop.f32.mrf.mxu0
      %v1773 = vadd.f32 0.0, %v1772
      %v1774 = vpop.f32.mrf.mxu0
      %v1775 = vadd.f32 0.0, %v1774
      %1776 = vmatmul.bf16.gmra.mxu0 %v1610
      %v1777 = vpop.f32.mrf.mxu0
      %v1778 = vadd.f32 0.0, %v1777
      %v1779 = vpop.f32.mrf.mxu0
      %v1780 = vadd.f32 0.0, %v1779
      %1781 = vmatmul.bf16.gmra.mxu0 %v1613
      %v1782 = vpop.f32.mrf.mxu0
      %v1783 = vadd.f32 0.0, %v1782
      %v1784 = vpop.f32.mrf.mxu0
      %v1785 = vadd.f32 0.0, %v1784
      %1786 = vmatmul.bf16.gmra.mxu0 %v1616
      %v1787 = vpop.f32.mrf.mxu0
      %v1788 = vadd.f32 0.0, %v1787
      %v1789 = vpop.f32.mrf.mxu0
      %v1790 = vadd.f32 0.0, %v1789
      %1791 = vmatmul.bf16.gmra.mxu0 %v1619
      %v1792 = vpop.f32.mrf.mxu0
      %v1793 = vadd.f32 0.0, %v1792
      %v1794 = vpop.f32.mrf.mxu0
      %v1795 = vadd.f32 0.0, %v1794
      %1796 = vmatmul.bf16.gmra.mxu0 %v1622
      %v1797 = vpop.f32.mrf.mxu0
      %v1798 = vadd.f32 0.0, %v1797
      %v1799 = vpop.f32.mrf.mxu0
      %v1800 = vadd.f32 0.0, %v1799
      %1801 = vdwg.mxu0
      %v1802 = vmax.f32 %v1634, %v1723
      %1803 = vmax.xlane.f32.xlu0 %v1802
      %v1804 = vpop.xlane.xlu0 %1803
      %v1805 = vmax.f32 %v1636, %v1725
      %1806 = vmax.xlane.f32.xlu0 %v1805
      %v1807 = vpop.xlane.xlu0 %1806
      %v1808 = vmax.f32 %v1639, %v1728
      %1809 = vmax.xlane.f32.xlu0 %v1808
      %v1810 = vpop.xlane.xlu0 %1809
      %v1811 = vmax.f32 %v1641, %v1730
      %1812 = vmax.xlane.f32.xlu0 %v1811
      %v1813 = vpop.xlane.xlu0 %1812
      %v1814 = vmax.f32 %v1644, %v1733
      %1815 = vmax.xlane.f32.xlu0 %v1814
      %v1816 = vpop.xlane.xlu0 %1815
      %v1817 = vmax.f32 %v1646, %v1735
      %1818 = vmax.xlane.f32.xlu0 %v1817
      %v1819 = vpop.xlane.xlu0 %1818
      %v1820 = vmax.f32 %v1649, %v1738
      %1821 = vmax.xlane.f32.xlu0 %v1820
      %v1822 = vpop.xlane.xlu0 %1821
      %v1823 = vmax.f32 %v1651, %v1740
      %1824 = vmax.xlane.f32.xlu0 %v1823
      %v1825 = vpop.xlane.xlu0 %1824
      %v1826 = vmax.f32 %v1654, %v1743
      %1827 = vmax.xlane.f32.xlu0 %v1826
      %v1828 = vpop.xlane.xlu0 %1827
      %v1829 = vmax.f32 %v1656, %v1745
      %1830 = vmax.xlane.f32.xlu0 %v1829
      %v1831 = vpop.xlane.xlu0 %1830
      %v1832 = vmax.f32 %v1659, %v1748
      %1833 = vmax.xlane.f32.xlu0 %v1832
      %v1834 = vpop.xlane.xlu0 %1833
      %v1835 = vmax.f32 %v1661, %v1750
      %1836 = vmax.xlane.f32.xlu0 %v1835
      %v1837 = vpop.xlane.xlu0 %1836
      %v1838 = vmax.f32 %v1664, %v1753
      %1839 = vmax.xlane.f32.xlu0 %v1838
      %v1840 = vpop.xlane.xlu0 %1839
      %v1841 = vmax.f32 %v1666, %v1755
      %1842 = vmax.xlane.f32.xlu0 %v1841
      %v1843 = vpop.xlane.xlu0 %1842
      %v1844 = vmax.f32 %v1669, %v1758
      %1845 = vmax.xlane.f32.xlu0 %v1844
      %v1846 = vpop.xlane.xlu0 %1845
      %v1847 = vmax.f32 %v1671, %v1760
      %1848 = vmax.xlane.f32.xlu0 %v1847
      %v1849 = vpop.xlane.xlu0 %1848
      %v1850 = vmax.f32 %v1674, %v1763
      %1851 = vmax.xlane.f32.xlu0 %v1850
      %v1852 = vpop.xlane.xlu0 %1851
      %v1853 = vmax.f32 %v1676, %v1765
      %1854 = vmax.xlane.f32.xlu0 %v1853
      %v1855 = vpop.xlane.xlu0 %1854
      %v1856 = vmax.f32 %v1679, %v1768
      %1857 = vmax.xlane.f32.xlu0 %v1856
      %v1858 = vpop.xlane.xlu0 %1857
      %v1859 = vmax.f32 %v1681, %v1770
      %1860 = vmax.xlane.f32.xlu0 %v1859
      %v1861 = vpop.xlane.xlu0 %1860
      %v1862 = vmax.f32 %v1684, %v1773
      %1863 = vmax.xlane.f32.xlu0 %v1862
      %v1864 = vpop.xlane.xlu0 %1863
      %v1865 = vmax.f32 %v1686, %v1775
      %1866 = vmax.xlane.f32.xlu0 %v1865
      %v1867 = vpop.xlane.xlu0 %1866
      %v1868 = vmax.f32 %v1689, %v1778
      %1869 = vmax.xlane.f32.xlu0 %v1868
      %v1870 = vpop.xlane.xlu0 %1869
      %v1871 = vmax.f32 %v1691, %v1780
      %1872 = vmax.xlane.f32.xlu0 %v1871
      %v1873 = vpop.xlane.xlu0 %1872
      %v1874 = vmax.f32 %v1694, %v1783
      %1875 = vmax.xlane.f32.xlu0 %v1874
      %v1876 = vpop.xlane.xlu0 %1875
      %v1877 = vmax.f32 %v1696, %v1785
      %1878 = vmax.xlane.f32.xlu0 %v1877
      %v1879 = vpop.xlane.xlu0 %1878
      %v1880 = vmax.f32 %v1699, %v1788
      %1881 = vmax.xlane.f32.xlu0 %v1880
      %v1882 = vpop.xlane.xlu0 %1881
      %v1883 = vmax.f32 %v1701, %v1790
      %1884 = vmax.xlane.f32.xlu0 %v1883
      %v1885 = vpop.xlane.xlu0 %1884
      %v1886 = vmax.f32 %v1704, %v1793
      %1887 = vmax.xlane.f32.xlu0 %v1886
      %v1888 = vpop.xlane.xlu0 %1887
      %v1889 = vmax.f32 %v1706, %v1795
      %1890 = vmax.xlane.f32.xlu0 %v1889
      %v1891 = vpop.xlane.xlu0 %1890
      %v1892 = vmax.f32 %v1709, %v1798
      %1893 = vmax.xlane.f32.xlu0 %v1892
      %v1894 = vpop.xlane.xlu0 %1893
      %v1895 = vmax.f32 %v1711, %v1800
      %1896 = vmax.xlane.f32.xlu0 %v1895
      %v1897 = vpop.xlane.xlu0 %1896
      %v1898 = vsub.f32 %v1634, %v1804
      %v1899 = vsub.f32 %v1723, %v1804
      %v1900 = vsub.f32 %v1636, %v1807
      %v1901 = vsub.f32 %v1725, %v1807
      %v1902 = vsub.f32 %v1639, %v1810
      %v1903 = vsub.f32 %v1728, %v1810
      %v1904 = vsub.f32 %v1641, %v1813
      %v1905 = vsub.f32 %v1730, %v1813
      %v1906 = vsub.f32 %v1644, %v1816
      %v1907 = vsub.f32 %v1733, %v1816
      %v1908 = vsub.f32 %v1646, %v1819
      %v1909 = vsub.f32 %v1735, %v1819
      %v1910 = vsub.f32 %v1649, %v1822
      %v1911 = vsub.f32 %v1738, %v1822
      %v1912 = vsub.f32 %v1651, %v1825
      %v1913 = vsub.f32 %v1740, %v1825
      %v1914 = vsub.f32 %v1654, %v1828
      %v1915 = vsub.f32 %v1743, %v1828
      %v1916 = vsub.f32 %v1656, %v1831
      %v1917 = vsub.f32 %v1745, %v1831
      %v1918 = vsub.f32 %v1659, %v1834
      %v1919 = vsub.f32 %v1748, %v1834
      %v1920 = vsub.f32 %v1661, %v1837
      %v1921 = vsub.f32 %v1750, %v1837
      %v1922 = vsub.f32 %v1664, %v1840
      %v1923 = vsub.f32 %v1753, %v1840
      %v1924 = vsub.f32 %v1666, %v1843
      %v1925 = vsub.f32 %v1755, %v1843
      %v1926 = vsub.f32 %v1669, %v1846
      %v1927 = vsub.f32 %v1758, %v1846
      %v1928 = vsub.f32 %v1671, %v1849
      %v1929 = vsub.f32 %v1760, %v1849
      %v1930 = vsub.f32 %v1674, %v1852
      %v1931 = vsub.f32 %v1763, %v1852
      %v1932 = vsub.f32 %v1676, %v1855
      %v1933 = vsub.f32 %v1765, %v1855
      %v1934 = vsub.f32 %v1679, %v1858
      %v1935 = vsub.f32 %v1768, %v1858
      %v1936 = vsub.f32 %v1681, %v1861
      %v1937 = vsub.f32 %v1770, %v1861
      %v1938 = vsub.f32 %v1684, %v1864
      %v1939 = vsub.f32 %v1773, %v1864
      %v1940 = vsub.f32 %v1686, %v1867
      %v1941 = vsub.f32 %v1775, %v1867
      %v1942 = vsub.f32 %v1689, %v1870
      %v1943 = vsub.f32 %v1778, %v1870
      %v1944 = vsub.f32 %v1691, %v1873
      %v1945 = vsub.f32 %v1780, %v1873
      %v1946 = vsub.f32 %v1694, %v1876
      %v1947 = vsub.f32 %v1783, %v1876
      %v1948 = vsub.f32 %v1696, %v1879
      %v1949 = vsub.f32 %v1785, %v1879
      %v1950 = vsub.f32 %v1699, %v1882
      %v1951 = vsub.f32 %v1788, %v1882
      %v1952 = vsub.f32 %v1701, %v1885
      %v1953 = vsub.f32 %v1790, %v1885
      %v1954 = vsub.f32 %v1704, %v1888
      %v1955 = vsub.f32 %v1793, %v1888
      %v1956 = vsub.f32 %v1706, %v1891
      %v1957 = vsub.f32 %v1795, %v1891
      %v1958 = vsub.f32 %v1709, %v1894
      %v1959 = vsub.f32 %v1798, %v1894
      %v1960 = vsub.f32 %v1711, %v1897
      %v1961 = vsub.f32 %v1800, %v1897
      %v1962 = vmul.f32 %v1898, 1.442695
      %v1963 = vpow.pop %v1962
      %v1964 = vmul.f32 %v1899, 1.442695
      %v1965 = vpow.pop %v1964
      %v1966 = vmul.f32 %v1900, 1.442695
      %v1967 = vpow.pop %v1966
      %v1968 = vmul.f32 %v1901, 1.442695
      %v1969 = vpow.pop %v1968
      %v1970 = vmul.f32 %v1902, 1.442695
      %v1971 = vpow.pop %v1970
      %v1972 = vmul.f32 %v1903, 1.442695
      %v1973 = vpow.pop %v1972
      %v1974 = vmul.f32 %v1904, 1.442695
      %v1975 = vpow.pop %v1974
      %v1976 = vmul.f32 %v1905, 1.442695
      %v1977 = vpow.pop %v1976
      %v1978 = vmul.f32 %v1906, 1.442695
      %v1979 = vpow.pop %v1978
      %v1980 = vmul.f32 %v1907, 1.442695
      %v1981 = vpow.pop %v1980
      %v1982 = vmul.f32 %v1908, 1.442695
      %v1983 = vpow.pop %v1982
      %v1984 = vmul.f32 %v1909, 1.442695
      %v1985 = vpow.pop %v1984
      %v1986 = vmul.f32 %v1910, 1.442695
      %v1987 = vpow.pop %v1986
      %v1988 = vmul.f32 %v1911, 1.442695
      %v1989 = vpow.pop %v1988
      %v1990 = vmul.f32 %v1912, 1.442695
      %v1991 = vpow.pop %v1990
      %v1992 = vmul.f32 %v1913, 1.442695
      %v1993 = vpow.pop %v1992
      %v1994 = vmul.f32 %v1914, 1.442695
      %v1995 = vpow.pop %v1994
      %v1996 = vmul.f32 %v1915, 1.442695
      %v1997 = vpow.pop %v1996
      %v1998 = vmul.f32 %v1916, 1.442695
      %v1999 = vpow.pop %v1998
      %v2000 = vmul.f32 %v1917, 1.442695
      %v2001 = vpow.pop %v2000
      %v2002 = vmul.f32 %v1918, 1.442695
      %v2003 = vpow.pop %v2002
      %v2004 = vmul.f32 %v1919, 1.442695
      %v2005 = vpow.pop %v2004
      %v2006 = vmul.f32 %v1920, 1.442695
      %v2007 = vpow.pop %v2006
      %v2008 = vmul.f32 %v1921, 1.442695
      %v2009 = vpow.pop %v2008
      %v2010 = vmul.f32 %v1922, 1.442695
      %v2011 = vpow.pop %v2010
      %v2012 = vmul.f32 %v1923, 1.442695
      %v2013 = vpow.pop %v2012
      %v2014 = vmul.f32 %v1924, 1.442695
      %v2015 = vpow.pop %v2014
      %v2016 = vmul.f32 %v1925, 1.442695
      %v2017 = vpow.pop %v2016
      %v2018 = vmul.f32 %v1926, 1.442695
      %v2019 = vpow.pop %v2018
      %v2020 = vmul.f32 %v1927, 1.442695
      %v2021 = vpow.pop %v2020
      %v2022 = vmul.f32 %v1928, 1.442695
      %v2023 = vpow.pop %v2022
      %v2024 = vmul.f32 %v1929, 1.442695
      %v2025 = vpow.pop %v2024
      %v2026 = vmul.f32 %v1930, 1.442695
      %v2027 = vpow.pop %v2026
      %v2028 = vmul.f32 %v1931, 1.442695
      %v2029 = vpow.pop %v2028
      %v2030 = vmul.f32 %v1932, 1.442695
      %v2031 = vpow.pop %v2030
      %v2032 = vmul.f32 %v1933, 1.442695
      %v2033 = vpow.pop %v2032
      %v2034 = vmul.f32 %v1934, 1.442695
      %v2035 = vpow.pop %v2034
      %v2036 = vmul.f32 %v1935, 1.442695
      %v2037 = vpow.pop %v2036
      %v2038 = vmul.f32 %v1936, 1.442695
      %v2039 = vpow.pop %v2038
      %v2040 = vmul.f32 %v1937, 1.442695
      %v2041 = vpow.pop %v2040
      %v2042 = vmul.f32 %v1938, 1.442695
      %v2043 = vpow.pop %v2042
      %v2044 = vmul.f32 %v1939, 1.442695
      %v2045 = vpow.pop %v2044
      %v2046 = vmul.f32 %v1940, 1.442695
      %v2047 = vpow.pop %v2046
      %v2048 = vmul.f32 %v1941, 1.442695
      %v2049 = vpow.pop %v2048
      %v2050 = vmul.f32 %v1942, 1.442695
      %v2051 = vpow.pop %v2050
      %v2052 = vmul.f32 %v1943, 1.442695
      %v2053 = vpow.pop %v2052
      %v2054 = vmul.f32 %v1944, 1.442695
      %v2055 = vpow.pop %v2054
      %v2056 = vmul.f32 %v1945, 1.442695
      %v2057 = vpow.pop %v2056
      %v2058 = vmul.f32 %v1946, 1.442695
      %v2059 = vpow.pop %v2058
      %v2060 = vmul.f32 %v1947, 1.442695
      %v2061 = vpow.pop %v2060
      %v2062 = vmul.f32 %v1948, 1.442695
      %v2063 = vpow.pop %v2062
      %v2064 = vmul.f32 %v1949, 1.442695
      %v2065 = vpow.pop %v2064
      %v2066 = vmul.f32 %v1950, 1.442695
      %v2067 = vpow.pop %v2066
      %v2068 = vmul.f32 %v1951, 1.442695
      %v2069 = vpow.pop %v2068
      %v2070 = vmul.f32 %v1952, 1.442695
      %v2071 = vpow.pop %v2070
      %v2072 = vmul.f32 %v1953, 1.442695
      %v2073 = vpow.pop %v2072
      %v2074 = vmul.f32 %v1954, 1.442695
      %v2075 = vpow.pop %v2074
      %v2076 = vmul.f32 %v1955, 1.442695
      %v2077 = vpow.pop %v2076
      %v2078 = vmul.f32 %v1956, 1.442695
      %v2079 = vpow.pop %v2078
      %v2080 = vmul.f32 %v1957, 1.442695
      %v2081 = vpow.pop %v2080
      %v2082 = vmul.f32 %v1958, 1.442695
      %v2083 = vpow.pop %v2082
      %v2084 = vmul.f32 %v1959, 1.442695
      %v2085 = vpow.pop %v2084
      %v2086 = vmul.f32 %v1960, 1.442695
      %v2087 = vpow.pop %v2086
      %v2088 = vmul.f32 %v1961, 1.442695
      %v2089 = vpow.pop %v2088
      %v2090 = vpack.c.bf16 %v1967, %v1963
      %v2091 = vpack.c.bf16 %v1969, %v1965
      %v2092 = vpack.c.bf16 %v1975, %v1971
      %v2093 = vpack.c.bf16 %v1977, %v1973
      %v2094 = vpack.c.bf16 %v1983, %v1979
      %v2095 = vpack.c.bf16 %v1985, %v1981
      %v2096 = vpack.c.bf16 %v1991, %v1987
      %v2097 = vpack.c.bf16 %v1993, %v1989
      %v2098 = vpack.c.bf16 %v1999, %v1995
      %v2099 = vpack.c.bf16 %v2001, %v1997
      %v2100 = vpack.c.bf16 %v2007, %v2003
      %v2101 = vpack.c.bf16 %v2009, %v2005
      %v2102 = vpack.c.bf16 %v2015, %v2011
      %v2103 = vpack.c.bf16 %v2017, %v2013
      %v2104 = vpack.c.bf16 %v2023, %v2019
      %v2105 = vpack.c.bf16 %v2025, %v2021
      %v2106 = vpack.c.bf16 %v2031, %v2027
      %v2107 = vpack.c.bf16 %v2033, %v2029
      %v2108 = vpack.c.bf16 %v2039, %v2035
      %v2109 = vpack.c.bf16 %v2041, %v2037
      %v2110 = vpack.c.bf16 %v2047, %v2043
      %v2111 = vpack.c.bf16 %v2049, %v2045
      %v2112 = vpack.c.bf16 %v2055, %v2051
      %v2113 = vpack.c.bf16 %v2057, %v2053
      %v2114 = vpack.c.bf16 %v2063, %v2059
      %v2115 = vpack.c.bf16 %v2065, %v2061
      %v2116 = vpack.c.bf16 %v2071, %v2067
      %v2117 = vpack.c.bf16 %v2073, %v2069
      %v2118 = vpack.c.bf16 %v2079, %v2075
      %v2119 = vpack.c.bf16 %v2081, %v2077
      %v2120 = vpack.c.bf16 %v2087, %v2083
      %v2121 = vpack.c.bf16 %v2089, %v2085
      %v2126 = vunpack.c.l.b16 %v1548
      %v2127 = vunpack.c.h.b16 %v1548
      %v2128 = vunpack.c.l.b16 %v1549
      %v2129 = vunpack.c.h.b16 %v1549
      %v2130 = vunpack.c.l.b16 %v1550
      %v2131 = vunpack.c.h.b16 %v1550
      %v2132 = vunpack.c.l.b16 %v1551
      %v2133 = vunpack.c.h.b16 %v1551
      %v2134 = vpack.c.b16 %v2128, %v2126
      %v2135 = vpack.c.b16 %v2129, %v2127
      %v2136 = vpack.c.b16 %v2132, %v2130
      %v2137 = vpack.c.b16 %v2133, %v2131
      %2142 = vmatpush.bf16.xpose.msra.mxu0 %v2104
      %2143 = vmatpush.bf16.xpose.msra.mxu0 %v2102
      %2144 = vmatpush.bf16.xpose.msra.mxu0 %v2100
      %2145 = vmatpush.bf16.xpose.msra.mxu0 %v2098
      %2146 = vmatpush.bf16.xpose.msra.mxu0 %v2096
      %2147 = vmatpush.bf16.xpose.msra.mxu0 %v2094
      %2148 = vmatpush.bf16.xpose.msra.mxu0 %v2092
      %2149 = vmatpush.bf16.xpose.msra.mxu0 %v2090
      %2150 = vmatmul.bf16.gmra.mxu0 %v2134
      %v2151 = vpop.f32.mrf.mxu0
      %v2152 = vadd.f32 0.0, %v2151
      %v2153 = vpop.f32.mrf.mxu0
      %v2154 = vadd.f32 0.0, %v2153
      %2155 = vmatmul.bf16.gmra.mxu0 %v2136
      %v2156 = vpop.f32.mrf.mxu0
      %v2157 = vadd.f32 0.0, %v2156
      %v2158 = vpop.f32.mrf.mxu0
      %v2159 = vadd.f32 0.0, %v2158
      %2160 = vmatmul.bf16.gmra.mxu0 1065369472
      %v2161 = vpop.f32.mrf.mxu0
      %v2162 = vadd.f32 0.0, %v2161
      %v2163 = vpop.f32.mrf.mxu0
      %2164 = vdwg.mxu0
      %2165 = vmatpush.bf16.xpose.msra.mxu0 %v2105
      %2166 = vmatpush.bf16.xpose.msra.mxu0 %v2103
      %2167 = vmatpush.bf16.xpose.msra.mxu0 %v2101
      %2168 = vmatpush.bf16.xpose.msra.mxu0 %v2099
      %2169 = vmatpush.bf16.xpose.msra.mxu0 %v2097
      %2170 = vmatpush.bf16.xpose.msra.mxu0 %v2095
      %2171 = vmatpush.bf16.xpose.msra.mxu0 %v2093
      %2172 = vmatpush.bf16.xpose.msra.mxu0 %v2091
      %2173 = vmatmul.bf16.gmra.mxu0 %v2135
      %v2174 = vpop.f32.mrf.mxu0
      %v2175 = vadd.f32 %v2152, %v2174
      %v2176 = vpop.f32.mrf.mxu0
      %v2177 = vadd.f32 %v2154, %v2176
      %2178 = vmatmul.bf16.gmra.mxu0 %v2137
      %v2179 = vpop.f32.mrf.mxu0
      %v2180 = vadd.f32 %v2157, %v2179
      %v2181 = vpop.f32.mrf.mxu0
      %v2182 = vadd.f32 %v2159, %v2181
      %2183 = vmatmul.bf16.gmra.mxu0 1065369472
      %v2184 = vpop.f32.mrf.mxu0
      %v2185 = vadd.f32 %v2162, %v2184
      %v2186 = vpop.f32.mrf.mxu0
      %2187 = vdwg.mxu0
      %2188 = vmatpush.bf16.xpose.msra.mxu0 %v2120
      %2189 = vmatpush.bf16.xpose.msra.mxu0 %v2118
      %2190 = vmatpush.bf16.xpose.msra.mxu0 %v2116
      %2191 = vmatpush.bf16.xpose.msra.mxu0 %v2114
      %2192 = vmatpush.bf16.xpose.msra.mxu0 %v2112
      %2193 = vmatpush.bf16.xpose.msra.mxu0 %v2110
      %2194 = vmatpush.bf16.xpose.msra.mxu0 %v2108
      %2195 = vmatpush.bf16.xpose.msra.mxu0 %v2106
      %2196 = vmatmul.bf16.gmra.mxu0 %v2134
      %v2197 = vpop.f32.mrf.mxu0
      %v2198 = vadd.f32 0.0, %v2197
      %v2199 = vpop.f32.mrf.mxu0
      %v2200 = vadd.f32 0.0, %v2199
      %2201 = vmatmul.bf16.gmra.mxu0 %v2136
      %v2202 = vpop.f32.mrf.mxu0
      %v2203 = vadd.f32 0.0, %v2202
      %v2204 = vpop.f32.mrf.mxu0
      %v2205 = vadd.f32 0.0, %v2204
      %2206 = vmatmul.bf16.gmra.mxu0 1065369472
      %v2207 = vpop.f32.mrf.mxu0
      %v2208 = vadd.f32 0.0, %v2207
      %v2209 = vpop.f32.mrf.mxu0
      %2210 = vdwg.mxu0
      %2211 = vmatpush.bf16.xpose.msra.mxu0 %v2121
      %2212 = vmatpush.bf16.xpose.msra.mxu0 %v2119
      %2213 = vmatpush.bf16.xpose.msra.mxu0 %v2117
      %2214 = vmatpush.bf16.xpose.msra.mxu0 %v2115
      %2215 = vmatpush.bf16.xpose.msra.mxu0 %v2113
      %2216 = vmatpush.bf16.xpose.msra.mxu0 %v2111
      %2217 = vmatpush.bf16.xpose.msra.mxu0 %v2109
      %2218 = vmatpush.bf16.xpose.msra.mxu0 %v2107
      %2219 = vmatmul.bf16.gmra.mxu0 %v2135
      %v2220 = vpop.f32.mrf.mxu0
      %v2221 = vadd.f32 %v2198, %v2220
      %v2222 = vpop.f32.mrf.mxu0
      %v2223 = vadd.f32 %v2200, %v2222
      %2224 = vmatmul.bf16.gmra.mxu0 %v2137
      %v2225 = vpop.f32.mrf.mxu0
      %v2226 = vadd.f32 %v2203, %v2225
      %v2227 = vpop.f32.mrf.mxu0
      %v2228 = vadd.f32 %v2205, %v2227
      %2229 = vmatmul.bf16.gmra.mxu0 1065369472
      %v2230 = vpop.f32.mrf.mxu0
      %v2231 = vadd.f32 %v2208, %v2230
      %v2232 = vpop.f32.mrf.mxu0
      %2233 = vdwg.mxu0
      %v2234 = vrcp.pop %v2185
      %v2235 = vrcp.pop %v2231
      %v2236 = vperm.slane %v2234, 0
      %v2237 = vperm.slane %v2235, 0
      %v2238 = vmul.f32 %v2175, %v2236
      %v2239 = vmul.f32 %v2221, %v2237
      %v2240 = vmul.f32 %v2177, %v2236
      %v2241 = vmul.f32 %v2223, %v2237
      %v2242 = vmul.f32 %v2180, %v2236
      %v2243 = vmul.f32 %v2226, %v2237
      %v2244 = vmul.f32 %v2182, %v2236
      %v2245 = vmul.f32 %v2228, %v2237
      %v2246 = vpack.c.bf16 %v2239, %v2238
      %v2247 = vpack.c.bf16 %v2241, %v2240
      %v2248 = vpack.c.bf16 %v2243, %v2242
      %v2249 = vpack.c.bf16 %v2245, %v2244
      %2250 = vst [vmem:[#allocation2 + $0x20] sm:$0xff] %v2246
      %2251 = vst [vmem:[#allocation2 + $0x28] sm:$0xff] %v2247
      %2252 = vst [vmem:[#allocation2 + $0x30] sm:$0xff] %v2248
      %2253 = vst [vmem:[#allocation2 + $0x38] sm:$0xff] %v2249
      %v2254 = vpack.c.bf16 %v600, %v598
      %v2255 = vpack.c.bf16 %v729, %v727
      %v2256 = vpack.c.bf16 %v605, %v603
      %v2257 = vpack.c.bf16 %v734, %v732
      %v2258 = vpack.c.bf16 %v640, %v638
      %v2259 = vpack.c.bf16 %v769, %v767
      %v2260 = vpack.c.bf16 %v645, %v643
      %v2261 = vpack.c.bf16 %v774, %v772
      %v2262 = vpack.c.bf16 %v807, %v678
      %v2263 = vpack.c.bf16 %v809, %v680
      %v2264 = vpack.c.bf16 %v812, %v683
      %v2265 = vpack.c.bf16 %v814, %v685
      %2266 = vxpose.binary.xlu0.c.b16.start [1/16] %v2255, %v2254, 128
      %2267 = vxpose.binary.xlu0.c.b16.cont [2/16] %v2257, %v2256, 128
      %2268 = vxpose.binary.xlu0.c.b16.cont [3/16] 0, 0, 128
      %2269 = vxpose.binary.xlu0.c.b16.cont [4/16] 0, 0, 128
      %2270 = vxpose.binary.xlu0.c.b16.cont [5/16] 0, 0, 128
      %2271 = vxpose.binary.xlu0.c.b16.cont [6/16] 0, 0, 128
      %2272 = vxpose.binary.xlu0.c.b16.cont [7/16] 0, 0, 128
      %2273 = vxpose.binary.xlu0.c.b16.end [8/16] 0, 0, 128
      %v2274 = vpop.trf.xlu0
      %v2275 = vpop.trf.xlu0
      %v2276 = vpop.trf.xlu0
      %v2277 = vpop.trf.xlu0
      %v2278 = vpop.trf.xlu0
      %v2279 = vpop.trf.xlu0
      %v2280 = vpop.trf.xlu0
      %v2281 = vpop.trf.xlu0
      %v2282 = vpop.trf.xlu0
      %v2283 = vpop.trf.xlu0
      %v2284 = vpop.trf.xlu0
      %v2285 = vpop.trf.xlu0
      %v2286 = vpop.trf.xlu0
      %v2287 = vpop.trf.xlu0
      %v2288 = vpop.trf.xlu0
      %v2289 = vpop.trf.xlu0
      %v2291 = vsel %vm495, %v2274, 0
      %v2294 = vsel %vm495, %v2276, 0
      %v2297 = vsel %vm495, %v2278, 0
      %v2300 = vsel %vm495, %v2280, 0
      %v2303 = vsel %vm495, %v2282, 0
      %v2306 = vsel %vm495, %v2284, 0
      %v2309 = vsel %vm495, %v2286, 0
      %v2312 = vsel %vm495, %v2288, 0
      %v2315 = vsel %vm495, %v2275, 0
      %v2318 = vsel %vm495, %v2277, 0
      %v2321 = vsel %vm495, %v2279, 0
      %v2324 = vsel %vm495, %v2281, 0
      %v2327 = vsel %vm495, %v2283, 0
      %v2330 = vsel %vm495, %v2285, 0
      %v2333 = vsel %vm495, %v2287, 0
      %v2336 = vsel %vm495, %v2289, 0
      %2338 = vmatpush.bf16.msra.mxu0 0
      %2339 = vmatpush.bf16.msra.mxu0 0
      %2340 = vmatpush.bf16.msra.mxu0 0
      %2341 = vmatpush.bf16.msra.mxu0 0
      %2342 = vmatpush.bf16.msra.mxu0 0
      %2343 = vmatpush.bf16.msra.mxu0 0
      %2344 = vmatpush.bf16.msra.mxu0 %v2260
      %2345 = vmatpush.bf16.msra.mxu0 %v2258
      %2346 = vmatmul.bf16.gmra.mxu0 %v2291
      %v2347 = vpop.f32.mrf.mxu0
      %v2348 = vadd.f32 0.0, %v2347
      %v2349 = vpop.f32.mrf.mxu0
      %v2350 = vadd.f32 0.0, %v2349
      %2351 = vmatmul.bf16.gmra.mxu0 %v2294
      %v2352 = vpop.f32.mrf.mxu0
      %v2353 = vadd.f32 0.0, %v2352
      %v2354 = vpop.f32.mrf.mxu0
      %v2355 = vadd.f32 0.0, %v2354
      %2356 = vmatmul.bf16.gmra.mxu0 %v2297
      %v2357 = vpop.f32.mrf.mxu0
      %v2358 = vadd.f32 0.0, %v2357
      %v2359 = vpop.f32.mrf.mxu0
      %v2360 = vadd.f32 0.0, %v2359
      %2361 = vmatmul.bf16.gmra.mxu0 %v2300
      %v2362 = vpop.f32.mrf.mxu0
      %v2363 = vadd.f32 0.0, %v2362
      %v2364 = vpop.f32.mrf.mxu0
      %v2365 = vadd.f32 0.0, %v2364
      %2366 = vmatmul.bf16.gmra.mxu0 %v2303
      %v2367 = vpop.f32.mrf.mxu0
      %v2368 = vadd.f32 0.0, %v2367
      %v2369 = vpop.f32.mrf.mxu0
      %v2370 = vadd.f32 0.0, %v2369
      %2371 = vmatmul.bf16.gmra.mxu0 %v2306
      %v2372 = vpop.f32.mrf.mxu0
      %v2373 = vadd.f32 0.0, %v2372
      %v2374 = vpop.f32.mrf.mxu0
      %v2375 = vadd.f32 0.0, %v2374
      %2376 = vmatmul.bf16.gmra.mxu0 %v2309
      %v2377 = vpop.f32.mrf.mxu0
      %v2378 = vadd.f32 0.0, %v2377
      %v2379 = vpop.f32.mrf.mxu0
      %v2380 = vadd.f32 0.0, %v2379
      %2381 = vmatmul.bf16.gmra.mxu0 %v2312
      %v2382 = vpop.f32.mrf.mxu0
      %v2383 = vadd.f32 0.0, %v2382
      %v2384 = vpop.f32.mrf.mxu0
      %v2385 = vadd.f32 0.0, %v2384
      %2386 = vmatmul.bf16.gmra.mxu0 %v2315
      %v2387 = vpop.f32.mrf.mxu0
      %v2388 = vadd.f32 0.0, %v2387
      %v2389 = vpop.f32.mrf.mxu0
      %v2390 = vadd.f32 0.0, %v2389
      %2391 = vmatmul.bf16.gmra.mxu0 %v2318
      %v2392 = vpop.f32.mrf.mxu0
      %v2393 = vadd.f32 0.0, %v2392
      %v2394 = vpop.f32.mrf.mxu0
      %v2395 = vadd.f32 0.0, %v2394
      %2396 = vmatmul.bf16.gmra.mxu0 %v2321
      %v2397 = vpop.f32.mrf.mxu0
      %v2398 = vadd.f32 0.0, %v2397
      %v2399 = vpop.f32.mrf.mxu0
      %v2400 = vadd.f32 0.0, %v2399
      %2401 = vmatmul.bf16.gmra.mxu0 %v2324
      %v2402 = vpop.f32.mrf.mxu0
      %v2403 = vadd.f32 0.0, %v2402
      %v2404 = vpop.f32.mrf.mxu0
      %v2405 = vadd.f32 0.0, %v2404
      %2406 = vmatmul.bf16.gmra.mxu0 %v2327
      %v2407 = vpop.f32.mrf.mxu0
      %v2408 = vadd.f32 0.0, %v2407
      %v2409 = vpop.f32.mrf.mxu0
      %v2410 = vadd.f32 0.0, %v2409
      %2411 = vmatmul.bf16.gmra.mxu0 %v2330
      %v2412 = vpop.f32.mrf.mxu0
      %v2413 = vadd.f32 0.0, %v2412
      %v2414 = vpop.f32.mrf.mxu0
      %v2415 = vadd.f32 0.0, %v2414
      %2416 = vmatmul.bf16.gmra.mxu0 %v2333
      %v2417 = vpop.f32.mrf.mxu0
      %v2418 = vadd.f32 0.0, %v2417
      %v2419 = vpop.f32.mrf.mxu0
      %v2420 = vadd.f32 0.0, %v2419
      %2421 = vmatmul.bf16.gmra.mxu0 %v2336
      %v2422 = vpop.f32.mrf.mxu0
      %v2423 = vadd.f32 0.0, %v2422
      %v2424 = vpop.f32.mrf.mxu0
      %v2425 = vadd.f32 0.0, %v2424
      %2426 = vdwg.mxu0
      %2427 = vmatpush.bf16.msra.mxu0 0
      %2428 = vmatpush.bf16.msra.mxu0 0
      %2429 = vmatpush.bf16.msra.mxu0 0
      %2430 = vmatpush.bf16.msra.mxu0 0
      %2431 = vmatpush.bf16.msra.mxu0 0
      %2432 = vmatpush.bf16.msra.mxu0 0
      %2433 = vmatpush.bf16.msra.mxu0 %v2261
      %2434 = vmatpush.bf16.msra.mxu0 %v2259
      %2435 = vmatmul.bf16.gmra.mxu0 %v2291
      %v2436 = vpop.f32.mrf.mxu0
      %v2437 = vadd.f32 0.0, %v2436
      %v2438 = vpop.f32.mrf.mxu0
      %v2439 = vadd.f32 0.0, %v2438
      %2440 = vmatmul.bf16.gmra.mxu0 %v2294
      %v2441 = vpop.f32.mrf.mxu0
      %v2442 = vadd.f32 0.0, %v2441
      %v2443 = vpop.f32.mrf.mxu0
      %v2444 = vadd.f32 0.0, %v2443
      %2445 = vmatmul.bf16.gmra.mxu0 %v2297
      %v2446 = vpop.f32.mrf.mxu0
      %v2447 = vadd.f32 0.0, %v2446
      %v2448 = vpop.f32.mrf.mxu0
      %v2449 = vadd.f32 0.0, %v2448
      %2450 = vmatmul.bf16.gmra.mxu0 %v2300
      %v2451 = vpop.f32.mrf.mxu0
      %v2452 = vadd.f32 0.0, %v2451
      %v2453 = vpop.f32.mrf.mxu0
      %v2454 = vadd.f32 0.0, %v2453
      %2455 = vmatmul.bf16.gmra.mxu0 %v2303
      %v2456 = vpop.f32.mrf.mxu0
      %v2457 = vadd.f32 0.0, %v2456
      %v2458 = vpop.f32.mrf.mxu0
      %v2459 = vadd.f32 0.0, %v2458
      %2460 = vmatmul.bf16.gmra.mxu0 %v2306
      %v2461 = vpop.f32.mrf.mxu0
      %v2462 = vadd.f32 0.0, %v2461
      %v2463 = vpop.f32.mrf.mxu0
      %v2464 = vadd.f32 0.0, %v2463
      %2465 = vmatmul.bf16.gmra.mxu0 %v2309
      %v2466 = vpop.f32.mrf.mxu0
      %v2467 = vadd.f32 0.0, %v2466
      %v2468 = vpop.f32.mrf.mxu0
      %v2469 = vadd.f32 0.0, %v2468
      %2470 = vmatmul.bf16.gmra.mxu0 %v2312
      %v2471 = vpop.f32.mrf.mxu0
      %v2472 = vadd.f32 0.0, %v2471
      %v2473 = vpop.f32.mrf.mxu0
      %v2474 = vadd.f32 0.0, %v2473
      %2475 = vmatmul.bf16.gmra.mxu0 %v2315
      %v2476 = vpop.f32.mrf.mxu0
      %v2477 = vadd.f32 0.0, %v2476
      %v2478 = vpop.f32.mrf.mxu0
      %v2479 = vadd.f32 0.0, %v2478
      %2480 = vmatmul.bf16.gmra.mxu0 %v2318
      %v2481 = vpop.f32.mrf.mxu0
      %v2482 = vadd.f32 0.0, %v2481
      %v2483 = vpop.f32.mrf.mxu0
      %v2484 = vadd.f32 0.0, %v2483
      %2485 = vmatmul.bf16.gmra.mxu0 %v2321
      %v2486 = vpop.f32.mrf.mxu0
      %v2487 = vadd.f32 0.0, %v2486
      %v2488 = vpop.f32.mrf.mxu0
      %v2489 = vadd.f32 0.0, %v2488
      %2490 = vmatmul.bf16.gmra.mxu0 %v2324
      %v2491 = vpop.f32.mrf.mxu0
      %v2492 = vadd.f32 0.0, %v2491
      %v2493 = vpop.f32.mrf.mxu0
      %v2494 = vadd.f32 0.0, %v2493
      %2495 = vmatmul.bf16.gmra.mxu0 %v2327
      %v2496 = vpop.f32.mrf.mxu0
      %v2497 = vadd.f32 0.0, %v2496
      %v2498 = vpop.f32.mrf.mxu0
      %v2499 = vadd.f32 0.0, %v2498
      %2500 = vmatmul.bf16.gmra.mxu0 %v2330
      %v2501 = vpop.f32.mrf.mxu0
      %v2502 = vadd.f32 0.0, %v2501
      %v2503 = vpop.f32.mrf.mxu0
      %v2504 = vadd.f32 0.0, %v2503
      %2505 = vmatmul.bf16.gmra.mxu0 %v2333
      %v2506 = vpop.f32.mrf.mxu0
      %v2507 = vadd.f32 0.0, %v2506
      %v2508 = vpop.f32.mrf.mxu0
      %v2509 = vadd.f32 0.0, %v2508
      %2510 = vmatmul.bf16.gmra.mxu0 %v2336
      %v2511 = vpop.f32.mrf.mxu0
      %v2512 = vadd.f32 0.0, %v2511
      %v2513 = vpop.f32.mrf.mxu0
      %v2514 = vadd.f32 0.0, %v2513
      %2515 = vdwg.mxu0
      %v2516 = vmax.f32 %v2348, %v2437
      %2517 = vmax.xlane.f32.xlu0 %v2516
      %v2518 = vpop.xlane.xlu0 %2517
      %v2519 = vmax.f32 %v2350, %v2439
      %2520 = vmax.xlane.f32.xlu0 %v2519
      %v2521 = vpop.xlane.xlu0 %2520
      %v2522 = vmax.f32 %v2353, %v2442
      %2523 = vmax.xlane.f32.xlu0 %v2522
      %v2524 = vpop.xlane.xlu0 %2523
      %v2525 = vmax.f32 %v2355, %v2444
      %2526 = vmax.xlane.f32.xlu0 %v2525
      %v2527 = vpop.xlane.xlu0 %2526
      %v2528 = vmax.f32 %v2358, %v2447
      %2529 = vmax.xlane.f32.xlu0 %v2528
      %v2530 = vpop.xlane.xlu0 %2529
      %v2531 = vmax.f32 %v2360, %v2449
      %2532 = vmax.xlane.f32.xlu0 %v2531
      %v2533 = vpop.xlane.xlu0 %2532
      %v2534 = vmax.f32 %v2363, %v2452
      %2535 = vmax.xlane.f32.xlu0 %v2534
      %v2536 = vpop.xlane.xlu0 %2535
      %v2537 = vmax.f32 %v2365, %v2454
      %2538 = vmax.xlane.f32.xlu0 %v2537
      %v2539 = vpop.xlane.xlu0 %2538
      %v2540 = vmax.f32 %v2368, %v2457
      %2541 = vmax.xlane.f32.xlu0 %v2540
      %v2542 = vpop.xlane.xlu0 %2541
      %v2543 = vmax.f32 %v2370, %v2459
      %2544 = vmax.xlane.f32.xlu0 %v2543
      %v2545 = vpop.xlane.xlu0 %2544
      %v2546 = vmax.f32 %v2373, %v2462
      %2547 = vmax.xlane.f32.xlu0 %v2546
      %v2548 = vpop.xlane.xlu0 %2547
      %v2549 = vmax.f32 %v2375, %v2464
      %2550 = vmax.xlane.f32.xlu0 %v2549
      %v2551 = vpop.xlane.xlu0 %2550
      %v2552 = vmax.f32 %v2378, %v2467
      %2553 = vmax.xlane.f32.xlu0 %v2552
      %v2554 = vpop.xlane.xlu0 %2553
      %v2555 = vmax.f32 %v2380, %v2469
      %2556 = vmax.xlane.f32.xlu0 %v2555
      %v2557 = vpop.xlane.xlu0 %2556
      %v2558 = vmax.f32 %v2383, %v2472
      %2559 = vmax.xlane.f32.xlu0 %v2558
      %v2560 = vpop.xlane.xlu0 %2559
      %v2561 = vmax.f32 %v2385, %v2474
      %2562 = vmax.xlane.f32.xlu0 %v2561
      %v2563 = vpop.xlane.xlu0 %2562
      %v2564 = vmax.f32 %v2388, %v2477
      %2565 = vmax.xlane.f32.xlu0 %v2564
      %v2566 = vpop.xlane.xlu0 %2565
      %v2567 = vmax.f32 %v2390, %v2479
      %2568 = vmax.xlane.f32.xlu0 %v2567
      %v2569 = vpop.xlane.xlu0 %2568
      %v2570 = vmax.f32 %v2393, %v2482
      %2571 = vmax.xlane.f32.xlu0 %v2570
      %v2572 = vpop.xlane.xlu0 %2571
      %v2573 = vmax.f32 %v2395, %v2484
      %2574 = vmax.xlane.f32.xlu0 %v2573
      %v2575 = vpop.xlane.xlu0 %2574
      %v2576 = vmax.f32 %v2398, %v2487
      %2577 = vmax.xlane.f32.xlu0 %v2576
      %v2578 = vpop.xlane.xlu0 %2577
      %v2579 = vmax.f32 %v2400, %v2489
      %2580 = vmax.xlane.f32.xlu0 %v2579
      %v2581 = vpop.xlane.xlu0 %2580
      %v2582 = vmax.f32 %v2403, %v2492
      %2583 = vmax.xlane.f32.xlu0 %v2582
      %v2584 = vpop.xlane.xlu0 %2583
      %v2585 = vmax.f32 %v2405, %v2494
      %2586 = vmax.xlane.f32.xlu0 %v2585
      %v2587 = vpop.xlane.xlu0 %2586
      %v2588 = vmax.f32 %v2408, %v2497
      %2589 = vmax.xlane.f32.xlu0 %v2588
      %v2590 = vpop.xlane.xlu0 %2589
      %v2591 = vmax.f32 %v2410, %v2499
      %2592 = vmax.xlane.f32.xlu0 %v2591
      %v2593 = vpop.xlane.xlu0 %2592
      %v2594 = vmax.f32 %v2413, %v2502
      %2595 = vmax.xlane.f32.xlu0 %v2594
      %v2596 = vpop.xlane.xlu0 %2595
      %v2597 = vmax.f32 %v2415, %v2504
      %2598 = vmax.xlane.f32.xlu0 %v2597
      %v2599 = vpop.xlane.xlu0 %2598
      %v2600 = vmax.f32 %v2418, %v2507
      %2601 = vmax.xlane.f32.xlu0 %v2600
      %v2602 = vpop.xlane.xlu0 %2601
      %v2603 = vmax.f32 %v2420, %v2509
      %2604 = vmax.xlane.f32.xlu0 %v2603
      %v2605 = vpop.xlane.xlu0 %2604
      %v2606 = vmax.f32 %v2423, %v2512
      %2607 = vmax.xlane.f32.xlu0 %v2606
      %v2608 = vpop.xlane.xlu0 %2607
      %v2609 = vmax.f32 %v2425, %v2514
      %2610 = vmax.xlane.f32.xlu0 %v2609
      %v2611 = vpop.xlane.xlu0 %2610
      %v2612 = vsub.f32 %v2348, %v2518
      %v2613 = vsub.f32 %v2437, %v2518
      %v2614 = vsub.f32 %v2350, %v2521
      %v2615 = vsub.f32 %v2439, %v2521
      %v2616 = vsub.f32 %v2353, %v2524
      %v2617 = vsub.f32 %v2442, %v2524
      %v2618 = vsub.f32 %v2355, %v2527
      %v2619 = vsub.f32 %v2444, %v2527
      %v2620 = vsub.f32 %v2358, %v2530
      %v2621 = vsub.f32 %v2447, %v2530
      %v2622 = vsub.f32 %v2360, %v2533
      %v2623 = vsub.f32 %v2449, %v2533
      %v2624 = vsub.f32 %v2363, %v2536
      %v2625 = vsub.f32 %v2452, %v2536
      %v2626 = vsub.f32 %v2365, %v2539
      %v2627 = vsub.f32 %v2454, %v2539
      %v2628 = vsub.f32 %v2368, %v2542
      %v2629 = vsub.f32 %v2457, %v2542
      %v2630 = vsub.f32 %v2370, %v2545
      %v2631 = vsub.f32 %v2459, %v2545
      %v2632 = vsub.f32 %v2373, %v2548
      %v2633 = vsub.f32 %v2462, %v2548
      %v2634 = vsub.f32 %v2375, %v2551
      %v2635 = vsub.f32 %v2464, %v2551
      %v2636 = vsub.f32 %v2378, %v2554
      %v2637 = vsub.f32 %v2467, %v2554
      %v2638 = vsub.f32 %v2380, %v2557
      %v2639 = vsub.f32 %v2469, %v2557
      %v2640 = vsub.f32 %v2383, %v2560
      %v2641 = vsub.f32 %v2472, %v2560
      %v2642 = vsub.f32 %v2385, %v2563
      %v2643 = vsub.f32 %v2474, %v2563
      %v2644 = vsub.f32 %v2388, %v2566
      %v2645 = vsub.f32 %v2477, %v2566
      %v2646 = vsub.f32 %v2390, %v2569
      %v2647 = vsub.f32 %v2479, %v2569
      %v2648 = vsub.f32 %v2393, %v2572
      %v2649 = vsub.f32 %v2482, %v2572
      %v2650 = vsub.f32 %v2395, %v2575
      %v2651 = vsub.f32 %v2484, %v2575
      %v2652 = vsub.f32 %v2398, %v2578
      %v2653 = vsub.f32 %v2487, %v2578
      %v2654 = vsub.f32 %v2400, %v2581
      %v2655 = vsub.f32 %v2489, %v2581
      %v2656 = vsub.f32 %v2403, %v2584
      %v2657 = vsub.f32 %v2492, %v2584
      %v2658 = vsub.f32 %v2405, %v2587
      %v2659 = vsub.f32 %v2494, %v2587
      %v2660 = vsub.f32 %v2408, %v2590
      %v2661 = vsub.f32 %v2497, %v2590
      %v2662 = vsub.f32 %v2410, %v2593
      %v2663 = vsub.f32 %v2499, %v2593
      %v2664 = vsub.f32 %v2413, %v2596
      %v2665 = vsub.f32 %v2502, %v2596
      %v2666 = vsub.f32 %v2415, %v2599
      %v2667 = vsub.f32 %v2504, %v2599
      %v2668 = vsub.f32 %v2418, %v2602
      %v2669 = vsub.f32 %v2507, %v2602
      %v2670 = vsub.f32 %v2420, %v2605
      %v2671 = vsub.f32 %v2509, %v2605
      %v2672 = vsub.f32 %v2423, %v2608
      %v2673 = vsub.f32 %v2512, %v2608
      %v2674 = vsub.f32 %v2425, %v2611
      %v2675 = vsub.f32 %v2514, %v2611
      %v2676 = vmul.f32 %v2612, 1.442695
      %v2677 = vpow.pop %v2676
      %v2678 = vmul.f32 %v2613, 1.442695
      %v2679 = vpow.pop %v2678
      %v2680 = vmul.f32 %v2614, 1.442695
      %v2681 = vpow.pop %v2680
      %v2682 = vmul.f32 %v2615, 1.442695
      %v2683 = vpow.pop %v2682
      %v2684 = vmul.f32 %v2616, 1.442695
      %v2685 = vpow.pop %v2684
      %v2686 = vmul.f32 %v2617, 1.442695
      %v2687 = vpow.pop %v2686
      %v2688 = vmul.f32 %v2618, 1.442695
      %v2689 = vpow.pop %v2688
      %v2690 = vmul.f32 %v2619, 1.442695
      %v2691 = vpow.pop %v2690
      %v2692 = vmul.f32 %v2620, 1.442695
      %v2693 = vpow.pop %v2692
      %v2694 = vmul.f32 %v2621, 1.442695
      %v2695 = vpow.pop %v2694
      %v2696 = vmul.f32 %v2622, 1.442695
      %v2697 = vpow.pop %v2696
      %v2698 = vmul.f32 %v2623, 1.442695
      %v2699 = vpow.pop %v2698
      %v2700 = vmul.f32 %v2624, 1.442695
      %v2701 = vpow.pop %v2700
      %v2702 = vmul.f32 %v2625, 1.442695
      %v2703 = vpow.pop %v2702
      %v2704 = vmul.f32 %v2626, 1.442695
      %v2705 = vpow.pop %v2704
      %v2706 = vmul.f32 %v2627, 1.442695
      %v2707 = vpow.pop %v2706
      %v2708 = vmul.f32 %v2628, 1.442695
      %v2709 = vpow.pop %v2708
      %v2710 = vmul.f32 %v2629, 1.442695
      %v2711 = vpow.pop %v2710
      %v2712 = vmul.f32 %v2630, 1.442695
      %v2713 = vpow.pop %v2712
      %v2714 = vmul.f32 %v2631, 1.442695
      %v2715 = vpow.pop %v2714
      %v2716 = vmul.f32 %v2632, 1.442695
      %v2717 = vpow.pop %v2716
      %v2718 = vmul.f32 %v2633, 1.442695
      %v2719 = vpow.pop %v2718
      %v2720 = vmul.f32 %v2634, 1.442695
      %v2721 = vpow.pop %v2720
      %v2722 = vmul.f32 %v2635, 1.442695
      %v2723 = vpow.pop %v2722
      %v2724 = vmul.f32 %v2636, 1.442695
      %v2725 = vpow.pop %v2724
      %v2726 = vmul.f32 %v2637, 1.442695
      %v2727 = vpow.pop %v2726
      %v2728 = vmul.f32 %v2638, 1.442695
      %v2729 = vpow.pop %v2728
      %v2730 = vmul.f32 %v2639, 1.442695
      %v2731 = vpow.pop %v2730
      %v2732 = vmul.f32 %v2640, 1.442695
      %v2733 = vpow.pop %v2732
      %v2734 = vmul.f32 %v2641, 1.442695
      %v2735 = vpow.pop %v2734
      %v2736 = vmul.f32 %v2642, 1.442695
      %v2737 = vpow.pop %v2736
      %v2738 = vmul.f32 %v2643, 1.442695
      %v2739 = vpow.pop %v2738
      %v2740 = vmul.f32 %v2644, 1.442695
      %v2741 = vpow.pop %v2740
      %v2742 = vmul.f32 %v2645, 1.442695
      %v2743 = vpow.pop %v2742
      %v2744 = vmul.f32 %v2646, 1.442695
      %v2745 = vpow.pop %v2744
      %v2746 = vmul.f32 %v2647, 1.442695
      %v2747 = vpow.pop %v2746
      %v2748 = vmul.f32 %v2648, 1.442695
      %v2749 = vpow.pop %v2748
      %v2750 = vmul.f32 %v2649, 1.442695
      %v2751 = vpow.pop %v2750
      %v2752 = vmul.f32 %v2650, 1.442695
      %v2753 = vpow.pop %v2752
      %v2754 = vmul.f32 %v2651, 1.442695
      %v2755 = vpow.pop %v2754
      %v2756 = vmul.f32 %v2652, 1.442695
      %v2757 = vpow.pop %v2756
      %v2758 = vmul.f32 %v2653, 1.442695
      %v2759 = vpow.pop %v2758
      %v2760 = vmul.f32 %v2654, 1.442695
      %v2761 = vpow.pop %v2760
      %v2762 = vmul.f32 %v2655, 1.442695
      %v2763 = vpow.pop %v2762
      %v2764 = vmul.f32 %v2656, 1.442695
      %v2765 = vpow.pop %v2764
      %v2766 = vmul.f32 %v2657, 1.442695
      %v2767 = vpow.pop %v2766
      %v2768 = vmul.f32 %v2658, 1.442695
      %v2769 = vpow.pop %v2768
      %v2770 = vmul.f32 %v2659, 1.442695
      %v2771 = vpow.pop %v2770
      %v2772 = vmul.f32 %v2660, 1.442695
      %v2773 = vpow.pop %v2772
      %v2774 = vmul.f32 %v2661, 1.442695
      %v2775 = vpow.pop %v2774
      %v2776 = vmul.f32 %v2662, 1.442695
      %v2777 = vpow.pop %v2776
      %v2778 = vmul.f32 %v2663, 1.442695
      %v2779 = vpow.pop %v2778
      %v2780 = vmul.f32 %v2664, 1.442695
      %v2781 = vpow.pop %v2780
      %v2782 = vmul.f32 %v2665, 1.442695
      %v2783 = vpow.pop %v2782
      %v2784 = vmul.f32 %v2666, 1.442695
      %v2785 = vpow.pop %v2784
      %v2786 = vmul.f32 %v2667, 1.442695
      %v2787 = vpow.pop %v2786
      %v2788 = vmul.f32 %v2668, 1.442695
      %v2789 = vpow.pop %v2788
      %v2790 = vmul.f32 %v2669, 1.442695
      %v2791 = vpow.pop %v2790
      %v2792 = vmul.f32 %v2670, 1.442695
      %v2793 = vpow.pop %v2792
      %v2794 = vmul.f32 %v2671, 1.442695
      %v2795 = vpow.pop %v2794
      %v2796 = vmul.f32 %v2672, 1.442695
      %v2797 = vpow.pop %v2796
      %v2798 = vmul.f32 %v2673, 1.442695
      %v2799 = vpow.pop %v2798
      %v2800 = vmul.f32 %v2674, 1.442695
      %v2801 = vpow.pop %v2800
      %v2802 = vmul.f32 %v2675, 1.442695
      %v2803 = vpow.pop %v2802
      %v2804 = vpack.c.bf16 %v2681, %v2677
      %v2805 = vpack.c.bf16 %v2683, %v2679
      %v2806 = vpack.c.bf16 %v2689, %v2685
      %v2807 = vpack.c.bf16 %v2691, %v2687
      %v2808 = vpack.c.bf16 %v2697, %v2693
      %v2809 = vpack.c.bf16 %v2699, %v2695
      %v2810 = vpack.c.bf16 %v2705, %v2701
      %v2811 = vpack.c.bf16 %v2707, %v2703
      %v2812 = vpack.c.bf16 %v2713, %v2709
      %v2813 = vpack.c.bf16 %v2715, %v2711
      %v2814 = vpack.c.bf16 %v2721, %v2717
      %v2815 = vpack.c.bf16 %v2723, %v2719
      %v2816 = vpack.c.bf16 %v2729, %v2725
      %v2817 = vpack.c.bf16 %v2731, %v2727
      %v2818 = vpack.c.bf16 %v2737, %v2733
      %v2819 = vpack.c.bf16 %v2739, %v2735
      %v2820 = vpack.c.bf16 %v2745, %v2741
      %v2821 = vpack.c.bf16 %v2747, %v2743
      %v2822 = vpack.c.bf16 %v2753, %v2749
      %v2823 = vpack.c.bf16 %v2755, %v2751
      %v2824 = vpack.c.bf16 %v2761, %v2757
      %v2825 = vpack.c.bf16 %v2763, %v2759
      %v2826 = vpack.c.bf16 %v2769, %v2765
      %v2827 = vpack.c.bf16 %v2771, %v2767
      %v2828 = vpack.c.bf16 %v2777, %v2773
      %v2829 = vpack.c.bf16 %v2779, %v2775
      %v2830 = vpack.c.bf16 %v2785, %v2781
      %v2831 = vpack.c.bf16 %v2787, %v2783
      %v2832 = vpack.c.bf16 %v2793, %v2789
      %v2833 = vpack.c.bf16 %v2795, %v2791
      %v2834 = vpack.c.bf16 %v2801, %v2797
      %v2835 = vpack.c.bf16 %v2803, %v2799
      %v2840 = vunpack.c.l.b16 %v2262
      %v2841 = vunpack.c.h.b16 %v2262
      %v2842 = vunpack.c.l.b16 %v2263
      %v2843 = vunpack.c.h.b16 %v2263
      %v2844 = vunpack.c.l.b16 %v2264
      %v2845 = vunpack.c.h.b16 %v2264
      %v2846 = vunpack.c.l.b16 %v2265
      %v2847 = vunpack.c.h.b16 %v2265
      %v2848 = vpack.c.b16 %v2842, %v2840
      %v2849 = vpack.c.b16 %v2843, %v2841
      %v2850 = vpack.c.b16 %v2846, %v2844
      %v2851 = vpack.c.b16 %v2847, %v2845
      %2856 = vmatpush.bf16.xpose.msra.mxu0 %v2818
      %2857 = vmatpush.bf16.xpose.msra.mxu0 %v2816
      %2858 = vmatpush.bf16.xpose.msra.mxu0 %v2814
      %2859 = vmatpush.bf16.xpose.msra.mxu0 %v2812
      %2860 = vmatpush.bf16.xpose.msra.mxu0 %v2810
      %2861 = vmatpush.bf16.xpose.msra.mxu0 %v2808
      %2862 = vmatpush.bf16.xpose.msra.mxu0 %v2806
      %2863 = vmatpush.bf16.xpose.msra.mxu0 %v2804
      %2864 = vmatmul.bf16.gmra.mxu0 %v2848
      %v2865 = vpop.f32.mrf.mxu0
      %v2866 = vadd.f32 0.0, %v2865
      %v2867 = vpop.f32.mrf.mxu0
      %v2868 = vadd.f32 0.0, %v2867
      %2869 = vmatmul.bf16.gmra.mxu0 %v2850
      %v2870 = vpop.f32.mrf.mxu0
      %v2871 = vadd.f32 0.0, %v2870
      %v2872 = vpop.f32.mrf.mxu0
      %v2873 = vadd.f32 0.0, %v2872
      %2874 = vmatmul.bf16.gmra.mxu0 1065369472
      %v2875 = vpop.f32.mrf.mxu0
      %v2876 = vadd.f32 0.0, %v2875
      %v2877 = vpop.f32.mrf.mxu0
      %2878 = vdwg.mxu0
      %2879 = vmatpush.bf16.xpose.msra.mxu0 %v2819
      %2880 = vmatpush.bf16.xpose.msra.mxu0 %v2817
      %2881 = vmatpush.bf16.xpose.msra.mxu0 %v2815
      %2882 = vmatpush.bf16.xpose.msra.mxu0 %v2813
      %2883 = vmatpush.bf16.xpose.msra.mxu0 %v2811
      %2884 = vmatpush.bf16.xpose.msra.mxu0 %v2809
      %2885 = vmatpush.bf16.xpose.msra.mxu0 %v2807
      %2886 = vmatpush.bf16.xpose.msra.mxu0 %v2805
      %2887 = vmatmul.bf16.gmra.mxu0 %v2849
      %v2888 = vpop.f32.mrf.mxu0
      %v2889 = vadd.f32 %v2866, %v2888
      %v2890 = vpop.f32.mrf.mxu0
      %v2891 = vadd.f32 %v2868, %v2890
      %2892 = vmatmul.bf16.gmra.mxu0 %v2851
      %v2893 = vpop.f32.mrf.mxu0
      %v2894 = vadd.f32 %v2871, %v2893
      %v2895 = vpop.f32.mrf.mxu0
      %v2896 = vadd.f32 %v2873, %v2895
      %2897 = vmatmul.bf16.gmra.mxu0 1065369472
      %v2898 = vpop.f32.mrf.mxu0
      %v2899 = vadd.f32 %v2876, %v2898
      %v2900 = vpop.f32.mrf.mxu0
      %2901 = vdwg.mxu0
      %2902 = vmatpush.bf16.xpose.msra.mxu0 %v2834
      %2903 = vmatpush.bf16.xpose.msra.mxu0 %v2832
      %2904 = vmatpush.bf16.xpose.msra.mxu0 %v2830
      %2905 = vmatpush.bf16.xpose.msra.mxu0 %v2828
      %2906 = vmatpush.bf16.xpose.msra.mxu0 %v2826
      %2907 = vmatpush.bf16.xpose.msra.mxu0 %v2824
      %2908 = vmatpush.bf16.xpose.msra.mxu0 %v2822
      %2909 = vmatpush.bf16.xpose.msra.mxu0 %v2820
      %2910 = vmatmul.bf16.gmra.mxu0 %v2848
      %v2911 = vpop.f32.mrf.mxu0
      %v2912 = vadd.f32 0.0, %v2911
      %v2913 = vpop.f32.mrf.mxu0
      %v2914 = vadd.f32 0.0, %v2913
      %2915 = vmatmul.bf16.gmra.mxu0 %v2850
      %v2916 = vpop.f32.mrf.mxu0
      %v2917 = vadd.f32 0.0, %v2916
      %v2918 = vpop.f32.mrf.mxu0
      %v2919 = vadd.f32 0.0, %v2918
      %2920 = vmatmul.bf16.gmra.mxu0 1065369472
      %v2921 = vpop.f32.mrf.mxu0
      %v2922 = vadd.f32 0.0, %v2921
      %v2923 = vpop.f32.mrf.mxu0
      %2924 = vdwg.mxu0
      %2925 = vmatpush.bf16.xpose.msra.mxu0 %v2835
      %2926 = vmatpush.bf16.xpose.msra.mxu0 %v2833
      %2927 = vmatpush.bf16.xpose.msra.mxu0 %v2831
      %2928 = vmatpush.bf16.xpose.msra.mxu0 %v2829
      %2929 = vmatpush.bf16.xpose.msra.mxu0 %v2827
      %2930 = vmatpush.bf16.xpose.msra.mxu0 %v2825
      %2931 = vmatpush.bf16.xpose.msra.mxu0 %v2823
      %2932 = vmatpush.bf16.xpose.msra.mxu0 %v2821
      %2933 = vmatmul.bf16.gmra.mxu0 %v2849
      %v2934 = vpop.f32.mrf.mxu0
      %v2935 = vadd.f32 %v2912, %v2934
      %v2936 = vpop.f32.mrf.mxu0
      %v2937 = vadd.f32 %v2914, %v2936
      %2938 = vmatmul.bf16.gmra.mxu0 %v2851
      %v2939 = vpop.f32.mrf.mxu0
      %v2940 = vadd.f32 %v2917, %v2939
      %v2941 = vpop.f32.mrf.mxu0
      %v2942 = vadd.f32 %v2919, %v2941
      %2943 = vmatmul.bf16.gmra.mxu0 1065369472
      %v2944 = vpop.f32.mrf.mxu0
      %v2945 = vadd.f32 %v2922, %v2944
      %v2946 = vpop.f32.mrf.mxu0
      %2947 = vdwg.mxu0
      %v2948 = vrcp.pop %v2899
      %v2949 = vrcp.pop %v2945
      %v2950 = vperm.slane %v2948, 0
      %v2951 = vperm.slane %v2949, 0
      %v2952 = vmul.f32 %v2889, %v2950
      %v2953 = vmul.f32 %v2935, %v2951
      %v2954 = vmul.f32 %v2891, %v2950
      %v2955 = vmul.f32 %v2937, %v2951
      %v2956 = vmul.f32 %v2894, %v2950
      %v2957 = vmul.f32 %v2940, %v2951
      %v2958 = vmul.f32 %v2896, %v2950
      %v2959 = vmul.f32 %v2942, %v2951
      %v2960 = vpack.c.bf16 %v2953, %v2952
      %v2961 = vpack.c.bf16 %v2955, %v2954
      %v2962 = vpack.c.bf16 %v2957, %v2956
      %v2963 = vpack.c.bf16 %v2959, %v2958
      %2964 = vst [vmem:[#allocation2 + $0x40] sm:$0xff] %v2960
      %2965 = vst [vmem:[#allocation2 + $0x48] sm:$0xff] %v2961
      %2966 = vst [vmem:[#allocation2 + $0x50] sm:$0xff] %v2962
      %2967 = vst [vmem:[#allocation2 + $0x58] sm:$0xff] %v2963
      %v2968 = vpack.c.bf16 %v610, %v608
      %v2969 = vpack.c.bf16 %v739, %v737
      %v2970 = vpack.c.bf16 %v615, %v613
      %v2971 = vpack.c.bf16 %v744, %v742
      %v2972 = vpack.c.bf16 %v650, %v648
      %v2973 = vpack.c.bf16 %v779, %v777
      %v2974 = vpack.c.bf16 %v655, %v653
      %v2975 = vpack.c.bf16 %v784, %v782
      %v2976 = vpack.c.bf16 %v817, %v688
      %v2977 = vpack.c.bf16 %v819, %v690
      %v2978 = vpack.c.bf16 %v822, %v693
      %v2979 = vpack.c.bf16 %v824, %v695
      %2980 = vxpose.binary.xlu0.c.b16.start [1/16] %v2969, %v2968, 128
      %2981 = vxpose.binary.xlu0.c.b16.cont [2/16] %v2971, %v2970, 128
      %2982 = vxpose.binary.xlu0.c.b16.cont [3/16] 0, 0, 128
      %2983 = vxpose.binary.xlu0.c.b16.cont [4/16] 0, 0, 128
      %2984 = vxpose.binary.xlu0.c.b16.cont [5/16] 0, 0, 128
      %2985 = vxpose.binary.xlu0.c.b16.cont [6/16] 0, 0, 128
      %2986 = vxpose.binary.xlu0.c.b16.cont [7/16] 0, 0, 128
      %2987 = vxpose.binary.xlu0.c.b16.end [8/16] 0, 0, 128
      %v2988 = vpop.trf.xlu0
      %v2989 = vpop.trf.xlu0
      %v2990 = vpop.trf.xlu0
      %v2991 = vpop.trf.xlu0
      %v2992 = vpop.trf.xlu0
      %v2993 = vpop.trf.xlu0
      %v2994 = vpop.trf.xlu0
      %v2995 = vpop.trf.xlu0
      %v2996 = vpop.trf.xlu0
      %v2997 = vpop.trf.xlu0
      %v2998 = vpop.trf.xlu0
      %v2999 = vpop.trf.xlu0
      %v3000 = vpop.trf.xlu0
      %v3001 = vpop.trf.xlu0
      %v3002 = vpop.trf.xlu0
      %v3003 = vpop.trf.xlu0
      %v3005 = vsel %vm495, %v2988, 0
      %v3008 = vsel %vm495, %v2990, 0
      %v3011 = vsel %vm495, %v2992, 0
      %v3014 = vsel %vm495, %v2994, 0
      %v3017 = vsel %vm495, %v2996, 0
      %v3020 = vsel %vm495, %v2998, 0
      %v3023 = vsel %vm495, %v3000, 0
      %v3026 = vsel %vm495, %v3002, 0
      %v3029 = vsel %vm495, %v2989, 0
      %v3032 = vsel %vm495, %v2991, 0
      %v3035 = vsel %vm495, %v2993, 0
      %v3038 = vsel %vm495, %v2995, 0
      %v3041 = vsel %vm495, %v2997, 0
      %v3044 = vsel %vm495, %v2999, 0
      %v3047 = vsel %vm495, %v3001, 0
      %v3050 = vsel %vm495, %v3003, 0
      %3052 = vmatpush.bf16.msra.mxu0 0
      %3053 = vmatpush.bf16.msra.mxu0 0
      %3054 = vmatpush.bf16.msra.mxu0 0
      %3055 = vmatpush.bf16.msra.mxu0 0
      %3056 = vmatpush.bf16.msra.mxu0 0
      %3057 = vmatpush.bf16.msra.mxu0 0
      %3058 = vmatpush.bf16.msra.mxu0 %v2974
      %3059 = vmatpush.bf16.msra.mxu0 %v2972
      %3060 = vmatmul.bf16.gmra.mxu0 %v3005
      %v3061 = vpop.f32.mrf.mxu0
      %v3062 = vadd.f32 0.0, %v3061
      %v3063 = vpop.f32.mrf.mxu0
      %v3064 = vadd.f32 0.0, %v3063
      %3065 = vmatmul.bf16.gmra.mxu0 %v3008
      %v3066 = vpop.f32.mrf.mxu0
      %v3067 = vadd.f32 0.0, %v3066
      %v3068 = vpop.f32.mrf.mxu0
      %v3069 = vadd.f32 0.0, %v3068
      %3070 = vmatmul.bf16.gmra.mxu0 %v3011
      %v3071 = vpop.f32.mrf.mxu0
      %v3072 = vadd.f32 0.0, %v3071
      %v3073 = vpop.f32.mrf.mxu0
      %v3074 = vadd.f32 0.0, %v3073
      %3075 = vmatmul.bf16.gmra.mxu0 %v3014
      %v3076 = vpop.f32.mrf.mxu0
      %v3077 = vadd.f32 0.0, %v3076
      %v3078 = vpop.f32.mrf.mxu0
      %v3079 = vadd.f32 0.0, %v3078
      %3080 = vmatmul.bf16.gmra.mxu0 %v3017
      %v3081 = vpop.f32.mrf.mxu0
      %v3082 = vadd.f32 0.0, %v3081
      %v3083 = vpop.f32.mrf.mxu0
      %v3084 = vadd.f32 0.0, %v3083
      %3085 = vmatmul.bf16.gmra.mxu0 %v3020
      %v3086 = vpop.f32.mrf.mxu0
      %v3087 = vadd.f32 0.0, %v3086
      %v3088 = vpop.f32.mrf.mxu0
      %v3089 = vadd.f32 0.0, %v3088
      %3090 = vmatmul.bf16.gmra.mxu0 %v3023
      %v3091 = vpop.f32.mrf.mxu0
      %v3092 = vadd.f32 0.0, %v3091
      %v3093 = vpop.f32.mrf.mxu0
      %v3094 = vadd.f32 0.0, %v3093
      %3095 = vmatmul.bf16.gmra.mxu0 %v3026
      %v3096 = vpop.f32.mrf.mxu0
      %v3097 = vadd.f32 0.0, %v3096
      %v3098 = vpop.f32.mrf.mxu0
      %v3099 = vadd.f32 0.0, %v3098
      %3100 = vmatmul.bf16.gmra.mxu0 %v3029
      %v3101 = vpop.f32.mrf.mxu0
      %v3102 = vadd.f32 0.0, %v3101
      %v3103 = vpop.f32.mrf.mxu0
      %v3104 = vadd.f32 0.0, %v3103
      %3105 = vmatmul.bf16.gmra.mxu0 %v3032
      %v3106 = vpop.f32.mrf.mxu0
      %v3107 = vadd.f32 0.0, %v3106
      %v3108 = vpop.f32.mrf.mxu0
      %v3109 = vadd.f32 0.0, %v3108
      %3110 = vmatmul.bf16.gmra.mxu0 %v3035
      %v3111 = vpop.f32.mrf.mxu0
      %v3112 = vadd.f32 0.0, %v3111
      %v3113 = vpop.f32.mrf.mxu0
      %v3114 = vadd.f32 0.0, %v3113
      %3115 = vmatmul.bf16.gmra.mxu0 %v3038
      %v3116 = vpop.f32.mrf.mxu0
      %v3117 = vadd.f32 0.0, %v3116
      %v3118 = vpop.f32.mrf.mxu0
      %v3119 = vadd.f32 0.0, %v3118
      %3120 = vmatmul.bf16.gmra.mxu0 %v3041
      %v3121 = vpop.f32.mrf.mxu0
      %v3122 = vadd.f32 0.0, %v3121
      %v3123 = vpop.f32.mrf.mxu0
      %v3124 = vadd.f32 0.0, %v3123
      %3125 = vmatmul.bf16.gmra.mxu0 %v3044
      %v3126 = vpop.f32.mrf.mxu0
      %v3127 = vadd.f32 0.0, %v3126
      %v3128 = vpop.f32.mrf.mxu0
      %v3129 = vadd.f32 0.0, %v3128
      %3130 = vmatmul.bf16.gmra.mxu0 %v3047
      %v3131 = vpop.f32.mrf.mxu0
      %v3132 = vadd.f32 0.0, %v3131
      %v3133 = vpop.f32.mrf.mxu0
      %v3134 = vadd.f32 0.0, %v3133
      %3135 = vmatmul.bf16.gmra.mxu0 %v3050
      %v3136 = vpop.f32.mrf.mxu0
      %v3137 = vadd.f32 0.0, %v3136
      %v3138 = vpop.f32.mrf.mxu0
      %v3139 = vadd.f32 0.0, %v3138
      %3140 = vdwg.mxu0
      %3141 = vmatpush.bf16.msra.mxu0 0
      %3142 = vmatpush.bf16.msra.mxu0 0
      %3143 = vmatpush.bf16.msra.mxu0 0
      %3144 = vmatpush.bf16.msra.mxu0 0
      %3145 = vmatpush.bf16.msra.mxu0 0
      %3146 = vmatpush.bf16.msra.mxu0 0
      %3147 = vmatpush.bf16.msra.mxu0 %v2975
      %3148 = vmatpush.bf16.msra.mxu0 %v2973
      %3149 = vmatmul.bf16.gmra.mxu0 %v3005
      %v3150 = vpop.f32.mrf.mxu0
      %v3151 = vadd.f32 0.0, %v3150
      %v3152 = vpop.f32.mrf.mxu0
      %v3153 = vadd.f32 0.0, %v3152
      %3154 = vmatmul.bf16.gmra.mxu0 %v3008
      %v3155 = vpop.f32.mrf.mxu0
      %v3156 = vadd.f32 0.0, %v3155
      %v3157 = vpop.f32.mrf.mxu0
      %v3158 = vadd.f32 0.0, %v3157
      %3159 = vmatmul.bf16.gmra.mxu0 %v3011
      %v3160 = vpop.f32.mrf.mxu0
      %v3161 = vadd.f32 0.0, %v3160
      %v3162 = vpop.f32.mrf.mxu0
      %v3163 = vadd.f32 0.0, %v3162
      %3164 = vmatmul.bf16.gmra.mxu0 %v3014
      %v3165 = vpop.f32.mrf.mxu0
      %v3166 = vadd.f32 0.0, %v3165
      %v3167 = vpop.f32.mrf.mxu0
      %v3168 = vadd.f32 0.0, %v3167
      %3169 = vmatmul.bf16.gmra.mxu0 %v3017
      %v3170 = vpop.f32.mrf.mxu0
      %v3171 = vadd.f32 0.0, %v3170
      %v3172 = vpop.f32.mrf.mxu0
      %v3173 = vadd.f32 0.0, %v3172
      %3174 = vmatmul.bf16.gmra.mxu0 %v3020
      %v3175 = vpop.f32.mrf.mxu0
      %v3176 = vadd.f32 0.0, %v3175
      %v3177 = vpop.f32.mrf.mxu0
      %v3178 = vadd.f32 0.0, %v3177
      %3179 = vmatmul.bf16.gmra.mxu0 %v3023
      %v3180 = vpop.f32.mrf.mxu0
      %v3181 = vadd.f32 0.0, %v3180
      %v3182 = vpop.f32.mrf.mxu0
      %v3183 = vadd.f32 0.0, %v3182
      %3184 = vmatmul.bf16.gmra.mxu0 %v3026
      %v3185 = vpop.f32.mrf.mxu0
      %v3186 = vadd.f32 0.0, %v3185
      %v3187 = vpop.f32.mrf.mxu0
      %v3188 = vadd.f32 0.0, %v3187
      %3189 = vmatmul.bf16.gmra.mxu0 %v3029
      %v3190 = vpop.f32.mrf.mxu0
      %v3191 = vadd.f32 0.0, %v3190
      %v3192 = vpop.f32.mrf.mxu0
      %v3193 = vadd.f32 0.0, %v3192
      %3194 = vmatmul.bf16.gmra.mxu0 %v3032
      %v3195 = vpop.f32.mrf.mxu0
      %v3196 = vadd.f32 0.0, %v3195
      %v3197 = vpop.f32.mrf.mxu0
      %v3198 = vadd.f32 0.0, %v3197
      %3199 = vmatmul.bf16.gmra.mxu0 %v3035
      %v3200 = vpop.f32.mrf.mxu0
      %v3201 = vadd.f32 0.0, %v3200
      %v3202 = vpop.f32.mrf.mxu0
      %v3203 = vadd.f32 0.0, %v3202
      %3204 = vmatmul.bf16.gmra.mxu0 %v3038
      %v3205 = vpop.f32.mrf.mxu0
      %v3206 = vadd.f32 0.0, %v3205
      %v3207 = vpop.f32.mrf.mxu0
      %v3208 = vadd.f32 0.0, %v3207
      %3209 = vmatmul.bf16.gmra.mxu0 %v3041
      %v3210 = vpop.f32.mrf.mxu0
      %v3211 = vadd.f32 0.0, %v3210
      %v3212 = vpop.f32.mrf.mxu0
      %v3213 = vadd.f32 0.0, %v3212
      %3214 = vmatmul.bf16.gmra.mxu0 %v3044
      %v3215 = vpop.f32.mrf.mxu0
      %v3216 = vadd.f32 0.0, %v3215
      %v3217 = vpop.f32.mrf.mxu0
      %v3218 = vadd.f32 0.0, %v3217
      %3219 = vmatmul.bf16.gmra.mxu0 %v3047
      %v3220 = vpop.f32.mrf.mxu0
      %v3221 = vadd.f32 0.0, %v3220
      %v3222 = vpop.f32.mrf.mxu0
      %v3223 = vadd.f32 0.0, %v3222
      %3224 = vmatmul.bf16.gmra.mxu0 %v3050
      %v3225 = vpop.f32.mrf.mxu0
      %v3226 = vadd.f32 0.0, %v3225
      %v3227 = vpop.f32.mrf.mxu0
      %v3228 = vadd.f32 0.0, %v3227
      %3229 = vdwg.mxu0
      %v3230 = vmax.f32 %v3062, %v3151
      %3231 = vmax.xlane.f32.xlu0 %v3230
      %v3232 = vpop.xlane.xlu0 %3231
      %v3233 = vmax.f32 %v3064, %v3153
      %3234 = vmax.xlane.f32.xlu0 %v3233
      %v3235 = vpop.xlane.xlu0 %3234
      %v3236 = vmax.f32 %v3067, %v3156
      %3237 = vmax.xlane.f32.xlu0 %v3236
      %v3238 = vpop.xlane.xlu0 %3237
      %v3239 = vmax.f32 %v3069, %v3158
      %3240 = vmax.xlane.f32.xlu0 %v3239
      %v3241 = vpop.xlane.xlu0 %3240
      %v3242 = vmax.f32 %v3072, %v3161
      %3243 = vmax.xlane.f32.xlu0 %v3242
      %v3244 = vpop.xlane.xlu0 %3243
      %v3245 = vmax.f32 %v3074, %v3163
      %3246 = vmax.xlane.f32.xlu0 %v3245
      %v3247 = vpop.xlane.xlu0 %3246
      %v3248 = vmax.f32 %v3077, %v3166
      %3249 = vmax.xlane.f32.xlu0 %v3248
      %v3250 = vpop.xlane.xlu0 %3249
      %v3251 = vmax.f32 %v3079, %v3168
      %3252 = vmax.xlane.f32.xlu0 %v3251
      %v3253 = vpop.xlane.xlu0 %3252
      %v3254 = vmax.f32 %v3082, %v3171
      %3255 = vmax.xlane.f32.xlu0 %v3254
      %v3256 = vpop.xlane.xlu0 %3255
      %v3257 = vmax.f32 %v3084, %v3173
      %3258 = vmax.xlane.f32.xlu0 %v3257
      %v3259 = vpop.xlane.xlu0 %3258
      %v3260 = vmax.f32 %v3087, %v3176
      %3261 = vmax.xlane.f32.xlu0 %v3260
      %v3262 = vpop.xlane.xlu0 %3261
      %v3263 = vmax.f32 %v3089, %v3178
      %3264 = vmax.xlane.f32.xlu0 %v3263
      %v3265 = vpop.xlane.xlu0 %3264
      %v3266 = vmax.f32 %v3092, %v3181
      %3267 = vmax.xlane.f32.xlu0 %v3266
      %v3268 = vpop.xlane.xlu0 %3267
      %v3269 = vmax.f32 %v3094, %v3183
      %3270 = vmax.xlane.f32.xlu0 %v3269
      %v3271 = vpop.xlane.xlu0 %3270
      %v3272 = vmax.f32 %v3097, %v3186
      %3273 = vmax.xlane.f32.xlu0 %v3272
      %v3274 = vpop.xlane.xlu0 %3273
      %v3275 = vmax.f32 %v3099, %v3188
      %3276 = vmax.xlane.f32.xlu0 %v3275
      %v3277 = vpop.xlane.xlu0 %3276
      %v3278 = vmax.f32 %v3102, %v3191
      %3279 = vmax.xlane.f32.xlu0 %v3278
      %v3280 = vpop.xlane.xlu0 %3279
      %v3281 = vmax.f32 %v3104, %v3193
      %3282 = vmax.xlane.f32.xlu0 %v3281
      %v3283 = vpop.xlane.xlu0 %3282
      %v3284 = vmax.f32 %v3107, %v3196
      %3285 = vmax.xlane.f32.xlu0 %v3284
      %v3286 = vpop.xlane.xlu0 %3285
      %v3287 = vmax.f32 %v3109, %v3198
      %3288 = vmax.xlane.f32.xlu0 %v3287
      %v3289 = vpop.xlane.xlu0 %3288
      %v3290 = vmax.f32 %v3112, %v3201
      %3291 = vmax.xlane.f32.xlu0 %v3290
      %v3292 = vpop.xlane.xlu0 %3291
      %v3293 = vmax.f32 %v3114, %v3203
      %3294 = vmax.xlane.f32.xlu0 %v3293
      %v3295 = vpop.xlane.xlu0 %3294
      %v3296 = vmax.f32 %v3117, %v3206
      %3297 = vmax.xlane.f32.xlu0 %v3296
      %v3298 = vpop.xlane.xlu0 %3297
      %v3299 = vmax.f32 %v3119, %v3208
      %3300 = vmax.xlane.f32.xlu0 %v3299
      %v3301 = vpop.xlane.xlu0 %3300
      %v3302 = vmax.f32 %v3122, %v3211
      %3303 = vmax.xlane.f32.xlu0 %v3302
      %v3304 = vpop.xlane.xlu0 %3303
      %v3305 = vmax.f32 %v3124, %v3213
      %3306 = vmax.xlane.f32.xlu0 %v3305
      %v3307 = vpop.xlane.xlu0 %3306
      %v3308 = vmax.f32 %v3127, %v3216
      %3309 = vmax.xlane.f32.xlu0 %v3308
      %v3310 = vpop.xlane.xlu0 %3309
      %v3311 = vmax.f32 %v3129, %v3218
      %3312 = vmax.xlane.f32.xlu0 %v3311
      %v3313 = vpop.xlane.xlu0 %3312
      %v3314 = vmax.f32 %v3132, %v3221
      %3315 = vmax.xlane.f32.xlu0 %v3314
      %v3316 = vpop.xlane.xlu0 %3315
      %v3317 = vmax.f32 %v3134, %v3223
      %3318 = vmax.xlane.f32.xlu0 %v3317
      %v3319 = vpop.xlane.xlu0 %3318
      %v3320 = vmax.f32 %v3137, %v3226
      %3321 = vmax.xlane.f32.xlu0 %v3320
      %v3322 = vpop.xlane.xlu0 %3321
      %v3323 = vmax.f32 %v3139, %v3228
      %3324 = vmax.xlane.f32.xlu0 %v3323
      %v3325 = vpop.xlane.xlu0 %3324
      %v3326 = vsub.f32 %v3062, %v3232
      %v3327 = vsub.f32 %v3151, %v3232
      %v3328 = vsub.f32 %v3064, %v3235
      %v3329 = vsub.f32 %v3153, %v3235
      %v3330 = vsub.f32 %v3067, %v3238
      %v3331 = vsub.f32 %v3156, %v3238
      %v3332 = vsub.f32 %v3069, %v3241
      %v3333 = vsub.f32 %v3158, %v3241
      %v3334 = vsub.f32 %v3072, %v3244
      %v3335 = vsub.f32 %v3161, %v3244
      %v3336 = vsub.f32 %v3074, %v3247
      %v3337 = vsub.f32 %v3163, %v3247
      %v3338 = vsub.f32 %v3077, %v3250
      %v3339 = vsub.f32 %v3166, %v3250
      %v3340 = vsub.f32 %v3079, %v3253
      %v3341 = vsub.f32 %v3168, %v3253
      %v3342 = vsub.f32 %v3082, %v3256
      %v3343 = vsub.f32 %v3171, %v3256
      %v3344 = vsub.f32 %v3084, %v3259
      %v3345 = vsub.f32 %v3173, %v3259
      %v3346 = vsub.f32 %v3087, %v3262
      %v3347 = vsub.f32 %v3176, %v3262
      %v3348 = vsub.f32 %v3089, %v3265
      %v3349 = vsub.f32 %v3178, %v3265
      %v3350 = vsub.f32 %v3092, %v3268
      %v3351 = vsub.f32 %v3181, %v3268
      %v3352 = vsub.f32 %v3094, %v3271
      %v3353 = vsub.f32 %v3183, %v3271
      %v3354 = vsub.f32 %v3097, %v3274
      %v3355 = vsub.f32 %v3186, %v3274
      %v3356 = vsub.f32 %v3099, %v3277
      %v3357 = vsub.f32 %v3188, %v3277
      %v3358 = vsub.f32 %v3102, %v3280
      %v3359 = vsub.f32 %v3191, %v3280
      %v3360 = vsub.f32 %v3104, %v3283
      %v3361 = vsub.f32 %v3193, %v3283
      %v3362 = vsub.f32 %v3107, %v3286
      %v3363 = vsub.f32 %v3196, %v3286
      %v3364 = vsub.f32 %v3109, %v3289
      %v3365 = vsub.f32 %v3198, %v3289
      %v3366 = vsub.f32 %v3112, %v3292
      %v3367 = vsub.f32 %v3201, %v3292
      %v3368 = vsub.f32 %v3114, %v3295
      %v3369 = vsub.f32 %v3203, %v3295
      %v3370 = vsub.f32 %v3117, %v3298
      %v3371 = vsub.f32 %v3206, %v3298
      %v3372 = vsub.f32 %v3119, %v3301
      %v3373 = vsub.f32 %v3208, %v3301
      %v3374 = vsub.f32 %v3122, %v3304
      %v3375 = vsub.f32 %v3211, %v3304
      %v3376 = vsub.f32 %v3124, %v3307
      %v3377 = vsub.f32 %v3213, %v3307
      %v3378 = vsub.f32 %v3127, %v3310
      %v3379 = vsub.f32 %v3216, %v3310
      %v3380 = vsub.f32 %v3129, %v3313
      %v3381 = vsub.f32 %v3218, %v3313
      %v3382 = vsub.f32 %v3132, %v3316
      %v3383 = vsub.f32 %v3221, %v3316
      %v3384 = vsub.f32 %v3134, %v3319
      %v3385 = vsub.f32 %v3223, %v3319
      %v3386 = vsub.f32 %v3137, %v3322
      %v3387 = vsub.f32 %v3226, %v3322
      %v3388 = vsub.f32 %v3139, %v3325
      %v3389 = vsub.f32 %v3228, %v3325
      %v3390 = vmul.f32 %v3326, 1.442695
      %v3391 = vpow.pop %v3390
      %v3392 = vmul.f32 %v3327, 1.442695
      %v3393 = vpow.pop %v3392
      %v3394 = vmul.f32 %v3328, 1.442695
      %v3395 = vpow.pop %v3394
      %v3396 = vmul.f32 %v3329, 1.442695
      %v3397 = vpow.pop %v3396
      %v3398 = vmul.f32 %v3330, 1.442695
      %v3399 = vpow.pop %v3398
      %v3400 = vmul.f32 %v3331, 1.442695
      %v3401 = vpow.pop %v3400
      %v3402 = vmul.f32 %v3332, 1.442695
      %v3403 = vpow.pop %v3402
      %v3404 = vmul.f32 %v3333, 1.442695
      %v3405 = vpow.pop %v3404
      %v3406 = vmul.f32 %v3334, 1.442695
      %v3407 = vpow.pop %v3406
      %v3408 = vmul.f32 %v3335, 1.442695
      %v3409 = vpow.pop %v3408
      %v3410 = vmul.f32 %v3336, 1.442695
      %v3411 = vpow.pop %v3410
      %v3412 = vmul.f32 %v3337, 1.442695
      %v3413 = vpow.pop %v3412
      %v3414 = vmul.f32 %v3338, 1.442695
      %v3415 = vpow.pop %v3414
      %v3416 = vmul.f32 %v3339, 1.442695
      %v3417 = vpow.pop %v3416
      %v3418 = vmul.f32 %v3340, 1.442695
      %v3419 = vpow.pop %v3418
      %v3420 = vmul.f32 %v3341, 1.442695
      %v3421 = vpow.pop %v3420
      %v3422 = vmul.f32 %v3342, 1.442695
      %v3423 = vpow.pop %v3422
      %v3424 = vmul.f32 %v3343, 1.442695
      %v3425 = vpow.pop %v3424
      %v3426 = vmul.f32 %v3344, 1.442695
      %v3427 = vpow.pop %v3426
      %v3428 = vmul.f32 %v3345, 1.442695
      %v3429 = vpow.pop %v3428
      %v3430 = vmul.f32 %v3346, 1.442695
      %v3431 = vpow.pop %v3430
      %v3432 = vmul.f32 %v3347, 1.442695
      %v3433 = vpow.pop %v3432
      %v3434 = vmul.f32 %v3348, 1.442695
      %v3435 = vpow.pop %v3434
      %v3436 = vmul.f32 %v3349, 1.442695
      %v3437 = vpow.pop %v3436
      %v3438 = vmul.f32 %v3350, 1.442695
      %v3439 = vpow.pop %v3438
      %v3440 = vmul.f32 %v3351, 1.442695
      %v3441 = vpow.pop %v3440
      %v3442 = vmul.f32 %v3352, 1.442695
      %v3443 = vpow.pop %v3442
      %v3444 = vmul.f32 %v3353, 1.442695
      %v3445 = vpow.pop %v3444
      %v3446 = vmul.f32 %v3354, 1.442695
      %v3447 = vpow.pop %v3446
      %v3448 = vmul.f32 %v3355, 1.442695
      %v3449 = vpow.pop %v3448
      %v3450 = vmul.f32 %v3356, 1.442695
      %v3451 = vpow.pop %v3450
      %v3452 = vmul.f32 %v3357, 1.442695
      %v3453 = vpow.pop %v3452
      %v3454 = vmul.f32 %v3358, 1.442695
      %v3455 = vpow.pop %v3454
      %v3456 = vmul.f32 %v3359, 1.442695
      %v3457 = vpow.pop %v3456
      %v3458 = vmul.f32 %v3360, 1.442695
      %v3459 = vpow.pop %v3458
      %v3460 = vmul.f32 %v3361, 1.442695
      %v3461 = vpow.pop %v3460
      %v3462 = vmul.f32 %v3362, 1.442695
      %v3463 = vpow.pop %v3462
      %v3464 = vmul.f32 %v3363, 1.442695
      %v3465 = vpow.pop %v3464
      %v3466 = vmul.f32 %v3364, 1.442695
      %v3467 = vpow.pop %v3466
      %v3468 = vmul.f32 %v3365, 1.442695
      %v3469 = vpow.pop %v3468
      %v3470 = vmul.f32 %v3366, 1.442695
      %v3471 = vpow.pop %v3470
      %v3472 = vmul.f32 %v3367, 1.442695
      %v3473 = vpow.pop %v3472
      %v3474 = vmul.f32 %v3368, 1.442695
      %v3475 = vpow.pop %v3474
      %v3476 = vmul.f32 %v3369, 1.442695
      %v3477 = vpow.pop %v3476
      %v3478 = vmul.f32 %v3370, 1.442695
      %v3479 = vpow.pop %v3478
      %v3480 = vmul.f32 %v3371, 1.442695
      %v3481 = vpow.pop %v3480
      %v3482 = vmul.f32 %v3372, 1.442695
      %v3483 = vpow.pop %v3482
      %v3484 = vmul.f32 %v3373, 1.442695
      %v3485 = vpow.pop %v3484
      %v3486 = vmul.f32 %v3374, 1.442695
      %v3487 = vpow.pop %v3486
      %v3488 = vmul.f32 %v3375, 1.442695
      %v3489 = vpow.pop %v3488
      %v3490 = vmul.f32 %v3376, 1.442695
      %v3491 = vpow.pop %v3490
      %v3492 = vmul.f32 %v3377, 1.442695
      %v3493 = vpow.pop %v3492
      %v3494 = vmul.f32 %v3378, 1.442695
      %v3495 = vpow.pop %v3494
      %v3496 = vmul.f32 %v3379, 1.442695
      %v3497 = vpow.pop %v3496
      %v3498 = vmul.f32 %v3380, 1.442695
      %v3499 = vpow.pop %v3498
      %v3500 = vmul.f32 %v3381, 1.442695
      %v3501 = vpow.pop %v3500
      %v3502 = vmul.f32 %v3382, 1.442695
      %v3503 = vpow.pop %v3502
      %v3504 = vmul.f32 %v3383, 1.442695
      %v3505 = vpow.pop %v3504
      %v3506 = vmul.f32 %v3384, 1.442695
      %v3507 = vpow.pop %v3506
      %v3508 = vmul.f32 %v3385, 1.442695
      %v3509 = vpow.pop %v3508
      %v3510 = vmul.f32 %v3386, 1.442695
      %v3511 = vpow.pop %v3510
      %v3512 = vmul.f32 %v3387, 1.442695
      %v3513 = vpow.pop %v3512
      %v3514 = vmul.f32 %v3388, 1.442695
      %v3515 = vpow.pop %v3514
      %v3516 = vmul.f32 %v3389, 1.442695
      %v3517 = vpow.pop %v3516
      %v3518 = vpack.c.bf16 %v3395, %v3391
      %v3519 = vpack.c.bf16 %v3397, %v3393
      %v3520 = vpack.c.bf16 %v3403, %v3399
      %v3521 = vpack.c.bf16 %v3405, %v3401
      %v3522 = vpack.c.bf16 %v3411, %v3407
      %v3523 = vpack.c.bf16 %v3413, %v3409
      %v3524 = vpack.c.bf16 %v3419, %v3415
      %v3525 = vpack.c.bf16 %v3421, %v3417
      %v3526 = vpack.c.bf16 %v3427, %v3423
      %v3527 = vpack.c.bf16 %v3429, %v3425
      %v3528 = vpack.c.bf16 %v3435, %v3431
      %v3529 = vpack.c.bf16 %v3437, %v3433
      %v3530 = vpack.c.bf16 %v3443, %v3439
      %v3531 = vpack.c.bf16 %v3445, %v3441
      %v3532 = vpack.c.bf16 %v3451, %v3447
      %v3533 = vpack.c.bf16 %v3453, %v3449
      %v3534 = vpack.c.bf16 %v3459, %v3455
      %v3535 = vpack.c.bf16 %v3461, %v3457
      %v3536 = vpack.c.bf16 %v3467, %v3463
      %v3537 = vpack.c.bf16 %v3469, %v3465
      %v3538 = vpack.c.bf16 %v3475, %v3471
      %v3539 = vpack.c.bf16 %v3477, %v3473
      %v3540 = vpack.c.bf16 %v3483, %v3479
      %v3541 = vpack.c.bf16 %v3485, %v3481
      %v3542 = vpack.c.bf16 %v3491, %v3487
      %v3543 = vpack.c.bf16 %v3493, %v3489
      %v3544 = vpack.c.bf16 %v3499, %v3495
      %v3545 = vpack.c.bf16 %v3501, %v3497
      %v3546 = vpack.c.bf16 %v3507, %v3503
      %v3547 = vpack.c.bf16 %v3509, %v3505
      %v3548 = vpack.c.bf16 %v3515, %v3511
      %v3549 = vpack.c.bf16 %v3517, %v3513
      %v3554 = vunpack.c.l.b16 %v2976
      %v3555 = vunpack.c.h.b16 %v2976
      %v3556 = vunpack.c.l.b16 %v2977
      %v3557 = vunpack.c.h.b16 %v2977
      %v3558 = vunpack.c.l.b16 %v2978
      %v3559 = vunpack.c.h.b16 %v2978
      %v3560 = vunpack.c.l.b16 %v2979
      %v3561 = vunpack.c.h.b16 %v2979
      %v3562 = vpack.c.b16 %v3556, %v3554
      %v3563 = vpack.c.b16 %v3557, %v3555
      %v3564 = vpack.c.b16 %v3560, %v3558
      %v3565 = vpack.c.b16 %v3561, %v3559
      %3570 = vmatpush.bf16.xpose.msra.mxu0 %v3532
      %3571 = vmatpush.bf16.xpose.msra.mxu0 %v3530
      %3572 = vmatpush.bf16.xpose.msra.mxu0 %v3528
      %3573 = vmatpush.bf16.xpose.msra.mxu0 %v3526
      %3574 = vmatpush.bf16.xpose.msra.mxu0 %v3524
      %3575 = vmatpush.bf16.xpose.msra.mxu0 %v3522
      %3576 = vmatpush.bf16.xpose.msra.mxu0 %v3520
      %3577 = vmatpush.bf16.xpose.msra.mxu0 %v3518
      %3578 = vmatmul.bf16.gmra.mxu0 %v3562
      %v3579 = vpop.f32.mrf.mxu0
      %v3580 = vadd.f32 0.0, %v3579
      %v3581 = vpop.f32.mrf.mxu0
      %v3582 = vadd.f32 0.0, %v3581
      %3583 = vmatmul.bf16.gmra.mxu0 %v3564
      %v3584 = vpop.f32.mrf.mxu0
      %v3585 = vadd.f32 0.0, %v3584
      %v3586 = vpop.f32.mrf.mxu0
      %v3587 = vadd.f32 0.0, %v3586
      %3588 = vmatmul.bf16.gmra.mxu0 1065369472
      %v3589 = vpop.f32.mrf.mxu0
      %v3590 = vadd.f32 0.0, %v3589
      %v3591 = vpop.f32.mrf.mxu0
      %3592 = vdwg.mxu0
      %3593 = vmatpush.bf16.xpose.msra.mxu0 %v3533
      %3594 = vmatpush.bf16.xpose.msra.mxu0 %v3531
      %3595 = vmatpush.bf16.xpose.msra.mxu0 %v3529
      %3596 = vmatpush.bf16.xpose.msra.mxu0 %v3527
      %3597 = vmatpush.bf16.xpose.msra.mxu0 %v3525
      %3598 = vmatpush.bf16.xpose.msra.mxu0 %v3523
      %3599 = vmatpush.bf16.xpose.msra.mxu0 %v3521
      %3600 = vmatpush.bf16.xpose.msra.mxu0 %v3519
      %3601 = vmatmul.bf16.gmra.mxu0 %v3563
      %v3602 = vpop.f32.mrf.mxu0
      %v3603 = vadd.f32 %v3580, %v3602
      %v3604 = vpop.f32.mrf.mxu0
      %v3605 = vadd.f32 %v3582, %v3604
      %3606 = vmatmul.bf16.gmra.mxu0 %v3565
      %v3607 = vpop.f32.mrf.mxu0
      %v3608 = vadd.f32 %v3585, %v3607
      %v3609 = vpop.f32.mrf.mxu0
      %v3610 = vadd.f32 %v3587, %v3609
      %3611 = vmatmul.bf16.gmra.mxu0 1065369472
      %v3612 = vpop.f32.mrf.mxu0
      %v3613 = vadd.f32 %v3590, %v3612
      %v3614 = vpop.f32.mrf.mxu0
      %3615 = vdwg.mxu0
      %3616 = vmatpush.bf16.xpose.msra.mxu0 %v3548
      %3617 = vmatpush.bf16.xpose.msra.mxu0 %v3546
      %3618 = vmatpush.bf16.xpose.msra.mxu0 %v3544
      %3619 = vmatpush.bf16.xpose.msra.mxu0 %v3542
      %3620 = vmatpush.bf16.xpose.msra.mxu0 %v3540
      %3621 = vmatpush.bf16.xpose.msra.mxu0 %v3538
      %3622 = vmatpush.bf16.xpose.msra.mxu0 %v3536
      %3623 = vmatpush.bf16.xpose.msra.mxu0 %v3534
      %3624 = vmatmul.bf16.gmra.mxu0 %v3562
      %v3625 = vpop.f32.mrf.mxu0
      %v3626 = vadd.f32 0.0, %v3625
      %v3627 = vpop.f32.mrf.mxu0
      %v3628 = vadd.f32 0.0, %v3627
      %3629 = vmatmul.bf16.gmra.mxu0 %v3564
      %v3630 = vpop.f32.mrf.mxu0
      %v3631 = vadd.f32 0.0, %v3630
      %v3632 = vpop.f32.mrf.mxu0
      %v3633 = vadd.f32 0.0, %v3632
      %3634 = vmatmul.bf16.gmra.mxu0 1065369472
      %v3635 = vpop.f32.mrf.mxu0
      %v3636 = vadd.f32 0.0, %v3635
      %v3637 = vpop.f32.mrf.mxu0
      %3638 = vdwg.mxu0
      %3639 = vmatpush.bf16.xpose.msra.mxu0 %v3549
      %3640 = vmatpush.bf16.xpose.msra.mxu0 %v3547
      %3641 = vmatpush.bf16.xpose.msra.mxu0 %v3545
      %3642 = vmatpush.bf16.xpose.msra.mxu0 %v3543
      %3643 = vmatpush.bf16.xpose.msra.mxu0 %v3541
      %3644 = vmatpush.bf16.xpose.msra.mxu0 %v3539
      %3645 = vmatpush.bf16.xpose.msra.mxu0 %v3537
      %3646 = vmatpush.bf16.xpose.msra.mxu0 %v3535
      %3647 = vmatmul.bf16.gmra.mxu0 %v3563
      %v3648 = vpop.f32.mrf.mxu0
      %v3649 = vadd.f32 %v3626, %v3648
      %v3650 = vpop.f32.mrf.mxu0
      %v3651 = vadd.f32 %v3628, %v3650
      %3652 = vmatmul.bf16.gmra.mxu0 %v3565
      %v3653 = vpop.f32.mrf.mxu0
      %v3654 = vadd.f32 %v3631, %v3653
      %v3655 = vpop.f32.mrf.mxu0
      %v3656 = vadd.f32 %v3633, %v3655
      %3657 = vmatmul.bf16.gmra.mxu0 1065369472
      %v3658 = vpop.f32.mrf.mxu0
      %v3659 = vadd.f32 %v3636, %v3658
      %v3660 = vpop.f32.mrf.mxu0
      %3661 = vdwg.mxu0
      %v3662 = vrcp.pop %v3613
      %v3663 = vrcp.pop %v3659
      %v3664 = vperm.slane %v3662, 0
      %v3665 = vperm.slane %v3663, 0
      %v3666 = vmul.f32 %v3603, %v3664
      %v3667 = vmul.f32 %v3649, %v3665
      %v3668 = vmul.f32 %v3605, %v3664
      %v3669 = vmul.f32 %v3651, %v3665
      %v3670 = vmul.f32 %v3608, %v3664
      %v3671 = vmul.f32 %v3654, %v3665
      %v3672 = vmul.f32 %v3610, %v3664
      %v3673 = vmul.f32 %v3656, %v3665
      %v3674 = vpack.c.bf16 %v3667, %v3666
      %v3675 = vpack.c.bf16 %v3669, %v3668
      %v3676 = vpack.c.bf16 %v3671, %v3670
      %v3677 = vpack.c.bf16 %v3673, %v3672
      %3678 = vst [vmem:[#allocation2 + $0x60] sm:$0xff] %v3674
      %3679 = vst [vmem:[#allocation2 + $0x68] sm:$0xff] %v3675
      %3680 = vst [vmem:[#allocation2 + $0x70] sm:$0xff] %v3676
      %3681 = vst [vmem:[#allocation2 + $0x78] sm:$0xff] %v3677
      %v3682 = vld [vmem:[%s3] sm:$0xf]
      %v3683 = vld [vmem:[%s3 + $0x4] sm:$0xf]
      %v3684 = vld [vmem:[%s3 + $0x8] sm:$0xf]
      %v3685 = vld [vmem:[%s3 + $0xc] sm:$0xf]
      %v3686 = vld [vmem:[#allocation2] sm:$0xff]
      %v3687 = vld [vmem:[#allocation2 + $0x8] sm:$0xff]
      %v3688 = vld [vmem:[#allocation2 + $0x10] sm:$0xff]
      %v3689 = vld [vmem:[#allocation2 + $0x18] sm:$0xff]
      %v3690 = vld [vmem:[#allocation2 + $0x20] sm:$0xff]
      %v3691 = vld [vmem:[#allocation2 + $0x28] sm:$0xff]
      %v3692 = vld [vmem:[#allocation2 + $0x30] sm:$0xff]
      %v3693 = vld [vmem:[#allocation2 + $0x38] sm:$0xff]
      %v3694 = vld [vmem:[#allocation2 + $0x40] sm:$0xff]
      %v3695 = vld [vmem:[#allocation2 + $0x48] sm:$0xff]
      %v3696 = vld [vmem:[#allocation2 + $0x50] sm:$0xff]
      %v3697 = vld [vmem:[#allocation2 + $0x58] sm:$0xff]
      %v3698 = vld [vmem:[#allocation2 + $0x60] sm:$0xff]
      %v3699 = vld [vmem:[#allocation2 + $0x68] sm:$0xff]
      %v3700 = vld [vmem:[#allocation2 + $0x70] sm:$0xff]
      %v3701 = vld [vmem:[#allocation2 + $0x78] sm:$0xff]
      %v3702 = vld [vmem:[%s4] sm:$0xff]
      %v3703 = vld [vmem:[%s4 + $0x8] sm:$0xff]
      %v3704 = vld [vmem:[%s4 + $0x10] sm:$0xff]
      %v3705 = vld [vmem:[%s4 + $0x18] sm:$0xff]
      %3707 = vset.pattern.permute.xlu0 0
      %3708 = vperm.xlu0 %3707, %v3702
      %v3709 = vpop.permute.xlu0 %3708
      %3712 = vset.pattern.permute.xlu0 0
      %3713 = vperm.xlu0 %3712, %v3703
      %v3714 = vpop.permute.xlu0 %3713
      %3717 = vset.pattern.permute.xlu0 0
      %3718 = vperm.xlu0 %3717, %v3704
      %v3719 = vpop.permute.xlu0 %3718
      %3722 = vset.pattern.permute.xlu0 0
      %3723 = vperm.xlu0 %3722, %v3705
      %v3724 = vpop.permute.xlu0 %3723
      %v3730 = vunpack.c.l.b16 %v3682
      %v3731 = vunpack.c.l.b16 %v3683
      %v3732 = vunpack.c.l.b16 %v3684
      %v3733 = vunpack.c.l.b16 %v3685
      %v3734 = vpack.c.b16 %v3731, %v3730
      %v3735 = vpack.c.b16 %v3733, %v3732
      %v3754 = vunpack.c.l.b16 %v3686
      %v3755 = vunpack.c.h.b16 %v3686
      %v3756 = vunpack.c.l.b16 %v3687
      %v3757 = vunpack.c.h.b16 %v3687
      %v3758 = vunpack.c.l.b16 %v3688
      %v3759 = vunpack.c.h.b16 %v3688
      %v3760 = vunpack.c.l.b16 %v3689
      %v3761 = vunpack.c.h.b16 %v3689
      %v3762 = vunpack.c.l.b16 %v3690
      %v3763 = vunpack.c.h.b16 %v3690
      %v3764 = vunpack.c.l.b16 %v3691
      %v3765 = vunpack.c.h.b16 %v3691
      %v3766 = vunpack.c.l.b16 %v3692
      %v3767 = vunpack.c.h.b16 %v3692
      %v3768 = vunpack.c.l.b16 %v3693
      %v3769 = vunpack.c.h.b16 %v3693
      %v3770 = vunpack.c.l.b16 %v3694
      %v3771 = vunpack.c.h.b16 %v3694
      %v3772 = vunpack.c.l.b16 %v3695
      %v3773 = vunpack.c.h.b16 %v3695
      %v3774 = vunpack.c.l.b16 %v3696
      %v3775 = vunpack.c.h.b16 %v3696
      %v3776 = vunpack.c.l.b16 %v3697
      %v3777 = vunpack.c.h.b16 %v3697
      %v3778 = vunpack.c.l.b16 %v3698
      %v3779 = vunpack.c.h.b16 %v3698
      %v3780 = vunpack.c.l.b16 %v3699
      %v3781 = vunpack.c.h.b16 %v3699
      %v3782 = vunpack.c.l.b16 %v3700
      %v3783 = vunpack.c.h.b16 %v3700
      %v3784 = vunpack.c.l.b16 %v3701
      %v3785 = vunpack.c.h.b16 %v3701
      %v3786 = vpack.c.b16 %v3756, %v3754
      %v3787 = vpack.c.b16 %v3757, %v3755
      %v3788 = vpack.c.b16 %v3760, %v3758
      %v3789 = vpack.c.b16 %v3761, %v3759
      %v3790 = vpack.c.b16 %v3764, %v3762
      %v3791 = vpack.c.b16 %v3765, %v3763
      %v3792 = vpack.c.b16 %v3768, %v3766
      %v3793 = vpack.c.b16 %v3769, %v3767
      %v3794 = vpack.c.b16 %v3772, %v3770
      %v3795 = vpack.c.b16 %v3773, %v3771
      %v3796 = vpack.c.b16 %v3776, %v3774
      %v3797 = vpack.c.b16 %v3777, %v3775
      %v3798 = vpack.c.b16 %v3780, %v3778
      %v3799 = vpack.c.b16 %v3781, %v3779
      %v3800 = vpack.c.b16 %v3784, %v3782
      %v3801 = vpack.c.b16 %v3785, %v3783
      %3818 = vmatpush.bf16.msra.mxu0 %v3800
      %3819 = vmatpush.bf16.msra.mxu0 %v3798
      %3820 = vmatpush.bf16.msra.mxu0 %v3796
      %3821 = vmatpush.bf16.msra.mxu0 %v3794
      %3822 = vmatpush.bf16.msra.mxu0 %v3792
      %3823 = vmatpush.bf16.msra.mxu0 %v3790
      %3824 = vmatpush.bf16.msra.mxu0 %v3788
      %3825 = vmatpush.bf16.msra.mxu0 %v3786
      %3826 = vmatmul.bf16.gmra.mxu0 %v3734
      %v3827 = vpop.f32.mrf.mxu0
      %v3828 = vadd.f32 %v3709, %v3827
      %v3829 = vpop.f32.mrf.mxu0
      %v3830 = vadd.f32 %v3714, %v3829
      %3831 = vmatmul.bf16.gmra.mxu0 %v3735
      %v3832 = vpop.f32.mrf.mxu0
      %v3833 = vadd.f32 %v3719, %v3832
      %v3834 = vpop.f32.mrf.mxu0
      %v3835 = vadd.f32 %v3724, %v3834
      %3836 = vdwg.mxu0
      %3837 = vmatpush.bf16.msra.mxu0 %v3801
      %3838 = vmatpush.bf16.msra.mxu0 %v3799
      %3839 = vmatpush.bf16.msra.mxu0 %v3797
      %3840 = vmatpush.bf16.msra.mxu0 %v3795
      %3841 = vmatpush.bf16.msra.mxu0 %v3793
      %3842 = vmatpush.bf16.msra.mxu0 %v3791
      %3843 = vmatpush.bf16.msra.mxu0 %v3789
      %3844 = vmatpush.bf16.msra.mxu0 %v3787
      %3845 = vmatmul.bf16.gmra.mxu0 %v3734
      %v3846 = vpop.f32.mrf.mxu0
      %v3847 = vadd.f32 %v3709, %v3846
      %v3848 = vpop.f32.mrf.mxu0
      %v3849 = vadd.f32 %v3714, %v3848
      %3850 = vmatmul.bf16.gmra.mxu0 %v3735
      %v3851 = vpop.f32.mrf.mxu0
      %v3852 = vadd.f32 %v3719, %v3851
      %v3853 = vpop.f32.mrf.mxu0
      %v3854 = vadd.f32 %v3724, %v3853
      %3855 = vdwg.mxu0
      %3856 = vst [vmem:[%s224] sm:$0xff] %v3828
      %3857 = vst [vmem:[%s224 + $0x8] sm:$0xff] %v3847
      %3858 = vst [vmem:[%s224 + $0x10] sm:$0xff] %v3830
      %3859 = vst [vmem:[%s224 + $0x18] sm:$0xff] %v3849
      %3860 = vst [vmem:[%s224 + $0x20] sm:$0xff] %v3833
      %3861 = vst [vmem:[%s224 + $0x28] sm:$0xff] %v3852
      %3862 = vst [vmem:[%s224 + $0x30] sm:$0xff] %v3835
      %3863 = vst [vmem:[%s224 + $0x38] sm:$0xff] %v3854
      %p3864 = scmp.lt.s32.totalorder %s16, 1
      %s3865 = scalar_select %p3864, %s16, 1
      %s3866 = smul.addr %s3865, 8
      %s3867 = smul.addr %s3866, 8
      %s3868 = scalar_lea.vmem %s5, %s3867
      // Predicated region
      $region41: #{attention2d_forward.1} parent=39 // pred_check
        %p3869 = pneg %p144
      $region42: #{attention2d_forward.1} parent=39 // pred_check_branch
        %3871 = sbr.rel (%p3869) target = $region44
      $region43: #{attention2d_forward.1} parent=39 // pred_region
        _
      $region44: #{attention2d_forward.1} parent=39 // pred_fallthru
        _
    $region40: #{attention2d_forward.1} parent=5 // pred_fallthru
      _
    %p3872 = scmp.le.s32.totalorder 2, %s11
    // Predicated region
    $region45: #{attention2d_forward.1} parent=5 // pred_check
      %p3873 = pneg %p3872
    $region46: #{attention2d_forward.1} parent=5 // pred_check_branch
      %3875 = sbr.rel (%p3873) target = $region48
    $region47: #{attention2d_forward.1} parent=5 // pred_region
      %s3876 = ssub.s32 %s11, 2
      // Predicated region
      $region49: #{attention2d_forward.1} parent=47 // pred_check
        %p3877 = pneg %p150
      $region50: #{attention2d_forward.1} parent=47 // pred_check_branch
        %3879 = sbr.rel (%p3877) target = $region52
      $region51: #{attention2d_forward.1} parent=47 // pred_region
        %p3880 = scmp.lt.s32.totalorder %s17, 1
        %s3881 = scalar_select %p3880, %s17, 1
        %s3882 = smul.addr %s3881, 8
        %s3883 = smul.addr %s3882, 8
        %s3884 = scalar_lea.vmem %s5, %s3883
      $region52: #{attention2d_forward.1} parent=47 // pred_fallthru
        _
    $region48: #{attention2d_forward.1} parent=5 // pred_fallthru
      _
  $region6: #{attention2d_forward.1} parent=0 // loop_footer
    %s15 = sadd.s32 1, %s11
  $region7: #{attention2d_forward.1} parent=0 // loop_footer_branch
    %10 = sbr.rel target = $region3
  $region8: #{attention2d_forward.1} parent=0 // loop_exit
    _

</llo_original>
